<compile_context>
chip_gen: v6e
topology: v6e:2x2x1
jax: 0.10.0
libtpu: 0.0.40
codegen_flags: <defaults>
</compile_context>

<pallas_src>
import jax
import jax.numpy as jnp
from jax.experimental import pallas as pl
from jax.experimental.pallas import tpu as pltpu

# bf16 operands hit the native MXU path on v5e/v6e/v7x and halve DMA bytes;
# every matmul accumulates in f32 via preferred_element_type.
MXU_DTYPE = jnp.bfloat16

# Double-buffered working set at tile_m=512 is well under 16 MiB; 32 MiB keeps
# comfortable headroom below v7x's 64 MiB physical VMEM per TensorCore.
VMEM_LIMIT_BYTES = 32 * 1024 * 1024

LANES = 128          # every output-channel dimension is padded to this
MAX_TILE_M = 512     # cap on GEMM output rows per grid step (multiple of 8)


def _cdiv(a, b):
    return -(-a // b)


def _round_up(x, m):
    return ((x + m - 1) // m) * m


def _pick_tile_m(m):
    """Row tile <= MAX_TILE_M, multiple of 8, targeting >= 2 grid steps
    (megacore sharding / pipeline overlap) with minimal last-tile padding."""
    num_tiles = max(2, _cdiv(m, MAX_TILE_M))
    return max(8, _round_up(_cdiv(m, num_tiles), 8))


def _const_spec(block_shape, index_map):
    """BlockSpec for grid-invariant operands (weights / biases): single
    buffered when this jax version supports pipeline_mode (saves VMEM)."""
    if hasattr(pl, "Buffered"):
        try:
            return pl.BlockSpec(block_shape, index_map,
                                pipeline_mode=pl.Buffered(1))
        except TypeError:
            pass
    return pl.BlockSpec(block_shape, index_map)


# ----------------------------- Pallas kernels ------------------------------ #

def _conv_relu_pool_kernel(a_ref, w_ref, b_ref, o_ref):
    """Fused conv-GEMM + 2x2 max-pool + bias + ReLU.

    a_ref : [4, TILE_M, K]  im2col rows, phase-major (the 4 pooling offsets)
    w_ref : [K, 128]        conv weights, rows ordered (kh, kw, ic), oc padded
    b_ref : [1, 128]        bias (zero padded)
    o_ref : [TILE_M, 128]   pooled + ReLU'd output rows

    max_q(relu(acc_q + b)) == relu(max_q(acc_q) + b): pooling is a running max
    over the raw accumulators; bias + ReLU are applied once at the end.
    """
    w = w_ref[...]
    acc = jnp.dot(a_ref[0], w, preferred_element_type=jnp.float32)
    for q in range(1, 4):
        acc = jnp.maximum(
            acc, jnp.dot(a_ref[q], w, preferred_element_type=jnp.float32))
    o_ref[...] = jnp.maximum(acc + b_ref[...], 0.0).astype(o_ref.dtype)


def _fc_fused_kernel(a_ref, w1_ref, b1_ref, w2_ref, b2_ref, o_ref):
    """Fused fc1 + ReLU + fc2: relu([TILE_M,K]@[K,128]+b1) @ [128,128] + b2."""
    h = jnp.dot(a_ref[...], w1_ref[...], preferred_element_type=jnp.float32)
    h = jnp.maximum(h + b1_ref[...], 0.0)
    out = jnp.dot(h.astype(w2_ref.dtype), w2_ref[...],
                  preferred_element_type=jnp.float32)
    o_ref[...] = (out + b2_ref[...]).astype(o_ref.dtype)


# ------------------------------- wrappers ----------------------------------- #

def conv_relu_pool(x_nhwc, w_prepped, b_prepped, *, k=5):
    """conv(k, valid) + ReLU + 2x2 max-pool as one tiled, fused Pallas GEMM.

    x_nhwc    : [N, H, W, Cin]
    w_prepped : [Kp, 128]  (Kp >= k*k*Cin, rows (kh,kw,ic)-ordered, zero pad)
    b_prepped : [1, 128]
    returns   : [N, (H-k+1)//2, (W-k+1)//2, 128] MXU_DTYPE (padded channels=0)
    """
    n, h, w, cin = x_nhwc.shape
    oh, ow = h - k + 1, w - k + 1
    assert oh % 2 == 0 and ow % 2 == 0, "pool fusion assumes even conv output"
    ph, pw = oh // 2, ow // 2
    kk = k * k * cin
    kp = w_prepped.shape[0]

    x_nhwc = x_nhwc.astype(MXU_DTYPE)

    # Pooling phases built directly from strided slices of x: phase (dr,dc),
    # tap (kh,kw) needs x[:, 2r+dr+kh, 2c+dc+kw, :].  Feature order (kh,kw,ic)
    # matches prep_params; no full-resolution im2col tensor is materialized.
    def phase(dr, dc):
        taps = [x_nhwc[:, dr + kh:dr + kh + 2 * ph:2,
                       dc + kw:dc + kw + 2 * pw:2, :]
                for kh in range(k) for kw in range(k)]
        return jnp.stack(taps, axis=3).reshape(n * ph * pw, kk)

    a = jnp.stack([phase(dr, dc) for dr in (0, 1) for dc in (0, 1)], axis=0)

    m = n * ph * pw
    tile_m = _pick_tile_m(m)
    mp = _round_up(m, tile_m)
    a = jnp.pad(a, ((0, 0), (0, mp - m), (0, kp - kk)))

    cost = pl.CostEstimate(
        flops=2 * 4 * mp * kp * LANES,
        transcendentals=0,
        bytes_accessed=(a.size * a.dtype.itemsize
                        + w_prepped.size * w_prepped.dtype.itemsize
                        + mp * LANES * jnp.dtype(MXU_DTYPE).itemsize))

    out = pl.pallas_call(
        _conv_relu_pool_kernel,
        out_shape=jax.ShapeDtypeStruct((mp, LANES), MXU_DTYPE),
        grid=(mp // tile_m,),
        in_specs=[
            pl.BlockSpec((4, tile_m, kp), lambda i: (0, i, 0)),
            _const_spec((kp, LANES), lambda i: (0, 0)),
            _const_spec((1, LANES), lambda i: (0, 0)),
        ],
        out_specs=pl.BlockSpec((tile_m, LANES), lambda i: (i, 0)),
        compiler_params=pltpu.CompilerParams(
            dimension_semantics=("parallel",),
            vmem_limit_bytes=VMEM_LIMIT_BYTES),
        cost_estimate=cost,
    )(a, w_prepped, b_prepped)

    return out[:m].reshape(n, ph, pw, LANES)


def fc_fused(flat, w1, b1, w2, b2):
    """relu(flat @ w1 + b1) @ w2 + b2 in a single tiled Pallas call."""
    m, kdim = flat.shape
    tile_m = _pick_tile_m(m)
    mp = _round_up(m, tile_m)
    a = jnp.pad(flat.astype(MXU_DTYPE), ((0, mp - m), (0, 0)))

    cost = pl.CostEstimate(
        flops=2 * mp * LANES * (kdim + LANES),
        transcendentals=0,
        bytes_accessed=(a.size * a.dtype.itemsize
                        + w1.size * w1.dtype.itemsize
                        + w2.size * w2.dtype.itemsize
                        + mp * LANES * 4))

    out = pl.pallas_call(
        _fc_fused_kernel,
        out_shape=jax.ShapeDtypeStruct((mp, LANES), jnp.float32),
        grid=(mp // tile_m,),
        in_specs=[
            pl.BlockSpec((tile_m, kdim), lambda i: (i, 0)),
            _const_spec((kdim, LANES), lambda i: (0, 0)),
            _const_spec((1, LANES), lambda i: (0, 0)),
            _const_spec((LANES, LANES), lambda i: (0, 0)),
            _const_spec((1, LANES), lambda i: (0, 0)),
        ],
        out_specs=pl.BlockSpec((tile_m, LANES), lambda i: (i, 0)),
        compiler_params=pltpu.CompilerParams(
            dimension_semantics=("parallel",),
            vmem_limit_bytes=VMEM_LIMIT_BYTES),
        cost_estimate=cost,
    )(a, w1, b1, w2, b2)
    return out[:m]


# ------------------------- params & weight prepping ------------------------- #

def init_params(key):
    """Deterministic PyTorch-style uniform(-1/sqrt(fan_in), +1/sqrt(fan_in))."""
    def uni(k, shape, fan_in):
        bound = 1.0 / float(fan_in) ** 0.5
        return jax.random.uniform(k, shape, jnp.float32, -bound, bound)

    ks = jax.random.split(key, 8)
    return dict(
        w1=uni(ks[0], (32, 3, 5, 5), 3 * 25),       # conv1 weight [oc, ic, kh, kw]
        b1=uni(ks[1], (32,), 3 * 25),
        w2=uni(ks[2], (64, 32, 5, 5), 32 * 25),     # conv2 weight
        b2=uni(ks[3], (64,), 32 * 25),
        wfc1=uni(ks[4], (120, 64 * 5 * 5), 64 * 5 * 5),   # Linear weight [out, in]
        bfc1=uni(ks[5], (120,), 64 * 5 * 5),
        wfc2=uni(ks[6], (10, 120), 120),
        bfc2=uni(ks[7], (10,), 120),
    )


def prep_params(params):
    """One-time weight re-layout (hoisted out of the per-step forward).

    * conv weights -> [Kpad, 128]: rows ordered (kh, kw, ic), output channels
      zero-padded to 128; conv1's K also padded 75 -> 128.
    * fc1 weight absorbs the NCHW flatten permutation and consumes only the
      64 real conv2 channels -> [25*64, 128] (K = 1600).
    * fc2 weight/bias padded to 128 lanes (extra logits sliced off outside).
    """
    def prep_conv(w, b, kpad):
        oc, ic, kh, kw = w.shape
        wt = jnp.transpose(w, (2, 3, 1, 0)).reshape(kh * kw * ic, oc)
        wt = jnp.pad(wt, ((0, kpad - kh * kw * ic), (0, LANES - oc)))
        bt = jnp.pad(b, (0, LANES - oc)).reshape(1, LANES)
        return wt.astype(MXU_DTYPE), bt.astype(jnp.float32)

    w1, b1 = prep_conv(params["w1"], params["b1"], 128)   # K 75 -> 128
    w2, b2 = prep_conv(params["w2"], params["b2"], 800)   # K = 800

    # fc1: torch layout [120, 64*5*5], input index c*25 + s (NCHW flatten).
    # Our conv2 output (sliced to its 64 real channels) is [N, 25, 64],
    # spatial-major / channel-minor, flattened to index s*64 + c.
    wfc1 = params["wfc1"].reshape(120, 64, 25)          # [out, c, s]
    wfc1 = jnp.transpose(wfc1, (2, 1, 0))               # [s, c, out]
    wfc1 = jnp.pad(wfc1, ((0, 0), (0, 0), (0, LANES - 120)))
    wfc1 = wfc1.reshape(25 * 64, LANES)                 # row = s*64 + c
    bfc1 = jnp.pad(params["bfc1"], (0, LANES - 120)).reshape(1, LANES)

    wfc2 = jnp.pad(params["wfc2"].T, ((0, LANES - 120), (0, LANES - 10)))
    bfc2 = jnp.pad(params["bfc2"], (0, LANES - 10)).reshape(1, LANES)

    return dict(w1=w1, b1=b1, w2=w2, b2=b2,
                wfc1=wfc1.astype(MXU_DTYPE), bfc1=bfc1.astype(jnp.float32),
                wfc2=wfc2.astype(MXU_DTYPE), bfc2=bfc2.astype(jnp.float32))


# --------------------------------- forward ---------------------------------- #

def convnet_forward(prepped, x_nchw):
    """x_nchw: [N, 3, 32, 32] float32 -> logits [N, 10] float32."""
    x = jnp.transpose(x_nchw, (0, 2, 3, 1))                          # NHWC

    n = x.shape[0]
    # conv1 + ReLU + pool (fused), 128-lane padded channels (32 real).
    h1 = conv_relu_pool(x, prepped["w1"], prepped["b1"])             # [N,14,14,128]
    # conv2 + ReLU + pool (fused); feed only the 32 real channels.
    h2 = conv_relu_pool(h1[..., :32], prepped["w2"], prepped["b2"])  # [N,5,5,128]

    # Feed fc1 only the 64 real channels (K = 1600); the NCHW flatten
    # permutation is baked into wfc1, so a plain reshape suffices.
    flat = h2[..., :64].reshape(n, 5 * 5 * 64)
    logits_pad = fc_fused(flat, prepped["wfc1"], prepped["bfc1"],
                          prepped["wfc2"], prepped["bfc2"])          # [N,128] f32
    return logits_pad[:, :10]


if __name__ == "__main__":
    key = jax.random.PRNGKey(0)
    kx, kp = jax.random.split(key)
    x = jax.random.normal(kx, (2, 3, 32, 32), jnp.float32)   # small batch, CIFAR size
    params = init_params(kp)
    prepped = prep_params(params)          # one-time weight re-layout (hoisted)

    logits = jax.jit(convnet_forward)(prepped, x)
    jax.block_until_ready(logits)
    assert logits.shape == (2, 10) and logits.dtype == jnp.float32
    assert bool(jnp.all(jnp.isfinite(logits)))
    print("KERNEL_OK")
</pallas_src>

<mosaic_0001>
module attributes {stable_mosaic.version = 11 : i64} {
  func.func @_conv_relu_pool_kernel(%arg0: i32, %arg1: memref<4x200x128xbf16, #tpu.memory_space<vmem>>, %arg2: memref<128x128xbf16, #tpu.memory_space<vmem>>, %arg3: memref<1x128xf32, #tpu.memory_space<vmem>>, %arg4: memref<200x128xbf16, #tpu.memory_space<vmem>>) attributes {dimension_semantics = [#tpu.dimension_semantics<parallel>], iteration_bounds = array<i64: 2>, scalar_prefetch = 0 : i64, scratch_operands = 0 : i64, tpu.core_type = #tpu.core_type<tc>, window_params = [{transform_indices = @transform_0, window_bounds = array<i64: 4, 200, 128>}, {pipeline_mode = #tpu.pipeline_mode<synchronous>, transform_indices = @transform_1, window_bounds = array<i64: 128, 128>}, {pipeline_mode = #tpu.pipeline_mode<synchronous>, transform_indices = @transform_2, window_bounds = array<i64: 1, 128>}, {transform_indices = @transform_3, window_bounds = array<i64: 200, 128>}]} {
    %c0 = arith.constant 0 : index
    %c0_0 = arith.constant 0 : index
    %0 = vector.load %arg2[%c0, %c0_0] : memref<128x128xbf16, #tpu.memory_space<vmem>>, vector<128x128xbf16>
    %c0_1 = arith.constant 0 : index
    %c0_2 = arith.constant 0 : index
    %c0_3 = arith.constant 0 : index
    %1 = vector.load %arg1[%c0_1, %c0_2, %c0_3] : memref<4x200x128xbf16, #tpu.memory_space<vmem>>, vector<1x200x128xbf16>
    %2 = vector.shape_cast %1 : vector<1x200x128xbf16> to vector<200x128xbf16>
    %cst = arith.constant dense<0.000000e+00> : vector<200x128xf32>
    %3 = tpu.matmul %2, %0, %cst {dimension_numbers = #tpu.dot_dimension_numbers<[1], [0], [0], [1], [0, 0, 1, 1], [], []>} : vector<200x128xbf16>, vector<128x128xbf16>, vector<200x128xf32> -> vector<200x128xf32>
    %c1 = arith.constant 1 : index
    %c0_4 = arith.constant 0 : index
    %c0_5 = arith.constant 0 : index
    %4 = vector.load %arg1[%c1, %c0_4, %c0_5] : memref<4x200x128xbf16, #tpu.memory_space<vmem>>, vector<1x200x128xbf16>
    %5 = vector.shape_cast %4 : vector<1x200x128xbf16> to vector<200x128xbf16>
    %cst_6 = arith.constant dense<0.000000e+00> : vector<200x128xf32>
    %6 = tpu.matmul %5, %0, %cst_6 {dimension_numbers = #tpu.dot_dimension_numbers<[1], [0], [0], [1], [0, 0, 1, 1], [], []>} : vector<200x128xbf16>, vector<128x128xbf16>, vector<200x128xf32> -> vector<200x128xf32>
    %7 = arith.maximumf %3, %6 : vector<200x128xf32>
    %c2 = arith.constant 2 : index
    %c0_7 = arith.constant 0 : index
    %c0_8 = arith.constant 0 : index
    %8 = vector.load %arg1[%c2, %c0_7, %c0_8] : memref<4x200x128xbf16, #tpu.memory_space<vmem>>, vector<1x200x128xbf16>
    %9 = vector.shape_cast %8 : vector<1x200x128xbf16> to vector<200x128xbf16>
    %cst_9 = arith.constant dense<0.000000e+00> : vector<200x128xf32>
    %10 = tpu.matmul %9, %0, %cst_9 {dimension_numbers = #tpu.dot_dimension_numbers<[1], [0], [0], [1], [0, 0, 1, 1], [], []>} : vector<200x128xbf16>, vector<128x128xbf16>, vector<200x128xf32> -> vector<200x128xf32>
    %11 = arith.maximumf %7, %10 : vector<200x128xf32>
    %c3 = arith.constant 3 : index
    %c0_10 = arith.constant 0 : index
    %c0_11 = arith.constant 0 : index
    %12 = vector.load %arg1[%c3, %c0_10, %c0_11] : memref<4x200x128xbf16, #tpu.memory_space<vmem>>, vector<1x200x128xbf16>
    %13 = vector.shape_cast %12 : vector<1x200x128xbf16> to vector<200x128xbf16>
    %cst_12 = arith.constant dense<0.000000e+00> : vector<200x128xf32>
    %14 = tpu.matmul %13, %0, %cst_12 {dimension_numbers = #tpu.dot_dimension_numbers<[1], [0], [0], [1], [0, 0, 1, 1], [], []>} : vector<200x128xbf16>, vector<128x128xbf16>, vector<200x128xf32> -> vector<200x128xf32>
    %15 = arith.maximumf %11, %14 : vector<200x128xf32>
    %c0_13 = arith.constant 0 : index
    %c0_14 = arith.constant 0 : index
    %16 = vector.load %arg3[%c0_13, %c0_14] : memref<1x128xf32, #tpu.memory_space<vmem>>, vector<1x128xf32>
    %17 = vector.broadcast %16 : vector<1x128xf32> to vector<200x128xf32>
    %18 = arith.addf %15, %17 : vector<200x128xf32>
    %cst_15 = arith.constant 0.000000e+00 : f32
    %19 = vector.broadcast %cst_15 : f32 to vector<200x128xf32>
    %20 = arith.maximumf %18, %19 : vector<200x128xf32>
    %21 = arith.truncf %20 : vector<200x128xf32> to vector<200x128xbf16>
    %c0_16 = arith.constant 0 : index
    %c0_17 = arith.constant 0 : index
    %22 = vector.load %arg4[%c0_16, %c0_17] : memref<200x128xbf16, #tpu.memory_space<vmem>>, vector<200x128xbf16>
    tpu.vector_store %arg4[%c0_16, %c0_17], %21 {strides = array<i32>} : memref<200x128xbf16, #tpu.memory_space<vmem>>, vector<200x128xbf16>,
    return
  }
  func.func @transform_0(%arg0: i32) -> (i32, i32, i32) {
    %c0_i32 = arith.constant 0 : i32
    %c0_i32_0 = arith.constant 0 : i32
    %c0_i32_1 = arith.constant 0 : i32
    return %c0_i32, %arg0, %c0_i32_0 : i32, i32, i32
  }
  func.func @transform_1(%arg0: i32) -> (i32, i32) {
    %c0_i32 = arith.constant 0 : i32
    %c0_i32_0 = arith.constant 0 : i32
    %c0_i32_1 = arith.constant 0 : i32
    return %c0_i32, %c0_i32_0 : i32, i32
  }
  func.func @transform_2(%arg0: i32) -> (i32, i32) {
    %c0_i32 = arith.constant 0 : i32
    %c0_i32_0 = arith.constant 0 : i32
    %c0_i32_1 = arith.constant 0 : i32
    return %c0_i32, %c0_i32_0 : i32, i32
  }
  func.func @transform_3(%arg0: i32) -> (i32, i32) {
    %c0_i32 = arith.constant 0 : i32
    %c0_i32_0 = arith.constant 0 : i32
    return %arg0, %c0_i32 : i32, i32
  }
}

module attributes {stable_mosaic.version = 11 : i64} {
  func.func @_conv_relu_pool_kernel(%arg0: i32, %arg1: memref<4x32x800xbf16, #tpu.memory_space<vmem>>, %arg2: memref<800x128xbf16, #tpu.memory_space<vmem>>, %arg3: memref<1x128xf32, #tpu.memory_space<vmem>>, %arg4: memref<32x128xbf16, #tpu.memory_space<vmem>>) attributes {dimension_semantics = [#tpu.dimension_semantics<parallel>], iteration_bounds = array<i64: 2>, scalar_prefetch = 0 : i64, scratch_operands = 0 : i64, tpu.core_type = #tpu.core_type<tc>, window_params = [{transform_indices = @transform_0, window_bounds = array<i64: 4, 32, 800>}, {pipeline_mode = #tpu.pipeline_mode<synchronous>, transform_indices = @transform_1, window_bounds = array<i64: 800, 128>}, {pipeline_mode = #tpu.pipeline_mode<synchronous>, transform_indices = @transform_2, window_bounds = array<i64: 1, 128>}, {transform_indices = @transform_3, window_bounds = array<i64: 32, 128>}]} {
    %c0 = arith.constant 0 : index
    %c0_0 = arith.constant 0 : index
    %0 = vector.load %arg2[%c0, %c0_0] : memref<800x128xbf16, #tpu.memory_space<vmem>>, vector<800x128xbf16>
    %c0_1 = arith.constant 0 : index
    %c0_2 = arith.constant 0 : index
    %c0_3 = arith.constant 0 : index
    %1 = vector.load %arg1[%c0_1, %c0_2, %c0_3] : memref<4x32x800xbf16, #tpu.memory_space<vmem>>, vector<1x32x800xbf16>
    %2 = vector.shape_cast %1 : vector<1x32x800xbf16> to vector<32x800xbf16>
    %cst = arith.constant dense<0.000000e+00> : vector<32x128xf32>
    %3 = tpu.matmul %2, %0, %cst {dimension_numbers = #tpu.dot_dimension_numbers<[1], [0], [0], [1], [0, 0, 1, 1], [], []>} : vector<32x800xbf16>, vector<800x128xbf16>, vector<32x128xf32> -> vector<32x128xf32>
    %c1 = arith.constant 1 : index
    %c0_4 = arith.constant 0 : index
    %c0_5 = arith.constant 0 : index
    %4 = vector.load %arg1[%c1, %c0_4, %c0_5] : memref<4x32x800xbf16, #tpu.memory_space<vmem>>, vector<1x32x800xbf16>
    %5 = vector.shape_cast %4 : vector<1x32x800xbf16> to vector<32x800xbf16>
    %cst_6 = arith.constant dense<0.000000e+00> : vector<32x128xf32>
    %6 = tpu.matmul %5, %0, %cst_6 {dimension_numbers = #tpu.dot_dimension_numbers<[1], [0], [0], [1], [0, 0, 1, 1], [], []>} : vector<32x800xbf16>, vector<800x128xbf16>, vector<32x128xf32> -> vector<32x128xf32>
    %7 = arith.maximumf %3, %6 : vector<32x128xf32>
    %c2 = arith.constant 2 : index
    %c0_7 = arith.constant 0 : index
    %c0_8 = arith.constant 0 : index
    %8 = vector.load %arg1[%c2, %c0_7, %c0_8] : memref<4x32x800xbf16, #tpu.memory_space<vmem>>, vector<1x32x800xbf16>
    %9 = vector.shape_cast %8 : vector<1x32x800xbf16> to vector<32x800xbf16>
    %cst_9 = arith.constant dense<0.000000e+00> : vector<32x128xf32>
    %10 = tpu.matmul %9, %0, %cst_9 {dimension_numbers = #tpu.dot_dimension_numbers<[1], [0], [0], [1], [0, 0, 1, 1], [], []>} : vector<32x800xbf16>, vector<800x128xbf16>, vector<32x128xf32> -> vector<32x128xf32>
    %11 = arith.maximumf %7, %10 : vector<32x128xf32>
    %c3 = arith.constant 3 : index
    %c0_10 = arith.constant 0 : index
    %c0_11 = arith.constant 0 : index
    %12 = vector.load %arg1[%c3, %c0_10, %c0_11] : memref<4x32x800xbf16, #tpu.memory_space<vmem>>, vector<1x32x800xbf16>
    %13 = vector.shape_cast %12 : vector<1x32x800xbf16> to vector<32x800xbf16>
    %cst_12 = arith.constant dense<0.000000e+00> : vector<32x128xf32>
    %14 = tpu.matmul %13, %0, %cst_12 {dimension_numbers = #tpu.dot_dimension_numbers<[1], [0], [0], [1], [0, 0, 1, 1], [], []>} : vector<32x800xbf16>, vector<800x128xbf16>, vector<32x128xf32> -> vector<32x128xf32>
    %15 = arith.maximumf %11, %14 : vector<32x128xf32>
    %c0_13 = arith.constant 0 : index
    %c0_14 = arith.constant 0 : index
    %16 = vector.load %arg3[%c0_13, %c0_14] : memref<1x128xf32, #tpu.memory_space<vmem>>, vector<1x128xf32>
    %17 = vector.broadcast %16 : vector<1x128xf32> to vector<32x128xf32>
    %18 = arith.addf %15, %17 : vector<32x128xf32>
    %cst_15 = arith.constant 0.000000e+00 : f32
    %19 = vector.broadcast %cst_15 : f32 to vector<32x128xf32>
    %20 = arith.maximumf %18, %19 : vector<32x128xf32>
    %21 = arith.truncf %20 : vector<32x128xf32> to vector<32x128xbf16>
    %c0_16 = arith.constant 0 : index
    %c0_17 = arith.constant 0 : index
    %22 = vector.load %arg4[%c0_16, %c0_17] : memref<32x128xbf16, #tpu.memory_space<vmem>>, vector<32x128xbf16>
    tpu.vector_store %arg4[%c0_16, %c0_17], %21 {strides = array<i32>} : memref<32x128xbf16, #tpu.memory_space<vmem>>, vector<32x128xbf16>,
    return
  }
  func.func @transform_0(%arg0: i32) -> (i32, i32, i32) {
    %c0_i32 = arith.constant 0 : i32
    %c0_i32_0 = arith.constant 0 : i32
    %c0_i32_1 = arith.constant 0 : i32
    return %c0_i32, %arg0, %c0_i32_0 : i32, i32, i32
  }
  func.func @transform_1(%arg0: i32) -> (i32, i32) {
    %c0_i32 = arith.constant 0 : i32
    %c0_i32_0 = arith.constant 0 : i32
    %c0_i32_1 = arith.constant 0 : i32
    return %c0_i32, %c0_i32_0 : i32, i32
  }
  func.func @transform_2(%arg0: i32) -> (i32, i32) {
    %c0_i32 = arith.constant 0 : i32
    %c0_i32_0 = arith.constant 0 : i32
    %c0_i32_1 = arith.constant 0 : i32
    return %c0_i32, %c0_i32_0 : i32, i32
  }
  func.func @transform_3(%arg0: i32) -> (i32, i32) {
    %c0_i32 = arith.constant 0 : i32
    %c0_i32_0 = arith.constant 0 : i32
    return %arg0, %c0_i32 : i32, i32
  }
}

module attributes {stable_mosaic.version = 11 : i64} {
  func.func @_fc_fused_kernel(%arg0: i32, %arg1: memref<8x1600xbf16, #tpu.memory_space<vmem>>, %arg2: memref<1600x128xbf16, #tpu.memory_space<vmem>>, %arg3: memref<1x128xf32, #tpu.memory_space<vmem>>, %arg4: memref<128x128xbf16, #tpu.memory_space<vmem>>, %arg5: memref<1x128xf32, #tpu.memory_space<vmem>>, %arg6: memref<8x128xf32, #tpu.memory_space<vmem>>) attributes {dimension_semantics = [#tpu.dimension_semantics<parallel>], iteration_bounds = array<i64: 1>, scalar_prefetch = 0 : i64, scratch_operands = 0 : i64, tpu.core_type = #tpu.core_type<tc>, window_params = [{transform_indices = @transform_0, window_bounds = array<i64: 8, 1600>}, {pipeline_mode = #tpu.pipeline_mode<synchronous>, transform_indices = @transform_1, window_bounds = array<i64: 1600, 128>}, {pipeline_mode = #tpu.pipeline_mode<synchronous>, transform_indices = @transform_2, window_bounds = array<i64: 1, 128>}, {pipeline_mode = #tpu.pipeline_mode<synchronous>, transform_indices = @transform_3, window_bounds = array<i64: 128, 128>}, {pipeline_mode = #tpu.pipeline_mode<synchronous>, transform_indices = @transform_4, window_bounds = array<i64: 1, 128>}, {transform_indices = @transform_5, window_bounds = array<i64: 8, 128>}]} {
    %c0 = arith.constant 0 : index
    %c0_0 = arith.constant 0 : index
    %0 = vector.load %arg1[%c0, %c0_0] : memref<8x1600xbf16, #tpu.memory_space<vmem>>, vector<8x1600xbf16>
    %c0_1 = arith.constant 0 : index
    %c0_2 = arith.constant 0 : index
    %1 = vector.load %arg2[%c0_1, %c0_2] : memref<1600x128xbf16, #tpu.memory_space<vmem>>, vector<1600x128xbf16>
    %cst = arith.constant dense<0.000000e+00> : vector<8x128xf32>
    %2 = tpu.matmul %0, %1, %cst {dimension_numbers = #tpu.dot_dimension_numbers<[1], [0], [0], [1], [0, 0, 1, 1], [], []>} : vector<8x1600xbf16>, vector<1600x128xbf16>, vector<8x128xf32> -> vector<8x128xf32>
    %c0_3 = arith.constant 0 : index
    %c0_4 = arith.constant 0 : index
    %3 = vector.load %arg3[%c0_3, %c0_4] : memref<1x128xf32, #tpu.memory_space<vmem>>, vector<1x128xf32>
    %4 = vector.broadcast %3 : vector<1x128xf32> to vector<8x128xf32>
    %5 = arith.addf %2, %4 : vector<8x128xf32>
    %cst_5 = arith.constant 0.000000e+00 : f32
    %6 = vector.broadcast %cst_5 : f32 to vector<8x128xf32>
    %7 = arith.maximumf %5, %6 : vector<8x128xf32>
    %8 = arith.truncf %7 : vector<8x128xf32> to vector<8x128xbf16>
    %c0_6 = arith.constant 0 : index
    %c0_7 = arith.constant 0 : index
    %9 = vector.load %arg4[%c0_6, %c0_7] : memref<128x128xbf16, #tpu.memory_space<vmem>>, vector<128x128xbf16>
    %cst_8 = arith.constant dense<0.000000e+00> : vector<8x128xf32>
    %10 = tpu.matmul %8, %9, %cst_8 {dimension_numbers = #tpu.dot_dimension_numbers<[1], [0], [0], [1], [0, 0, 1, 1], [], []>} : vector<8x128xbf16>, vector<128x128xbf16>, vector<8x128xf32> -> vector<8x128xf32>
    %c0_9 = arith.constant 0 : index
    %c0_10 = arith.constant 0 : index
    %11 = vector.load %arg5[%c0_9, %c0_10] : memref<1x128xf32, #tpu.memory_space<vmem>>, vector<1x128xf32>
    %12 = vector.broadcast %11 : vector<1x128xf32> to vector<8x128xf32>
    %13 = arith.addf %10, %12 : vector<8x128xf32>
    %c0_11 = arith.constant 0 : index
    %c0_12 = arith.constant 0 : index
    %14 = vector.load %arg6[%c0_11, %c0_12] : memref<8x128xf32, #tpu.memory_space<vmem>>, vector<8x128xf32>
    tpu.vector_store %arg6[%c0_11, %c0_12], %13 {strides = array<i32>} : memref<8x128xf32, #tpu.memory_space<vmem>>, vector<8x128xf32>,
    return
  }
  func.func @transform_0(%arg0: i32) -> (i32, i32) {
    %c0_i32 = arith.constant 0 : i32
    %c0_i32_0 = arith.constant 0 : i32
    return %arg0, %c0_i32 : i32, i32
  }
  func.func @transform_1(%arg0: i32) -> (i32, i32) {
    %c0_i32 = arith.constant 0 : i32
    %c0_i32_0 = arith.constant 0 : i32
    %c0_i32_1 = arith.constant 0 : i32
    return %c0_i32, %c0_i32_0 : i32, i32
  }
  func.func @transform_2(%arg0: i32) -> (i32, i32) {
    %c0_i32 = arith.constant 0 : i32
    %c0_i32_0 = arith.constant 0 : i32
    %c0_i32_1 = arith.constant 0 : i32
    return %c0_i32, %c0_i32_0 : i32, i32
  }
  func.func @transform_3(%arg0: i32) -> (i32, i32) {
    %c0_i32 = arith.constant 0 : i32
    %c0_i32_0 = arith.constant 0 : i32
    %c0_i32_1 = arith.constant 0 : i32
    return %c0_i32, %c0_i32_0 : i32, i32
  }
  func.func @transform_4(%arg0: i32) -> (i32, i32) {
    %c0_i32 = arith.constant 0 : i32
    %c0_i32_0 = arith.constant 0 : i32
    %c0_i32_1 = arith.constant 0 : i32
    return %c0_i32, %c0_i32_0 : i32, i32
  }
  func.func @transform_5(%arg0: i32) -> (i32, i32) {
    %c0_i32 = arith.constant 0 : i32
    %c0_i32_0 = arith.constant 0 : i32
    return %arg0, %c0_i32 : i32, i32
  }
}

</mosaic_0001>

<llo_original>
// kernel: convnet_forward.3
$region0: #{convnet_forward.3}
  #allocation0 [shape = 'u32[]', space=smem, size = 0x4, offset = 0x4, fixed_abs, tag = 'smem constant byte address 0x4 - core index']
  #allocation1 [shape = 'u32[144,128]{1,0:T(1,128)}', space=vmem, size = 0x12000, scoped, tag = 'internal scratch']
  %s0 = inlined_call_operand.vmem [shape: bf16[4,400,128], index: 0, kind: input, shape index: {}]
  %s1 = inlined_call_operand.vmem [shape: bf16[128,128], index: 1, kind: input, shape index: {}]
  %s2 = inlined_call_operand.vmem [shape: f32[1,128], index: 2, kind: input, shape index: {}]
  %s3 = inlined_call_operand.vmem [shape: bf16[400,128], index: 3, kind: output, shape index: {}]
  %s4 = sld [smem:[#allocation0]]
  $region86: #{convnet_forward.3} parent=0
    _
  %s6 = ssub.s32 1, %s4
  %s7 = scalar_select 0, %s6, %s4
  $region1: #{convnet_forward.3} parent=0
    #allocation2 [shape = 'u8[409600]{0}', space=vmem, size = 0x64000, scoped, tag = 'input window, operand 0']
    loop: start=0, step=1, limit=4
    $region2: #{convnet_forward.3} parent=1 // loop_pre_header
      _
    $region3: #{convnet_forward.3} parent=1 // loop_header
      %s9 = sphi 0, %s13
      %p10 = scmp.ge.s32.totalorder %s9, 4
      %s19 = sphi 0, %s21
      %s22 = sphi 0, %s19
      %s23 = sphi 0, %s22
      %s39 = sphi 0, %s23
      %s43 = sphi 0, %s43
      %s45 = sphi 0, %s43
      %s46 = sphi 0, %s45
      %s60 = sphi 0, %s46
      %s64 = sphi 0, %s64
      %s66 = sphi 0, %s64
      %s67 = sphi 0, %s66
      %s81 = sphi 0, %s67
      %s87 = sphi 0, %s89
      %s90 = sphi 0, %s87
      %s91 = sphi 0, %s90
      %s107 = sphi 0, %s91
    $region4: #{convnet_forward.3} parent=1 // loop_header_branch
      %12 = sbr.rel (%p10) target = $region8
    $region5: #{convnet_forward.3} parent=1 // loop_body
      %s14 = ssub.s32 %s9, 1
      %s15 = ssub.s32 %s9, 2
      %s16 = sadd.s32 %s9, 1
      %s17 = ssub.s32 %s9, %s16
      %p18 = scmp.eq.s32.totalorder %s17, 0
      %s20 = sadd.s32 %s19, 1
      %s21 = scalar_select %p18, %s19, %s20
      %p24 = pneg %p18
      %p25 = scmp.eq.s32.totalorder %s9, 1
      %p26 = por %p24, %p25
      %p27 = scmp.ne.s32.totalorder %s19, %s22
      %p28 = scmp.eq.s32.totalorder %s9, 0
      %p29 = por %p27, %p28
      %p30 = scmp.ne.s32.totalorder %s19, %s22
      %p31 = scmp.eq.s32.totalorder %s14, 1
      %p32 = por %p30, %p31
      %p33 = scmp.ne.s32.totalorder %s22, %s23
      %p34 = scmp.eq.s32.totalorder %s14, 0
      %p35 = por %p33, %p34
      %p36 = scmp.ne.s32.totalorder %s22, %s23
      %p37 = scmp.eq.s32.totalorder %s15, 1
      %p38 = por %p36, %p37
      %p40 = scmp.ne.s32.totalorder %s23, %s39
      %p41 = scmp.eq.s32.totalorder %s15, 0
      %p42 = por %p40, %p41
      %s44 = sadd.s32 %s43, 1
      %p47 = scmp.eq.s32.totalorder %s9, 1
      %p48 = scmp.ne.s32.totalorder %s43, %s45
      %p49 = scmp.eq.s32.totalorder %s9, 0
      %p50 = por %p48, %p49
      %p51 = scmp.ne.s32.totalorder %s43, %s45
      %p52 = scmp.eq.s32.totalorder %s14, 1
      %p53 = por %p51, %p52
      %p54 = scmp.ne.s32.totalorder %s45, %s46
      %p55 = scmp.eq.s32.totalorder %s14, 0
      %p56 = por %p54, %p55
      %p57 = scmp.ne.s32.totalorder %s45, %s46
      %p58 = scmp.eq.s32.totalorder %s15, 1
      %p59 = por %p57, %p58
      %p61 = scmp.ne.s32.totalorder %s46, %s60
      %p62 = scmp.eq.s32.totalorder %s15, 0
      %p63 = por %p61, %p62
      %s65 = sadd.s32 %s64, 1
      %p68 = scmp.eq.s32.totalorder %s9, 1
      %p69 = scmp.ne.s32.totalorder %s64, %s66
      %p70 = scmp.eq.s32.totalorder %s9, 0
      %p71 = por %p69, %p70
      %p72 = scmp.ne.s32.totalorder %s64, %s66
      %p73 = scmp.eq.s32.totalorder %s14, 1
      %p74 = por %p72, %p73
      %p75 = scmp.ne.s32.totalorder %s66, %s67
      %p76 = scmp.eq.s32.totalorder %s14, 0
      %p77 = por %p75, %p76
      %p78 = scmp.ne.s32.totalorder %s66, %s67
      %p79 = scmp.eq.s32.totalorder %s15, 1
      %p80 = por %p78, %p79
      %p82 = scmp.ne.s32.totalorder %s67, %s81
      %p83 = scmp.eq.s32.totalorder %s15, 0
      %p84 = por %p82, %p83
      %s85 = ssub.s32 %s9, %s16
      %p86 = scmp.eq.s32.totalorder %s85, 0
      %s88 = sadd.s32 %s87, 1
      %s89 = scalar_select %p86, %s87, %s88
      %p92 = pneg %p86
      %p93 = scmp.eq.s32.totalorder %s9, 1
      %p94 = por %p92, %p93
      %p95 = scmp.ne.s32.totalorder %s87, %s90
      %p96 = scmp.eq.s32.totalorder %s9, 0
      %p97 = por %p95, %p96
      %p98 = scmp.ne.s32.totalorder %s87, %s90
      %p99 = scmp.eq.s32.totalorder %s14, 1
      %p100 = por %p98, %p99
      %p101 = scmp.ne.s32.totalorder %s90, %s91
      %p102 = scmp.eq.s32.totalorder %s14, 0
      %p103 = por %p101, %p102
      %p104 = scmp.ne.s32.totalorder %s90, %s91
      %p105 = scmp.eq.s32.totalorder %s15, 1
      %p106 = por %p104, %p105
      %p108 = scmp.ne.s32.totalorder %s91, %s107
      %p109 = scmp.eq.s32.totalorder %s15, 0
      %p110 = por %p108, %p109
      %p111 = scmp.le.s32.totalorder 1, %s9
      %p112 = scmp.lt.s32.totalorder %s9, 3
      %p113 = pnand %p111, %p112
      %p114 = pneg %p113
      // Predicated region
      $region9: #{convnet_forward.3} parent=5 // pred_check
        _
      $region10: #{convnet_forward.3} parent=5 // pred_check_branch
        %116 = sbr.rel (%p113) target = $region12
      $region11: #{convnet_forward.3} parent=5 // pred_region
        %s117 = ssub.s32 %s9, 1
        // Predicated region
        $region13: #{convnet_forward.3} parent=11 // pred_check
          %p118 = pneg %p56
        $region14: #{convnet_forward.3} parent=11 // pred_check_branch
          %120 = sbr.rel (%p118) target = $region16
        $region15: #{convnet_forward.3} parent=11 // pred_region
          _
        $region16: #{convnet_forward.3} parent=11 // pred_fallthru
          _
        // Predicated region
        $region17: #{convnet_forward.3} parent=11 // pred_check
          %p121 = pneg %p77
        $region18: #{convnet_forward.3} parent=11 // pred_check_branch
          %123 = sbr.rel (%p121) target = $region20
        $region19: #{convnet_forward.3} parent=11 // pred_region
          _
        $region20: #{convnet_forward.3} parent=11 // pred_fallthru
          _
      $region12: #{convnet_forward.3} parent=5 // pred_fallthru
        _
      %p124 = scmp.lt.s32.totalorder %s9, 2
      // Predicated region
      $region21: #{convnet_forward.3} parent=5 // pred_check
        %p125 = pneg %p124
      $region22: #{convnet_forward.3} parent=5 // pred_check_branch
        %127 = sbr.rel (%p125) target = $region24
      $region23: #{convnet_forward.3} parent=5 // pred_region
        // Predicated region
        $region25: #{convnet_forward.3} parent=23 // pred_check
          %p128 = pneg %p29
        $region26: #{convnet_forward.3} parent=23 // pred_check_branch
          %130 = sbr.rel (%p128) target = $region28
        $region27: #{convnet_forward.3} parent=23 // pred_region
          %s131 = sand.u32 %s19, 1
          %s132 = sand.u32 %s19, 1
          %s133 = smul.addr %s132, 400
          %s134 = scalar_lea.vmem [#allocation2], %s133
          %s135 = smul.u32 25, %s9
          %s136 = smul.addr %s135, 4
          %s137 = scalar_lea.vmem %s0, %s136
          // Predicated region
          $region29: #{convnet_forward.3} parent=27 // pred_check
            _
          $region30: #{convnet_forward.3} parent=27 // pred_check_branch
            %139 = sbr.rel (0) target = $region32
          $region31: #{convnet_forward.3} parent=27 // pred_region
            // Predicated region
            $region33: #{convnet_forward.3} parent=31 // pred_check
              _
            $region34: #{convnet_forward.3} parent=31 // pred_check_branch
              %141 = sbr.rel target = $region36
            $region35: #{convnet_forward.3} parent=31 // pred_region
              // Predicated region
              $region48: #{convnet_forward.3} parent=35 // pred_check
                _
              $region49: #{convnet_forward.3} parent=35 // pred_check_branch
                %355 = sbr.rel (0) target = $region51
              $region50: #{convnet_forward.3} parent=35 // pred_region
                loop: start=0, step=1, limit=1
                $region52: #{convnet_forward.3} parent=50 // loop_pre_header
                  _
                $region53: #{convnet_forward.3} parent=50 // loop_header
                  %s357 = sphi 0, %s361
                  %p358 = scmp.ge.s32.totalorder %s357, 1
                  %s362 = sphi %s137, %s137
                  %s363 = sphi %s134, %s134
                $region54: #{convnet_forward.3} parent=50 // loop_header_branch
                  %360 = sbr.rel (%p358) target = $region58
                $region55: #{convnet_forward.3} parent=50 // loop_body
                  _
                $region56: #{convnet_forward.3} parent=50 // loop_footer
                  %s361 = sadd.s32 1, %s357
                $region57: #{convnet_forward.3} parent=50 // loop_footer_branch
                  %356 = sbr.rel target = $region53
                $region58: #{convnet_forward.3} parent=50 // loop_exit
                  _
                %s365 = ssub.s32 16, 1
                loop: start=0, step=1, limit=1
                $region59: #{convnet_forward.3} parent=50 // loop_pre_header
                  _
                $region60: #{convnet_forward.3} parent=50 // loop_header
                  %s367 = sphi 0, %s371
                  %p368 = scmp.ge.s32.totalorder %s367, 1
                  %s372 = sphi %s137, %s137
                  %s373 = sphi %s134, %s134
                $region61: #{convnet_forward.3} parent=50 // loop_header_branch
                  %370 = sbr.rel (%p368) target = $region65
                $region62: #{convnet_forward.3} parent=50 // loop_body
                  %v374 = vld [vmem:[%s372] sm:%s365]
                  %375 = vst [vmem:[%s373] sm:%s365] %v374
                  %v376 = vld [vmem:[%s372 + $0x4] sm:%s365]
                  %377 = vst [vmem:[%s373 + $0x4] sm:%s365] %v376
                  %v378 = vld [vmem:[%s372 + $0x8] sm:%s365]
                  %379 = vst [vmem:[%s373 + $0x8] sm:%s365] %v378
                  %v380 = vld [vmem:[%s372 + $0xc] sm:%s365]
                  %381 = vst [vmem:[%s373 + $0xc] sm:%s365] %v380
                  %v382 = vld [vmem:[%s372 + $0x10] sm:%s365]
                  %383 = vst [vmem:[%s373 + $0x10] sm:%s365] %v382
                  %v384 = vld [vmem:[%s372 + $0x14] sm:%s365]
                  %385 = vst [vmem:[%s373 + $0x14] sm:%s365] %v384
                  %v386 = vld [vmem:[%s372 + $0x18] sm:%s365]
                  %387 = vst [vmem:[%s373 + $0x18] sm:%s365] %v386
                  %v388 = vld [vmem:[%s372 + $0x1c] sm:%s365]
                  %389 = vst [vmem:[%s373 + $0x1c] sm:%s365] %v388
                  %v390 = vld [vmem:[%s372 + $0x20] sm:%s365]
                  %391 = vst [vmem:[%s373 + $0x20] sm:%s365] %v390
                  %v392 = vld [vmem:[%s372 + $0x24] sm:%s365]
                  %393 = vst [vmem:[%s373 + $0x24] sm:%s365] %v392
                  %v394 = vld [vmem:[%s372 + $0x28] sm:%s365]
                  %395 = vst [vmem:[%s373 + $0x28] sm:%s365] %v394
                  %v396 = vld [vmem:[%s372 + $0x2c] sm:%s365]
                  %397 = vst [vmem:[%s373 + $0x2c] sm:%s365] %v396
                  %v398 = vld [vmem:[%s372 + $0x30] sm:%s365]
                  %399 = vst [vmem:[%s373 + $0x30] sm:%s365] %v398
                  %v400 = vld [vmem:[%s372 + $0x34] sm:%s365]
                  %401 = vst [vmem:[%s373 + $0x34] sm:%s365] %v400
                  %v402 = vld [vmem:[%s372 + $0x38] sm:%s365]
                  %403 = vst [vmem:[%s373 + $0x38] sm:%s365] %v402
                  %v404 = vld [vmem:[%s372 + $0x3c] sm:%s365]
                  %405 = vst [vmem:[%s373 + $0x3c] sm:%s365] %v404
                  %v406 = vld [vmem:[%s372 + $0x40] sm:%s365]
                  %407 = vst [vmem:[%s373 + $0x40] sm:%s365] %v406
                  %v408 = vld [vmem:[%s372 + $0x44] sm:%s365]
                  %409 = vst [vmem:[%s373 + $0x44] sm:%s365] %v408
                  %v410 = vld [vmem:[%s372 + $0x48] sm:%s365]
                  %411 = vst [vmem:[%s373 + $0x48] sm:%s365] %v410
                  %v412 = vld [vmem:[%s372 + $0x4c] sm:%s365]
                  %413 = vst [vmem:[%s373 + $0x4c] sm:%s365] %v412
                  %v414 = vld [vmem:[%s372 + $0x50] sm:%s365]
                  %415 = vst [vmem:[%s373 + $0x50] sm:%s365] %v414
                  %v416 = vld [vmem:[%s372 + $0x54] sm:%s365]
                  %417 = vst [vmem:[%s373 + $0x54] sm:%s365] %v416
                  %v418 = vld [vmem:[%s372 + $0x58] sm:%s365]
                  %419 = vst [vmem:[%s373 + $0x58] sm:%s365] %v418
                  %v420 = vld [vmem:[%s372 + $0x5c] sm:%s365]
                  %421 = vst [vmem:[%s373 + $0x5c] sm:%s365] %v420
                  %v422 = vld [vmem:[%s372 + $0x60] sm:%s365]
                  %423 = vst [vmem:[%s373 + $0x60] sm:%s365] %v422
                  %v424 = vld [vmem:[%s372 + $0xc8] sm:%s365]
                  %425 = vst [vmem:[%s373 + $0x64] sm:%s365] %v424
                  %v426 = vld [vmem:[%s372 + $0xcc] sm:%s365]
                  %427 = vst [vmem:[%s373 + $0x68] sm:%s365] %v426
                  %v428 = vld [vmem:[%s372 + $0xd0] sm:%s365]
                  %429 = vst [vmem:[%s373 + $0x6c] sm:%s365] %v428
                  %v430 = vld [vmem:[%s372 + $0xd4] sm:%s365]
                  %431 = vst [vmem:[%s373 + $0x70] sm:%s365] %v430
                  %v432 = vld [vmem:[%s372 + $0xd8] sm:%s365]
                  %433 = vst [vmem:[%s373 + $0x74] sm:%s365] %v432
                  %v434 = vld [vmem:[%s372 + $0xdc] sm:%s365]
                  %435 = vst [vmem:[%s373 + $0x78] sm:%s365] %v434
                  %v436 = vld [vmem:[%s372 + $0xe0] sm:%s365]
                  %437 = vst [vmem:[%s373 + $0x7c] sm:%s365] %v436
                  %v438 = vld [vmem:[%s372 + $0xe4] sm:%s365]
                  %439 = vst [vmem:[%s373 + $0x80] sm:%s365] %v438
                  %v440 = vld [vmem:[%s372 + $0xe8] sm:%s365]
                  %441 = vst [vmem:[%s373 + $0x84] sm:%s365] %v440
                  %v442 = vld [vmem:[%s372 + $0xec] sm:%s365]
                  %443 = vst [vmem:[%s373 + $0x88] sm:%s365] %v442
                  %v444 = vld [vmem:[%s372 + $0xf0] sm:%s365]
                  %445 = vst [vmem:[%s373 + $0x8c] sm:%s365] %v444
                  %v446 = vld [vmem:[%s372 + $0xf4] sm:%s365]
                  %447 = vst [vmem:[%s373 + $0x90] sm:%s365] %v446
                  %v448 = vld [vmem:[%s372 + $0xf8] sm:%s365]
                  %449 = vst [vmem:[%s373 + $0x94] sm:%s365] %v448
                  %v450 = vld [vmem:[%s372 + $0xfc] sm:%s365]
                  %451 = vst [vmem:[%s373 + $0x98] sm:%s365] %v450
                  %v452 = vld [vmem:[%s372 + $0x100] sm:%s365]
                  %453 = vst [vmem:[%s373 + $0x9c] sm:%s365] %v452
                  %v454 = vld [vmem:[%s372 + $0x104] sm:%s365]
                  %455 = vst [vmem:[%s373 + $0xa0] sm:%s365] %v454
                  %v456 = vld [vmem:[%s372 + $0x108] sm:%s365]
                  %457 = vst [vmem:[%s373 + $0xa4] sm:%s365] %v456
                  %v458 = vld [vmem:[%s372 + $0x10c] sm:%s365]
                  %459 = vst [vmem:[%s373 + $0xa8] sm:%s365] %v458
                  %v460 = vld [vmem:[%s372 + $0x110] sm:%s365]
                  %461 = vst [vmem:[%s373 + $0xac] sm:%s365] %v460
                  %v462 = vld [vmem:[%s372 + $0x114] sm:%s365]
                  %463 = vst [vmem:[%s373 + $0xb0] sm:%s365] %v462
                  %v464 = vld [vmem:[%s372 + $0x118] sm:%s365]
                  %465 = vst [vmem:[%s373 + $0xb4] sm:%s365] %v464
                  %v466 = vld [vmem:[%s372 + $0x11c] sm:%s365]
                  %467 = vst [vmem:[%s373 + $0xb8] sm:%s365] %v466
                  %v468 = vld [vmem:[%s372 + $0x120] sm:%s365]
                  %469 = vst [vmem:[%s373 + $0xbc] sm:%s365] %v468
                  %v470 = vld [vmem:[%s372 + $0x124] sm:%s365]
                  %471 = vst [vmem:[%s373 + $0xc0] sm:%s365] %v470
                  %v472 = vld [vmem:[%s372 + $0x128] sm:%s365]
                  %473 = vst [vmem:[%s373 + $0xc4] sm:%s365] %v472
                  %v474 = vld [vmem:[%s372 + $0x190] sm:%s365]
                  %475 = vst [vmem:[%s373 + $0xc8] sm:%s365] %v474
                  %v476 = vld [vmem:[%s372 + $0x194] sm:%s365]
                  %477 = vst [vmem:[%s373 + $0xcc] sm:%s365] %v476
                  %v478 = vld [vmem:[%s372 + $0x198] sm:%s365]
                  %479 = vst [vmem:[%s373 + $0xd0] sm:%s365] %v478
                  %v480 = vld [vmem:[%s372 + $0x19c] sm:%s365]
                  %481 = vst [vmem:[%s373 + $0xd4] sm:%s365] %v480
                  %v482 = vld [vmem:[%s372 + $0x1a0] sm:%s365]
                  %483 = vst [vmem:[%s373 + $0xd8] sm:%s365] %v482
                  %v484 = vld [vmem:[%s372 + $0x1a4] sm:%s365]
                  %485 = vst [vmem:[%s373 + $0xdc] sm:%s365] %v484
                  %v486 = vld [vmem:[%s372 + $0x1a8] sm:%s365]
                  %487 = vst [vmem:[%s373 + $0xe0] sm:%s365] %v486
                  %v488 = vld [vmem:[%s372 + $0x1ac] sm:%s365]
                  %489 = vst [vmem:[%s373 + $0xe4] sm:%s365] %v488
                  %v490 = vld [vmem:[%s372 + $0x1b0] sm:%s365]
                  %491 = vst [vmem:[%s373 + $0xe8] sm:%s365] %v490
                  %v492 = vld [vmem:[%s372 + $0x1b4] sm:%s365]
                  %493 = vst [vmem:[%s373 + $0xec] sm:%s365] %v492
                  %v494 = vld [vmem:[%s372 + $0x1b8] sm:%s365]
                  %495 = vst [vmem:[%s373 + $0xf0] sm:%s365] %v494
                  %v496 = vld [vmem:[%s372 + $0x1bc] sm:%s365]
                  %497 = vst [vmem:[%s373 + $0xf4] sm:%s365] %v496
                  %v498 = vld [vmem:[%s372 + $0x1c0] sm:%s365]
                  %499 = vst [vmem:[%s373 + $0xf8] sm:%s365] %v498
                  %v500 = vld [vmem:[%s372 + $0x1c4] sm:%s365]
                  %501 = vst [vmem:[%s373 + $0xfc] sm:%s365] %v500
                  %v502 = vld [vmem:[%s372 + $0x1c8] sm:%s365]
                  %503 = vst [vmem:[%s373 + $0x100] sm:%s365] %v502
                  %v504 = vld [vmem:[%s372 + $0x1cc] sm:%s365]
                  %505 = vst [vmem:[%s373 + $0x104] sm:%s365] %v504
                  %v506 = vld [vmem:[%s372 + $0x1d0] sm:%s365]
                  %507 = vst [vmem:[%s373 + $0x108] sm:%s365] %v506
                  %v508 = vld [vmem:[%s372 + $0x1d4] sm:%s365]
                  %509 = vst [vmem:[%s373 + $0x10c] sm:%s365] %v508
                  %v510 = vld [vmem:[%s372 + $0x1d8] sm:%s365]
                  %511 = vst [vmem:[%s373 + $0x110] sm:%s365] %v510
                  %v512 = vld [vmem:[%s372 + $0x1dc] sm:%s365]
                  %513 = vst [vmem:[%s373 + $0x114] sm:%s365] %v512
                  %v514 = vld [vmem:[%s372 + $0x1e0] sm:%s365]
                  %515 = vst [vmem:[%s373 + $0x118] sm:%s365] %v514
                  %v516 = vld [vmem:[%s372 + $0x1e4] sm:%s365]
                  %517 = vst [vmem:[%s373 + $0x11c] sm:%s365] %v516
                  %v518 = vld [vmem:[%s372 + $0x1e8] sm:%s365]
                  %519 = vst [vmem:[%s373 + $0x120] sm:%s365] %v518
                  %v520 = vld [vmem:[%s372 + $0x1ec] sm:%s365]
                  %521 = vst [vmem:[%s373 + $0x124] sm:%s365] %v520
                  %v522 = vld [vmem:[%s372 + $0x1f0] sm:%s365]
                  %523 = vst [vmem:[%s373 + $0x128] sm:%s365] %v522
                  %v524 = vld [vmem:[%s372 + $0x258] sm:%s365]
                  %525 = vst [vmem:[%s373 + $0x12c] sm:%s365] %v524
                  %v526 = vld [vmem:[%s372 + $0x25c] sm:%s365]
                  %527 = vst [vmem:[%s373 + $0x130] sm:%s365] %v526
                  %v528 = vld [vmem:[%s372 + $0x260] sm:%s365]
                  %529 = vst [vmem:[%s373 + $0x134] sm:%s365] %v528
                  %v530 = vld [vmem:[%s372 + $0x264] sm:%s365]
                  %531 = vst [vmem:[%s373 + $0x138] sm:%s365] %v530
                  %v532 = vld [vmem:[%s372 + $0x268] sm:%s365]
                  %533 = vst [vmem:[%s373 + $0x13c] sm:%s365] %v532
                  %v534 = vld [vmem:[%s372 + $0x26c] sm:%s365]
                  %535 = vst [vmem:[%s373 + $0x140] sm:%s365] %v534
                  %v536 = vld [vmem:[%s372 + $0x270] sm:%s365]
                  %537 = vst [vmem:[%s373 + $0x144] sm:%s365] %v536
                  %v538 = vld [vmem:[%s372 + $0x274] sm:%s365]
                  %539 = vst [vmem:[%s373 + $0x148] sm:%s365] %v538
                  %v540 = vld [vmem:[%s372 + $0x278] sm:%s365]
                  %541 = vst [vmem:[%s373 + $0x14c] sm:%s365] %v540
                  %v542 = vld [vmem:[%s372 + $0x27c] sm:%s365]
                  %543 = vst [vmem:[%s373 + $0x150] sm:%s365] %v542
                  %v544 = vld [vmem:[%s372 + $0x280] sm:%s365]
                  %545 = vst [vmem:[%s373 + $0x154] sm:%s365] %v544
                  %v546 = vld [vmem:[%s372 + $0x284] sm:%s365]
                  %547 = vst [vmem:[%s373 + $0x158] sm:%s365] %v546
                  %v548 = vld [vmem:[%s372 + $0x288] sm:%s365]
                  %549 = vst [vmem:[%s373 + $0x15c] sm:%s365] %v548
                  %v550 = vld [vmem:[%s372 + $0x28c] sm:%s365]
                  %551 = vst [vmem:[%s373 + $0x160] sm:%s365] %v550
                  %v552 = vld [vmem:[%s372 + $0x290] sm:%s365]
                  %553 = vst [vmem:[%s373 + $0x164] sm:%s365] %v552
                  %v554 = vld [vmem:[%s372 + $0x294] sm:%s365]
                  %555 = vst [vmem:[%s373 + $0x168] sm:%s365] %v554
                  %v556 = vld [vmem:[%s372 + $0x298] sm:%s365]
                  %557 = vst [vmem:[%s373 + $0x16c] sm:%s365] %v556
                  %v558 = vld [vmem:[%s372 + $0x29c] sm:%s365]
                  %559 = vst [vmem:[%s373 + $0x170] sm:%s365] %v558
                  %v560 = vld [vmem:[%s372 + $0x2a0] sm:%s365]
                  %561 = vst [vmem:[%s373 + $0x174] sm:%s365] %v560
                  %v562 = vld [vmem:[%s372 + $0x2a4] sm:%s365]
                  %563 = vst [vmem:[%s373 + $0x178] sm:%s365] %v562
                  %v564 = vld [vmem:[%s372 + $0x2a8] sm:%s365]
                  %565 = vst [vmem:[%s373 + $0x17c] sm:%s365] %v564
                  %v566 = vld [vmem:[%s372 + $0x2ac] sm:%s365]
                  %567 = vst [vmem:[%s373 + $0x180] sm:%s365] %v566
                  %v568 = vld [vmem:[%s372 + $0x2b0] sm:%s365]
                  %569 = vst [vmem:[%s373 + $0x184] sm:%s365] %v568
                  %v570 = vld [vmem:[%s372 + $0x2b4] sm:%s365]
                  %571 = vst [vmem:[%s373 + $0x188] sm:%s365] %v570
                  %v572 = vld [vmem:[%s372 + $0x2b8] sm:%s365]
                  %573 = vst [vmem:[%s373 + $0x18c] sm:%s365] %v572
                $region63: #{convnet_forward.3} parent=50 // loop_footer
                  %s371 = sadd.s32 1, %s367
                $region64: #{convnet_forward.3} parent=50 // loop_footer_branch
                  %366 = sbr.rel target = $region60
                $region65: #{convnet_forward.3} parent=50 // loop_exit
                  _
              $region51: #{convnet_forward.3} parent=35 // pred_fallthru
                _
            $region36: #{convnet_forward.3} parent=31 // pred_fallthru
              _
            // Predicated region
            $region37: #{convnet_forward.3} parent=31 // pred_check
              _
            $region38: #{convnet_forward.3} parent=31 // pred_check_branch
              %143 = sbr.rel (0) target = $region40
            $region39: #{convnet_forward.3} parent=31 // pred_region
              %s145 = ssub.s32 16, 1
              loop: start=0, step=1, limit=1
              $region41: #{convnet_forward.3} parent=39 // loop_pre_header
                _
              $region42: #{convnet_forward.3} parent=39 // loop_header
                %s147 = sphi 0, %s151
                %p148 = scmp.ge.s32.totalorder %s147, 1
                %s152 = sphi %s137, %s137
                %s153 = sphi %s134, %s134
              $region43: #{convnet_forward.3} parent=39 // loop_header_branch
                %150 = sbr.rel (%p148) target = $region47
              $region44: #{convnet_forward.3} parent=39 // loop_body
                %v154 = vld [vmem:[%s152] sm:%s145]
                %155 = vst [vmem:[%s153] sm:%s145] %v154
                %v156 = vld [vmem:[%s152 + $0x4] sm:%s145]
                %157 = vst [vmem:[%s153 + $0x4] sm:%s145] %v156
                %v158 = vld [vmem:[%s152 + $0x8] sm:%s145]
                %159 = vst [vmem:[%s153 + $0x8] sm:%s145] %v158
                %v160 = vld [vmem:[%s152 + $0xc] sm:%s145]
                %161 = vst [vmem:[%s153 + $0xc] sm:%s145] %v160
                %v162 = vld [vmem:[%s152 + $0x10] sm:%s145]
                %163 = vst [vmem:[%s153 + $0x10] sm:%s145] %v162
                %v164 = vld [vmem:[%s152 + $0x14] sm:%s145]
                %165 = vst [vmem:[%s153 + $0x14] sm:%s145] %v164
                %v166 = vld [vmem:[%s152 + $0x18] sm:%s145]
                %167 = vst [vmem:[%s153 + $0x18] sm:%s145] %v166
                %v168 = vld [vmem:[%s152 + $0x1c] sm:%s145]
                %169 = vst [vmem:[%s153 + $0x1c] sm:%s145] %v168
                %v170 = vld [vmem:[%s152 + $0x20] sm:%s145]
                %171 = vst [vmem:[%s153 + $0x20] sm:%s145] %v170
                %v172 = vld [vmem:[%s152 + $0x24] sm:%s145]
                %173 = vst [vmem:[%s153 + $0x24] sm:%s145] %v172
                %v174 = vld [vmem:[%s152 + $0x28] sm:%s145]
                %175 = vst [vmem:[%s153 + $0x28] sm:%s145] %v174
                %v176 = vld [vmem:[%s152 + $0x2c] sm:%s145]
                %177 = vst [vmem:[%s153 + $0x2c] sm:%s145] %v176
                %v178 = vld [vmem:[%s152 + $0x30] sm:%s145]
                %179 = vst [vmem:[%s153 + $0x30] sm:%s145] %v178
                %v180 = vld [vmem:[%s152 + $0x34] sm:%s145]
                %181 = vst [vmem:[%s153 + $0x34] sm:%s145] %v180
                %v182 = vld [vmem:[%s152 + $0x38] sm:%s145]
                %183 = vst [vmem:[%s153 + $0x38] sm:%s145] %v182
                %v184 = vld [vmem:[%s152 + $0x3c] sm:%s145]
                %185 = vst [vmem:[%s153 + $0x3c] sm:%s145] %v184
                %v186 = vld [vmem:[%s152 + $0x40] sm:%s145]
                %187 = vst [vmem:[%s153 + $0x40] sm:%s145] %v186
                %v188 = vld [vmem:[%s152 + $0x44] sm:%s145]
                %189 = vst [vmem:[%s153 + $0x44] sm:%s145] %v188
                %v190 = vld [vmem:[%s152 + $0x48] sm:%s145]
                %191 = vst [vmem:[%s153 + $0x48] sm:%s145] %v190
                %v192 = vld [vmem:[%s152 + $0x4c] sm:%s145]
                %193 = vst [vmem:[%s153 + $0x4c] sm:%s145] %v192
                %v194 = vld [vmem:[%s152 + $0x50] sm:%s145]
                %195 = vst [vmem:[%s153 + $0x50] sm:%s145] %v194
                %v196 = vld [vmem:[%s152 + $0x54] sm:%s145]
                %197 = vst [vmem:[%s153 + $0x54] sm:%s145] %v196
                %v198 = vld [vmem:[%s152 + $0x58] sm:%s145]
                %199 = vst [vmem:[%s153 + $0x58] sm:%s145] %v198
                %v200 = vld [vmem:[%s152 + $0x5c] sm:%s145]
                %201 = vst [vmem:[%s153 + $0x5c] sm:%s145] %v200
                %v202 = vld [vmem:[%s152 + $0x60] sm:%s145]
                %203 = vst [vmem:[%s153 + $0x60] sm:%s145] %v202
                %v204 = vld [vmem:[%s152 + $0xc8] sm:%s145]
                %205 = vst [vmem:[%s153 + $0x64] sm:%s145] %v204
                %v206 = vld [vmem:[%s152 + $0xcc] sm:%s145]
                %207 = vst [vmem:[%s153 + $0x68] sm:%s145] %v206
                %v208 = vld [vmem:[%s152 + $0xd0] sm:%s145]
                %209 = vst [vmem:[%s153 + $0x6c] sm:%s145] %v208
                %v210 = vld [vmem:[%s152 + $0xd4] sm:%s145]
                %211 = vst [vmem:[%s153 + $0x70] sm:%s145] %v210
                %v212 = vld [vmem:[%s152 + $0xd8] sm:%s145]
                %213 = vst [vmem:[%s153 + $0x74] sm:%s145] %v212
                %v214 = vld [vmem:[%s152 + $0xdc] sm:%s145]
                %215 = vst [vmem:[%s153 + $0x78] sm:%s145] %v214
                %v216 = vld [vmem:[%s152 + $0xe0] sm:%s145]
                %217 = vst [vmem:[%s153 + $0x7c] sm:%s145] %v216
                %v218 = vld [vmem:[%s152 + $0xe4] sm:%s145]
                %219 = vst [vmem:[%s153 + $0x80] sm:%s145] %v218
                %v220 = vld [vmem:[%s152 + $0xe8] sm:%s145]
                %221 = vst [vmem:[%s153 + $0x84] sm:%s145] %v220
                %v222 = vld [vmem:[%s152 + $0xec] sm:%s145]
                %223 = vst [vmem:[%s153 + $0x88] sm:%s145] %v222
                %v224 = vld [vmem:[%s152 + $0xf0] sm:%s145]
                %225 = vst [vmem:[%s153 + $0x8c] sm:%s145] %v224
                %v226 = vld [vmem:[%s152 + $0xf4] sm:%s145]
                %227 = vst [vmem:[%s153 + $0x90] sm:%s145] %v226
                %v228 = vld [vmem:[%s152 + $0xf8] sm:%s145]
                %229 = vst [vmem:[%s153 + $0x94] sm:%s145] %v228
                %v230 = vld [vmem:[%s152 + $0xfc] sm:%s145]
                %231 = vst [vmem:[%s153 + $0x98] sm:%s145] %v230
                %v232 = vld [vmem:[%s152 + $0x100] sm:%s145]
                %233 = vst [vmem:[%s153 + $0x9c] sm:%s145] %v232
                %v234 = vld [vmem:[%s152 + $0x104] sm:%s145]
                %235 = vst [vmem:[%s153 + $0xa0] sm:%s145] %v234
                %v236 = vld [vmem:[%s152 + $0x108] sm:%s145]
                %237 = vst [vmem:[%s153 + $0xa4] sm:%s145] %v236
                %v238 = vld [vmem:[%s152 + $0x10c] sm:%s145]
                %239 = vst [vmem:[%s153 + $0xa8] sm:%s145] %v238
                %v240 = vld [vmem:[%s152 + $0x110] sm:%s145]
                %241 = vst [vmem:[%s153 + $0xac] sm:%s145] %v240
                %v242 = vld [vmem:[%s152 + $0x114] sm:%s145]
                %243 = vst [vmem:[%s153 + $0xb0] sm:%s145] %v242
                %v244 = vld [vmem:[%s152 + $0x118] sm:%s145]
                %245 = vst [vmem:[%s153 + $0xb4] sm:%s145] %v244
                %v246 = vld [vmem:[%s152 + $0x11c] sm:%s145]
                %247 = vst [vmem:[%s153 + $0xb8] sm:%s145] %v246
                %v248 = vld [vmem:[%s152 + $0x120] sm:%s145]
                %249 = vst [vmem:[%s153 + $0xbc] sm:%s145] %v248
                %v250 = vld [vmem:[%s152 + $0x124] sm:%s145]
                %251 = vst [vmem:[%s153 + $0xc0] sm:%s145] %v250
                %v252 = vld [vmem:[%s152 + $0x128] sm:%s145]
                %253 = vst [vmem:[%s153 + $0xc4] sm:%s145] %v252
                %v254 = vld [vmem:[%s152 + $0x190] sm:%s145]
                %255 = vst [vmem:[%s153 + $0xc8] sm:%s145] %v254
                %v256 = vld [vmem:[%s152 + $0x194] sm:%s145]
                %257 = vst [vmem:[%s153 + $0xcc] sm:%s145] %v256
                %v258 = vld [vmem:[%s152 + $0x198] sm:%s145]
                %259 = vst [vmem:[%s153 + $0xd0] sm:%s145] %v258
                %v260 = vld [vmem:[%s152 + $0x19c] sm:%s145]
                %261 = vst [vmem:[%s153 + $0xd4] sm:%s145] %v260
                %v262 = vld [vmem:[%s152 + $0x1a0] sm:%s145]
                %263 = vst [vmem:[%s153 + $0xd8] sm:%s145] %v262
                %v264 = vld [vmem:[%s152 + $0x1a4] sm:%s145]
                %265 = vst [vmem:[%s153 + $0xdc] sm:%s145] %v264
                %v266 = vld [vmem:[%s152 + $0x1a8] sm:%s145]
                %267 = vst [vmem:[%s153 + $0xe0] sm:%s145] %v266
                %v268 = vld [vmem:[%s152 + $0x1ac] sm:%s145]
                %269 = vst [vmem:[%s153 + $0xe4] sm:%s145] %v268
                %v270 = vld [vmem:[%s152 + $0x1b0] sm:%s145]
                %271 = vst [vmem:[%s153 + $0xe8] sm:%s145] %v270
                %v272 = vld [vmem:[%s152 + $0x1b4] sm:%s145]
                %273 = vst [vmem:[%s153 + $0xec] sm:%s145] %v272
                %v274 = vld [vmem:[%s152 + $0x1b8] sm:%s145]
                %275 = vst [vmem:[%s153 + $0xf0] sm:%s145] %v274
                %v276 = vld [vmem:[%s152 + $0x1bc] sm:%s145]
                %277 = vst [vmem:[%s153 + $0xf4] sm:%s145] %v276
                %v278 = vld [vmem:[%s152 + $0x1c0] sm:%s145]
                %279 = vst [vmem:[%s153 + $0xf8] sm:%s145] %v278
                %v280 = vld [vmem:[%s152 + $0x1c4] sm:%s145]
                %281 = vst [vmem:[%s153 + $0xfc] sm:%s145] %v280
                %v282 = vld [vmem:[%s152 + $0x1c8] sm:%s145]
                %283 = vst [vmem:[%s153 + $0x100] sm:%s145] %v282
                %v284 = vld [vmem:[%s152 + $0x1cc] sm:%s145]
                %285 = vst [vmem:[%s153 + $0x104] sm:%s145] %v284
                %v286 = vld [vmem:[%s152 + $0x1d0] sm:%s145]
                %287 = vst [vmem:[%s153 + $0x108] sm:%s145] %v286
                %v288 = vld [vmem:[%s152 + $0x1d4] sm:%s145]
                %289 = vst [vmem:[%s153 + $0x10c] sm:%s145] %v288
                %v290 = vld [vmem:[%s152 + $0x1d8] sm:%s145]
                %291 = vst [vmem:[%s153 + $0x110] sm:%s145] %v290
                %v292 = vld [vmem:[%s152 + $0x1dc] sm:%s145]
                %293 = vst [vmem:[%s153 + $0x114] sm:%s145] %v292
                %v294 = vld [vmem:[%s152 + $0x1e0] sm:%s145]
                %295 = vst [vmem:[%s153 + $0x118] sm:%s145] %v294
                %v296 = vld [vmem:[%s152 + $0x1e4] sm:%s145]
                %297 = vst [vmem:[%s153 + $0x11c] sm:%s145] %v296
                %v298 = vld [vmem:[%s152 + $0x1e8] sm:%s145]
                %299 = vst [vmem:[%s153 + $0x120] sm:%s145] %v298
                %v300 = vld [vmem:[%s152 + $0x1ec] sm:%s145]
                %301 = vst [vmem:[%s153 + $0x124] sm:%s145] %v300
                %v302 = vld [vmem:[%s152 + $0x1f0] sm:%s145]
                %303 = vst [vmem:[%s153 + $0x128] sm:%s145] %v302
                %v304 = vld [vmem:[%s152 + $0x258] sm:%s145]
                %305 = vst [vmem:[%s153 + $0x12c] sm:%s145] %v304
                %v306 = vld [vmem:[%s152 + $0x25c] sm:%s145]
                %307 = vst [vmem:[%s153 + $0x130] sm:%s145] %v306
                %v308 = vld [vmem:[%s152 + $0x260] sm:%s145]
                %309 = vst [vmem:[%s153 + $0x134] sm:%s145] %v308
                %v310 = vld [vmem:[%s152 + $0x264] sm:%s145]
                %311 = vst [vmem:[%s153 + $0x138] sm:%s145] %v310
                %v312 = vld [vmem:[%s152 + $0x268] sm:%s145]
                %313 = vst [vmem:[%s153 + $0x13c] sm:%s145] %v312
                %v314 = vld [vmem:[%s152 + $0x26c] sm:%s145]
                %315 = vst [vmem:[%s153 + $0x140] sm:%s145] %v314
                %v316 = vld [vmem:[%s152 + $0x270] sm:%s145]
                %317 = vst [vmem:[%s153 + $0x144] sm:%s145] %v316
                %v318 = vld [vmem:[%s152 + $0x274] sm:%s145]
                %319 = vst [vmem:[%s153 + $0x148] sm:%s145] %v318
                %v320 = vld [vmem:[%s152 + $0x278] sm:%s145]
                %321 = vst [vmem:[%s153 + $0x14c] sm:%s145] %v320
                %v322 = vld [vmem:[%s152 + $0x27c] sm:%s145]
                %323 = vst [vmem:[%s153 + $0x150] sm:%s145] %v322
                %v324 = vld [vmem:[%s152 + $0x280] sm:%s145]
                %325 = vst [vmem:[%s153 + $0x154] sm:%s145] %v324
                %v326 = vld [vmem:[%s152 + $0x284] sm:%s145]
                %327 = vst [vmem:[%s153 + $0x158] sm:%s145] %v326
                %v328 = vld [vmem:[%s152 + $0x288] sm:%s145]
                %329 = vst [vmem:[%s153 + $0x15c] sm:%s145] %v328
                %v330 = vld [vmem:[%s152 + $0x28c] sm:%s145]
                %331 = vst [vmem:[%s153 + $0x160] sm:%s145] %v330
                %v332 = vld [vmem:[%s152 + $0x290] sm:%s145]
                %333 = vst [vmem:[%s153 + $0x164] sm:%s145] %v332
                %v334 = vld [vmem:[%s152 + $0x294] sm:%s145]
                %335 = vst [vmem:[%s153 + $0x168] sm:%s145] %v334
                %v336 = vld [vmem:[%s152 + $0x298] sm:%s145]
                %337 = vst [vmem:[%s153 + $0x16c] sm:%s145] %v336
                %v338 = vld [vmem:[%s152 + $0x29c] sm:%s145]
                %339 = vst [vmem:[%s153 + $0x170] sm:%s145] %v338
                %v340 = vld [vmem:[%s152 + $0x2a0] sm:%s145]
                %341 = vst [vmem:[%s153 + $0x174] sm:%s145] %v340
                %v342 = vld [vmem:[%s152 + $0x2a4] sm:%s145]
                %343 = vst [vmem:[%s153 + $0x178] sm:%s145] %v342
                %v344 = vld [vmem:[%s152 + $0x2a8] sm:%s145]
                %345 = vst [vmem:[%s153 + $0x17c] sm:%s145] %v344
                %v346 = vld [vmem:[%s152 + $0x2ac] sm:%s145]
                %347 = vst [vmem:[%s153 + $0x180] sm:%s145] %v346
                %v348 = vld [vmem:[%s152 + $0x2b0] sm:%s145]
                %349 = vst [vmem:[%s153 + $0x184] sm:%s145] %v348
                %v350 = vld [vmem:[%s152 + $0x2b4] sm:%s145]
                %351 = vst [vmem:[%s153 + $0x188] sm:%s145] %v350
                %v352 = vld [vmem:[%s152 + $0x2b8] sm:%s145]
                %353 = vst [vmem:[%s153 + $0x18c] sm:%s145] %v352
              $region45: #{convnet_forward.3} parent=39 // loop_footer
                %s151 = sadd.s32 1, %s147
              $region46: #{convnet_forward.3} parent=39 // loop_footer_branch
                %146 = sbr.rel target = $region42
              $region47: #{convnet_forward.3} parent=39 // loop_exit
                _
            $region40: #{convnet_forward.3} parent=31 // pred_fallthru
              _
          $region32: #{convnet_forward.3} parent=27 // pred_fallthru
            _
          %574 = vnop
        $region28: #{convnet_forward.3} parent=23 // pred_fallthru
          _
      $region24: #{convnet_forward.3} parent=5 // pred_fallthru
        _
      %p575 = scmp.le.s32.totalorder 1, %s9
      %p576 = scmp.lt.s32.totalorder %s9, 3
      %p577 = pnand %p575, %p576
      %p578 = pneg %p577
      // Predicated region
      $region66: #{convnet_forward.3} parent=5 // pred_check
        _
      $region67: #{convnet_forward.3} parent=5 // pred_check_branch
        %580 = sbr.rel (%p577) target = $region69
      $region68: #{convnet_forward.3} parent=5 // pred_region
        %s581 = ssub.s32 %s9, 1
        %s582 = sand.u32 %s22, 1
        %s583 = sand.u32 %s22, 1
        %s584 = smul.addr %s583, 400
        %s585 = scalar_lea.vmem [#allocation2], %s584
        // Predicated region
        $region70: #{convnet_forward.3} parent=68 // pred_check
          %p586 = pneg %p35
        $region71: #{convnet_forward.3} parent=68 // pred_check_branch
          %588 = sbr.rel (%p586) target = $region73
        $region72: #{convnet_forward.3} parent=68 // pred_region
          _
        $region73: #{convnet_forward.3} parent=68 // pred_fallthru
          _
        %s589 = sand.u32 %s22, 1
        %s590 = sand.u32 %s22, 1
        %s591 = smul.addr %s590, 400
        %s592 = scalar_lea.vmem [#allocation2], %s591
        %p593 = pneg %p35
        %p594 = pneg %p32
        %p595 = pneg %p56
        %p596 = pneg %p53
        %p597 = pneg %p77
        %p598 = pneg %p74
        %p599 = pneg %p103
        %p600 = pneg %p100
        %s601 = smul.u32 25, %s14
        %p602 = scmp.lt.s32.totalorder %s601, 49
        %s603 = scalar_select %p602, %s601, 49
        %s604 = smul.addr %s603, 4
        %s605 = scalar_lea.vmem %s3, %s604
        %s606 = smul.u32 25, %s14
        %s607 = smul.u32 25, %s14
        %p608 = scmp.lt.s32.totalorder %s607, 49
        %s609 = scalar_select %p608, %s607, 49
        %s610 = smul.addr %s609, 4
        %s611 = scalar_lea.vmem %s3, %s610
        %s612 = smul.u32 25, %s14
        %v614 = vld [vmem:[%s1] sm:$0xf]
        %v615 = vld [vmem:[%s1 + $0x4] sm:$0xf]
        %v616 = vld [vmem:[%s1 + $0x8] sm:$0xf]
        %v617 = vld [vmem:[%s1 + $0xc] sm:$0xf]
        %v618 = vld [vmem:[%s1 + $0x10] sm:$0xf]
        %v619 = vld [vmem:[%s1 + $0x14] sm:$0xf]
        %v620 = vld [vmem:[%s1 + $0x18] sm:$0xf]
        %v621 = vld [vmem:[%s1 + $0x1c] sm:$0xf]
        %v622 = vld [vmem:[%s1 + $0x20] sm:$0xf]
        %v623 = vld [vmem:[%s1 + $0x24] sm:$0xf]
        %v624 = vld [vmem:[%s1 + $0x28] sm:$0xf]
        %v625 = vld [vmem:[%s1 + $0x2c] sm:$0xf]
        %v626 = vld [vmem:[%s1 + $0x30] sm:$0xf]
        %v627 = vld [vmem:[%s1 + $0x34] sm:$0xf]
        %v628 = vld [vmem:[%s1 + $0x38] sm:$0xf]
        %v629 = vld [vmem:[%s1 + $0x3c] sm:$0xf]
        %v630 = vld [vmem:[%s585] sm:$0xf]
        %v631 = vld [vmem:[%s585 + $0x4] sm:$0xf]
        %v632 = vld [vmem:[%s585 + $0x8] sm:$0xf]
        %v633 = vld [vmem:[%s585 + $0xc] sm:$0xf]
        %v634 = vld [vmem:[%s585 + $0x10] sm:$0xf]
        %v635 = vld [vmem:[%s585 + $0x14] sm:$0xf]
        %v636 = vld [vmem:[%s585 + $0x18] sm:$0xf]
        %v637 = vld [vmem:[%s585 + $0x1c] sm:$0xf]
        %v638 = vld [vmem:[%s585 + $0x20] sm:$0xf]
        %v639 = vld [vmem:[%s585 + $0x24] sm:$0xf]
        %v640 = vld [vmem:[%s585 + $0x28] sm:$0xf]
        %v641 = vld [vmem:[%s585 + $0x2c] sm:$0xf]
        %v642 = vld [vmem:[%s585 + $0x30] sm:$0xf]
        %v643 = vld [vmem:[%s585 + $0x34] sm:$0xf]
        %v644 = vld [vmem:[%s585 + $0x38] sm:$0xf]
        %v645 = vld [vmem:[%s585 + $0x3c] sm:$0xf]
        %v646 = vld [vmem:[%s585 + $0x40] sm:$0xf]
        %v647 = vld [vmem:[%s585 + $0x44] sm:$0xf]
        %v648 = vld [vmem:[%s585 + $0x48] sm:$0xf]
        %v649 = vld [vmem:[%s585 + $0x4c] sm:$0xf]
        %v650 = vld [vmem:[%s585 + $0x50] sm:$0xf]
        %v651 = vld [vmem:[%s585 + $0x54] sm:$0xf]
        %v652 = vld [vmem:[%s585 + $0x58] sm:$0xf]
        %v653 = vld [vmem:[%s585 + $0x5c] sm:$0xf]
        %v654 = vld [vmem:[%s585 + $0x60] sm:$0xf]
        %v680 = vunpack.c.l.b16 %v630
        %v681 = vunpack.c.l.b16 %v631
        %v682 = vunpack.c.l.b16 %v632
        %v683 = vunpack.c.l.b16 %v633
        %v684 = vunpack.c.l.b16 %v634
        %v685 = vunpack.c.l.b16 %v635
        %v686 = vunpack.c.l.b16 %v636
        %v687 = vunpack.c.l.b16 %v637
        %v688 = vunpack.c.l.b16 %v638
        %v689 = vunpack.c.l.b16 %v639
        %v690 = vunpack.c.l.b16 %v640
        %v691 = vunpack.c.l.b16 %v641
        %v692 = vunpack.c.l.b16 %v642
        %v693 = vunpack.c.l.b16 %v643
        %v694 = vunpack.c.l.b16 %v644
        %v695 = vunpack.c.l.b16 %v645
        %v696 = vunpack.c.l.b16 %v646
        %v697 = vunpack.c.l.b16 %v647
        %v698 = vunpack.c.l.b16 %v648
        %v699 = vunpack.c.l.b16 %v649
        %v700 = vunpack.c.l.b16 %v650
        %v701 = vunpack.c.l.b16 %v651
        %v702 = vunpack.c.l.b16 %v652
        %v703 = vunpack.c.l.b16 %v653
        %v704 = vunpack.c.l.b16 %v654
        %v705 = vpack.c.b16 %v681, %v680
        %v706 = vpack.c.b16 %v683, %v682
        %v707 = vpack.c.b16 %v685, %v684
        %v708 = vpack.c.b16 %v687, %v686
        %v709 = vpack.c.b16 %v689, %v688
        %v710 = vpack.c.b16 %v691, %v690
        %v711 = vpack.c.b16 %v693, %v692
        %v712 = vpack.c.b16 %v695, %v694
        %v713 = vpack.c.b16 %v697, %v696
        %v714 = vpack.c.b16 %v699, %v698
        %v715 = vpack.c.b16 %v701, %v700
        %v716 = vpack.c.b16 %v703, %v702
        %v717 = vpack.c.b16 %v704, %v704
        %v747 = vunpack.c.l.b16 %v614
        %v748 = vunpack.c.l.b16 %v615
        %v749 = vunpack.c.l.b16 %v616
        %v750 = vunpack.c.l.b16 %v617
        %v751 = vunpack.c.l.b16 %v618
        %v752 = vunpack.c.l.b16 %v619
        %v753 = vunpack.c.l.b16 %v620
        %v754 = vunpack.c.l.b16 %v621
        %v755 = vunpack.c.l.b16 %v622
        %v756 = vunpack.c.l.b16 %v623
        %v757 = vunpack.c.l.b16 %v624
        %v758 = vunpack.c.l.b16 %v625
        %v759 = vunpack.c.l.b16 %v626
        %v760 = vunpack.c.l.b16 %v627
        %v761 = vunpack.c.l.b16 %v628
        %v762 = vunpack.c.l.b16 %v629
        %v763 = vpack.c.b16 %v748, %v747
        %v764 = vpack.c.b16 %v750, %v749
        %v765 = vpack.c.b16 %v752, %v751
        %v766 = vpack.c.b16 %v754, %v753
        %v767 = vpack.c.b16 %v756, %v755
        %v768 = vpack.c.b16 %v758, %v757
        %v769 = vpack.c.b16 %v760, %v759
        %v770 = vpack.c.b16 %v762, %v761
        %779 = vmatprep.subr.bf16.mxu0 0
        %780 = vmatpush1.bf16.msra.mxu0 %v770
        %781 = vmatprep.subr.bf16.mxu0 0
        %782 = vmatpush1.bf16.msra.mxu0 %v769
        %783 = vmatprep.subr.bf16.mxu0 0
        %784 = vmatpush1.bf16.msra.mxu0 %v768
        %785 = vmatprep.subr.bf16.mxu0 0
        %786 = vmatpush1.bf16.msra.mxu0 %v767
        %787 = vmatprep.subr.bf16.mxu0 0
        %788 = vmatpush1.bf16.msra.mxu0 %v766
        %789 = vmatprep.subr.bf16.mxu0 0
        %790 = vmatpush1.bf16.msra.mxu0 %v765
        %791 = vmatprep.subr.bf16.mxu0 0
        %792 = vmatpush1.bf16.msra.mxu0 %v764
        %793 = vmatprep.subr.bf16.mxu0 0
        %794 = vmatpush1.bf16.msra.mxu0 %v763
        %795 = vmatprep.subr.bf16.mxu0 0
        %796 = vmatpush2.bf16.msra.mxu0 0
        %797 = vmatprep.subr.bf16.mxu0 0
        %798 = vmatpush2.bf16.msra.mxu0 0
        %799 = vmatprep.subr.bf16.mxu0 0
        %800 = vmatpush2.bf16.msra.mxu0 0
        %801 = vmatprep.subr.bf16.mxu0 0
        %802 = vmatpush2.bf16.msra.mxu0 0
        %803 = vmatprep.subr.bf16.mxu0 0
        %804 = vmatpush2.bf16.msra.mxu0 0
        %805 = vmatprep.subr.bf16.mxu0 0
        %806 = vmatpush2.bf16.msra.mxu0 0
        %807 = vmatprep.subr.bf16.mxu0 0
        %808 = vmatpush2.bf16.msra.mxu0 0
        %809 = vmatprep.subr.bf16.mxu0 0
        %810 = vmatpush2.bf16.msra.mxu0 0
        %811 = vmatprep.mubr.bf16.mxu0 0
        %812 = vmatmul.mubr.bf16.gmra.mxu0 %v705
        %v813 = vpop.f32.mrf.mxu0
        %v814 = vadd.f32 0.0, %v813
        %v815 = vpop.f32.mrf.mxu0
        %v816 = vpop.f32.mrf.mxu0
        %v817 = vadd.f32 0.0, %v816
        %v818 = vpop.f32.mrf.mxu0
        %819 = vmatprep.mubr.bf16.mxu0 0
        %820 = vmatmul.mubr.bf16.gmra.mxu0 %v706
        %v821 = vpop.f32.mrf.mxu0
        %v822 = vadd.f32 0.0, %v821
        %v823 = vpop.f32.mrf.mxu0
        %v824 = vpop.f32.mrf.mxu0
        %v825 = vadd.f32 0.0, %v824
        %v826 = vpop.f32.mrf.mxu0
        %827 = vmatprep.mubr.bf16.mxu0 0
        %828 = vmatmul.mubr.bf16.gmra.mxu0 %v707
        %v829 = vpop.f32.mrf.mxu0
        %v830 = vadd.f32 0.0, %v829
        %v831 = vpop.f32.mrf.mxu0
        %v832 = vpop.f32.mrf.mxu0
        %v833 = vadd.f32 0.0, %v832
        %v834 = vpop.f32.mrf.mxu0
        %835 = vmatprep.mubr.bf16.mxu0 0
        %836 = vmatmul.mubr.bf16.gmra.mxu0 %v708
        %v837 = vpop.f32.mrf.mxu0
        %v838 = vadd.f32 0.0, %v837
        %v839 = vpop.f32.mrf.mxu0
        %v840 = vpop.f32.mrf.mxu0
        %v841 = vadd.f32 0.0, %v840
        %v842 = vpop.f32.mrf.mxu0
        %843 = vmatprep.mubr.bf16.mxu0 0
        %844 = vmatmul.mubr.bf16.gmra.mxu0 %v709
        %v845 = vpop.f32.mrf.mxu0
        %v846 = vadd.f32 0.0, %v845
        %v847 = vpop.f32.mrf.mxu0
        %v848 = vpop.f32.mrf.mxu0
        %v849 = vadd.f32 0.0, %v848
        %v850 = vpop.f32.mrf.mxu0
        %851 = vmatprep.mubr.bf16.mxu0 0
        %852 = vmatmul.mubr.bf16.gmra.mxu0 %v710
        %v853 = vpop.f32.mrf.mxu0
        %v854 = vadd.f32 0.0, %v853
        %v855 = vpop.f32.mrf.mxu0
        %v856 = vpop.f32.mrf.mxu0
        %v857 = vadd.f32 0.0, %v856
        %v858 = vpop.f32.mrf.mxu0
        %859 = vmatprep.mubr.bf16.mxu0 0
        %860 = vmatmul.mubr.bf16.gmra.mxu0 %v711
        %v861 = vpop.f32.mrf.mxu0
        %v862 = vadd.f32 0.0, %v861
        %v863 = vpop.f32.mrf.mxu0
        %v864 = vpop.f32.mrf.mxu0
        %v865 = vadd.f32 0.0, %v864
        %v866 = vpop.f32.mrf.mxu0
        %867 = vmatprep.mubr.bf16.mxu0 0
        %868 = vmatmul.mubr.bf16.gmra.mxu0 %v712
        %v869 = vpop.f32.mrf.mxu0
        %v870 = vadd.f32 0.0, %v869
        %v871 = vpop.f32.mrf.mxu0
        %v872 = vpop.f32.mrf.mxu0
        %v873 = vadd.f32 0.0, %v872
        %v874 = vpop.f32.mrf.mxu0
        %875 = vmatprep.mubr.bf16.mxu0 0
        %876 = vmatmul.mubr.bf16.gmra.mxu0 %v713
        %v877 = vpop.f32.mrf.mxu0
        %v878 = vadd.f32 0.0, %v877
        %v879 = vpop.f32.mrf.mxu0
        %v880 = vpop.f32.mrf.mxu0
        %v881 = vadd.f32 0.0, %v880
        %v882 = vpop.f32.mrf.mxu0
        %883 = vmatprep.mubr.bf16.mxu0 0
        %884 = vmatmul.mubr.bf16.gmra.mxu0 %v714
        %v885 = vpop.f32.mrf.mxu0
        %v886 = vadd.f32 0.0, %v885
        %v887 = vpop.f32.mrf.mxu0
        %v888 = vpop.f32.mrf.mxu0
        %v889 = vadd.f32 0.0, %v888
        %v890 = vpop.f32.mrf.mxu0
        %891 = vmatprep.mubr.bf16.mxu0 0
        %892 = vmatmul.mubr.bf16.gmra.mxu0 %v715
        %v893 = vpop.f32.mrf.mxu0
        %v894 = vadd.f32 0.0, %v893
        %v895 = vpop.f32.mrf.mxu0
        %v896 = vpop.f32.mrf.mxu0
        %v897 = vadd.f32 0.0, %v896
        %v898 = vpop.f32.mrf.mxu0
        %899 = vmatprep.mubr.bf16.mxu0 0
        %900 = vmatmul.mubr.bf16.gmra.mxu0 %v716
        %v901 = vpop.f32.mrf.mxu0
        %v902 = vadd.f32 0.0, %v901
        %v903 = vpop.f32.mrf.mxu0
        %v904 = vpop.f32.mrf.mxu0
        %v905 = vadd.f32 0.0, %v904
        %v906 = vpop.f32.mrf.mxu0
        %907 = vmatprep.mubr.bf16.mxu0 0
        %908 = vmatmul.mubr.bf16.gmra.mxu0 %v717
        %v909 = vpop.f32.mrf.mxu0
        %v910 = vadd.f32 0.0, %v909
        %v911 = vpop.f32.mrf.mxu0
        %v912 = vpop.f32.mrf.mxu0
        %v913 = vpop.f32.mrf.mxu0
        %914 = vdwg.mxu0
        %s915 = scalar_lea.vmem %s585, 100 [#allocation2]
        %v916 = vld [vmem:[%s915] sm:$0xf]
        %v917 = vld [vmem:[%s915 + $0x4] sm:$0xf]
        %v918 = vld [vmem:[%s915 + $0x8] sm:$0xf]
        %v919 = vld [vmem:[%s915 + $0xc] sm:$0xf]
        %v920 = vld [vmem:[%s915 + $0x10] sm:$0xf]
        %v921 = vld [vmem:[%s915 + $0x14] sm:$0xf]
        %v922 = vld [vmem:[%s915 + $0x18] sm:$0xf]
        %v923 = vld [vmem:[%s915 + $0x1c] sm:$0xf]
        %v924 = vld [vmem:[%s915 + $0x20] sm:$0xf]
        %v925 = vld [vmem:[%s915 + $0x24] sm:$0xf]
        %v926 = vld [vmem:[%s915 + $0x28] sm:$0xf]
        %v927 = vld [vmem:[%s915 + $0x2c] sm:$0xf]
        %v928 = vld [vmem:[%s915 + $0x30] sm:$0xf]
        %v929 = vld [vmem:[%s915 + $0x34] sm:$0xf]
        %v930 = vld [vmem:[%s915 + $0x38] sm:$0xf]
        %v931 = vld [vmem:[%s915 + $0x3c] sm:$0xf]
        %v932 = vld [vmem:[%s915 + $0x40] sm:$0xf]
        %v933 = vld [vmem:[%s915 + $0x44] sm:$0xf]
        %v934 = vld [vmem:[%s915 + $0x48] sm:$0xf]
        %v935 = vld [vmem:[%s915 + $0x4c] sm:$0xf]
        %v936 = vld [vmem:[%s915 + $0x50] sm:$0xf]
        %v937 = vld [vmem:[%s915 + $0x54] sm:$0xf]
        %v938 = vld [vmem:[%s915 + $0x58] sm:$0xf]
        %v939 = vld [vmem:[%s915 + $0x5c] sm:$0xf]
        %v940 = vld [vmem:[%s915 + $0x60] sm:$0xf]
        %v966 = vunpack.c.l.b16 %v916
        %v967 = vunpack.c.l.b16 %v917
        %v968 = vunpack.c.l.b16 %v918
        %v969 = vunpack.c.l.b16 %v919
        %v970 = vunpack.c.l.b16 %v920
        %v971 = vunpack.c.l.b16 %v921
        %v972 = vunpack.c.l.b16 %v922
        %v973 = vunpack.c.l.b16 %v923
        %v974 = vunpack.c.l.b16 %v924
        %v975 = vunpack.c.l.b16 %v925
        %v976 = vunpack.c.l.b16 %v926
        %v977 = vunpack.c.l.b16 %v927
        %v978 = vunpack.c.l.b16 %v928
        %v979 = vunpack.c.l.b16 %v929
        %v980 = vunpack.c.l.b16 %v930
        %v981 = vunpack.c.l.b16 %v931
        %v982 = vunpack.c.l.b16 %v932
        %v983 = vunpack.c.l.b16 %v933
        %v984 = vunpack.c.l.b16 %v934
        %v985 = vunpack.c.l.b16 %v935
        %v986 = vunpack.c.l.b16 %v936
        %v987 = vunpack.c.l.b16 %v937
        %v988 = vunpack.c.l.b16 %v938
        %v989 = vunpack.c.l.b16 %v939
        %v990 = vunpack.c.l.b16 %v940
        %v991 = vpack.c.b16 %v967, %v966
        %v992 = vpack.c.b16 %v969, %v968
        %v993 = vpack.c.b16 %v971, %v970
        %v994 = vpack.c.b16 %v973, %v972
        %v995 = vpack.c.b16 %v975, %v974
        %v996 = vpack.c.b16 %v977, %v976
        %v997 = vpack.c.b16 %v979, %v978
        %v998 = vpack.c.b16 %v981, %v980
        %v999 = vpack.c.b16 %v983, %v982
        %v1000 = vpack.c.b16 %v985, %v984
        %v1001 = vpack.c.b16 %v987, %v986
        %v1002 = vpack.c.b16 %v989, %v988
        %v1003 = vpack.c.b16 %v990, %v990
        %1017 = vmatprep.subr.bf16.mxu0 0
        %1018 = vmatpush1.bf16.msra.mxu0 %v770
        %1019 = vmatprep.subr.bf16.mxu0 0
        %1020 = vmatpush1.bf16.msra.mxu0 %v769
        %1021 = vmatprep.subr.bf16.mxu0 0
        %1022 = vmatpush1.bf16.msra.mxu0 %v768
        %1023 = vmatprep.subr.bf16.mxu0 0
        %1024 = vmatpush1.bf16.msra.mxu0 %v767
        %1025 = vmatprep.subr.bf16.mxu0 0
        %1026 = vmatpush1.bf16.msra.mxu0 %v766
        %1027 = vmatprep.subr.bf16.mxu0 0
        %1028 = vmatpush1.bf16.msra.mxu0 %v765
        %1029 = vmatprep.subr.bf16.mxu0 0
        %1030 = vmatpush1.bf16.msra.mxu0 %v764
        %1031 = vmatprep.subr.bf16.mxu0 0
        %1032 = vmatpush1.bf16.msra.mxu0 %v763
        %1033 = vmatprep.subr.bf16.mxu0 0
        %1034 = vmatpush2.bf16.msra.mxu0 0
        %1035 = vmatprep.subr.bf16.mxu0 0
        %1036 = vmatpush2.bf16.msra.mxu0 0
        %1037 = vmatprep.subr.bf16.mxu0 0
        %1038 = vmatpush2.bf16.msra.mxu0 0
        %1039 = vmatprep.subr.bf16.mxu0 0
        %1040 = vmatpush2.bf16.msra.mxu0 0
        %1041 = vmatprep.subr.bf16.mxu0 0
        %1042 = vmatpush2.bf16.msra.mxu0 0
        %1043 = vmatprep.subr.bf16.mxu0 0
        %1044 = vmatpush2.bf16.msra.mxu0 0
        %1045 = vmatprep.subr.bf16.mxu0 0
        %1046 = vmatpush2.bf16.msra.mxu0 0
        %1047 = vmatprep.subr.bf16.mxu0 0
        %1048 = vmatpush2.bf16.msra.mxu0 0
        %1049 = vmatprep.mubr.bf16.mxu0 0
        %1050 = vmatmul.mubr.bf16.gmra.mxu0 %v991
        %v1051 = vpop.f32.mrf.mxu0
        %v1052 = vadd.f32 0.0, %v1051
        %v1053 = vpop.f32.mrf.mxu0
        %v1054 = vpop.f32.mrf.mxu0
        %v1055 = vadd.f32 0.0, %v1054
        %v1056 = vpop.f32.mrf.mxu0
        %1057 = vmatprep.mubr.bf16.mxu0 0
        %1058 = vmatmul.mubr.bf16.gmra.mxu0 %v992
        %v1059 = vpop.f32.mrf.mxu0
        %v1060 = vadd.f32 0.0, %v1059
        %v1061 = vpop.f32.mrf.mxu0
        %v1062 = vpop.f32.mrf.mxu0
        %v1063 = vadd.f32 0.0, %v1062
        %v1064 = vpop.f32.mrf.mxu0
        %1065 = vmatprep.mubr.bf16.mxu0 0
        %1066 = vmatmul.mubr.bf16.gmra.mxu0 %v993
        %v1067 = vpop.f32.mrf.mxu0
        %v1068 = vadd.f32 0.0, %v1067
        %v1069 = vpop.f32.mrf.mxu0
        %v1070 = vpop.f32.mrf.mxu0
        %v1071 = vadd.f32 0.0, %v1070
        %v1072 = vpop.f32.mrf.mxu0
        %1073 = vmatprep.mubr.bf16.mxu0 0
        %1074 = vmatmul.mubr.bf16.gmra.mxu0 %v994
        %v1075 = vpop.f32.mrf.mxu0
        %v1076 = vadd.f32 0.0, %v1075
        %v1077 = vpop.f32.mrf.mxu0
        %v1078 = vpop.f32.mrf.mxu0
        %v1079 = vadd.f32 0.0, %v1078
        %v1080 = vpop.f32.mrf.mxu0
        %1081 = vmatprep.mubr.bf16.mxu0 0
        %1082 = vmatmul.mubr.bf16.gmra.mxu0 %v995
        %v1083 = vpop.f32.mrf.mxu0
        %v1084 = vadd.f32 0.0, %v1083
        %v1085 = vpop.f32.mrf.mxu0
        %v1086 = vpop.f32.mrf.mxu0
        %v1087 = vadd.f32 0.0, %v1086
        %v1088 = vpop.f32.mrf.mxu0
        %1089 = vmatprep.mubr.bf16.mxu0 0
        %1090 = vmatmul.mubr.bf16.gmra.mxu0 %v996
        %v1091 = vpop.f32.mrf.mxu0
        %v1092 = vadd.f32 0.0, %v1091
        %v1093 = vpop.f32.mrf.mxu0
        %v1094 = vpop.f32.mrf.mxu0
        %v1095 = vadd.f32 0.0, %v1094
        %v1096 = vpop.f32.mrf.mxu0
        %1097 = vmatprep.mubr.bf16.mxu0 0
        %1098 = vmatmul.mubr.bf16.gmra.mxu0 %v997
        %v1099 = vpop.f32.mrf.mxu0
        %v1100 = vadd.f32 0.0, %v1099
        %v1101 = vpop.f32.mrf.mxu0
        %v1102 = vpop.f32.mrf.mxu0
        %v1103 = vadd.f32 0.0, %v1102
        %v1104 = vpop.f32.mrf.mxu0
        %1105 = vmatprep.mubr.bf16.mxu0 0
        %1106 = vmatmul.mubr.bf16.gmra.mxu0 %v998
        %v1107 = vpop.f32.mrf.mxu0
        %v1108 = vadd.f32 0.0, %v1107
        %v1109 = vpop.f32.mrf.mxu0
        %v1110 = vpop.f32.mrf.mxu0
        %v1111 = vadd.f32 0.0, %v1110
        %v1112 = vpop.f32.mrf.mxu0
        %1113 = vmatprep.mubr.bf16.mxu0 0
        %1114 = vmatmul.mubr.bf16.gmra.mxu0 %v999
        %v1115 = vpop.f32.mrf.mxu0
        %v1116 = vadd.f32 0.0, %v1115
        %v1117 = vpop.f32.mrf.mxu0
        %v1118 = vpop.f32.mrf.mxu0
        %v1119 = vadd.f32 0.0, %v1118
        %v1120 = vpop.f32.mrf.mxu0
        %1121 = vmatprep.mubr.bf16.mxu0 0
        %1122 = vmatmul.mubr.bf16.gmra.mxu0 %v1000
        %v1123 = vpop.f32.mrf.mxu0
        %v1124 = vadd.f32 0.0, %v1123
        %v1125 = vpop.f32.mrf.mxu0
        %v1126 = vpop.f32.mrf.mxu0
        %v1127 = vadd.f32 0.0, %v1126
        %v1128 = vpop.f32.mrf.mxu0
        %1129 = vmatprep.mubr.bf16.mxu0 0
        %1130 = vmatmul.mubr.bf16.gmra.mxu0 %v1001
        %v1131 = vpop.f32.mrf.mxu0
        %v1132 = vadd.f32 0.0, %v1131
        %v1133 = vpop.f32.mrf.mxu0
        %v1134 = vpop.f32.mrf.mxu0
        %v1135 = vadd.f32 0.0, %v1134
        %v1136 = vpop.f32.mrf.mxu0
        %1137 = vmatprep.mubr.bf16.mxu0 0
        %1138 = vmatmul.mubr.bf16.gmra.mxu0 %v1002
        %v1139 = vpop.f32.mrf.mxu0
        %v1140 = vadd.f32 0.0, %v1139
        %v1141 = vpop.f32.mrf.mxu0
        %v1142 = vpop.f32.mrf.mxu0
        %v1143 = vadd.f32 0.0, %v1142
        %v1144 = vpop.f32.mrf.mxu0
        %1145 = vmatprep.mubr.bf16.mxu0 0
        %1146 = vmatmul.mubr.bf16.gmra.mxu0 %v1003
        %v1147 = vpop.f32.mrf.mxu0
        %v1148 = vadd.f32 0.0, %v1147
        %v1149 = vpop.f32.mrf.mxu0
        %v1150 = vpop.f32.mrf.mxu0
        %v1151 = vpop.f32.mrf.mxu0
        %1152 = vdwg.mxu0
        %v1153 = vmax.f32 %v814, %v1052
        %v1154 = vmax.f32 %v817, %v1055
        %v1155 = vmax.f32 %v822, %v1060
        %v1156 = vmax.f32 %v825, %v1063
        %v1157 = vmax.f32 %v830, %v1068
        %v1158 = vmax.f32 %v833, %v1071
        %v1159 = vmax.f32 %v838, %v1076
        %v1160 = vmax.f32 %v841, %v1079
        %v1161 = vmax.f32 %v846, %v1084
        %v1162 = vmax.f32 %v849, %v1087
        %v1163 = vmax.f32 %v854, %v1092
        %v1164 = vmax.f32 %v857, %v1095
        %v1165 = vmax.f32 %v862, %v1100
        %v1166 = vmax.f32 %v865, %v1103
        %v1167 = vmax.f32 %v870, %v1108
        %v1168 = vmax.f32 %v873, %v1111
        %v1169 = vmax.f32 %v878, %v1116
        %v1170 = vmax.f32 %v881, %v1119
        %v1171 = vmax.f32 %v886, %v1124
        %v1172 = vmax.f32 %v889, %v1127
        %v1173 = vmax.f32 %v894, %v1132
        %v1174 = vmax.f32 %v897, %v1135
        %v1175 = vmax.f32 %v902, %v1140
        %v1176 = vmax.f32 %v905, %v1143
        %v1177 = vmax.f32 %v910, %v1148
        %s1178 = scalar_lea.vmem %s585, 200 [#allocation2]
        %v1179 = vld [vmem:[%s1178] sm:$0xf]
        %v1180 = vld [vmem:[%s1178 + $0x4] sm:$0xf]
        %v1181 = vld [vmem:[%s1178 + $0x8] sm:$0xf]
        %v1182 = vld [vmem:[%s1178 + $0xc] sm:$0xf]
        %v1183 = vld [vmem:[%s1178 + $0x10] sm:$0xf]
        %v1184 = vld [vmem:[%s1178 + $0x14] sm:$0xf]
        %v1185 = vld [vmem:[%s1178 + $0x18] sm:$0xf]
        %v1186 = vld [vmem:[%s1178 + $0x1c] sm:$0xf]
        %v1187 = vld [vmem:[%s1178 + $0x20] sm:$0xf]
        %v1188 = vld [vmem:[%s1178 + $0x24] sm:$0xf]
        %v1189 = vld [vmem:[%s1178 + $0x28] sm:$0xf]
        %v1190 = vld [vmem:[%s1178 + $0x2c] sm:$0xf]
        %v1191 = vld [vmem:[%s1178 + $0x30] sm:$0xf]
        %v1192 = vld [vmem:[%s1178 + $0x34] sm:$0xf]
        %v1193 = vld [vmem:[%s1178 + $0x38] sm:$0xf]
        %v1194 = vld [vmem:[%s1178 + $0x3c] sm:$0xf]
        %v1195 = vld [vmem:[%s1178 + $0x40] sm:$0xf]
        %v1196 = vld [vmem:[%s1178 + $0x44] sm:$0xf]
        %v1197 = vld [vmem:[%s1178 + $0x48] sm:$0xf]
        %v1198 = vld [vmem:[%s1178 + $0x4c] sm:$0xf]
        %v1199 = vld [vmem:[%s1178 + $0x50] sm:$0xf]
        %v1200 = vld [vmem:[%s1178 + $0x54] sm:$0xf]
        %v1201 = vld [vmem:[%s1178 + $0x58] sm:$0xf]
        %v1202 = vld [vmem:[%s1178 + $0x5c] sm:$0xf]
        %v1203 = vld [vmem:[%s1178 + $0x60] sm:$0xf]
        %v1229 = vunpack.c.l.b16 %v1179
        %v1230 = vunpack.c.l.b16 %v1180
        %v1231 = vunpack.c.l.b16 %v1181
        %v1232 = vunpack.c.l.b16 %v1182
        %v1233 = vunpack.c.l.b16 %v1183
        %v1234 = vunpack.c.l.b16 %v1184
        %v1235 = vunpack.c.l.b16 %v1185
        %v1236 = vunpack.c.l.b16 %v1186
        %v1237 = vunpack.c.l.b16 %v1187
        %v1238 = vunpack.c.l.b16 %v1188
        %v1239 = vunpack.c.l.b16 %v1189
        %v1240 = vunpack.c.l.b16 %v1190
        %v1241 = vunpack.c.l.b16 %v1191
        %v1242 = vunpack.c.l.b16 %v1192
        %v1243 = vunpack.c.l.b16 %v1193
        %v1244 = vunpack.c.l.b16 %v1194
        %v1245 = vunpack.c.l.b16 %v1195
        %v1246 = vunpack.c.l.b16 %v1196
        %v1247 = vunpack.c.l.b16 %v1197
        %v1248 = vunpack.c.l.b16 %v1198
        %v1249 = vunpack.c.l.b16 %v1199
        %v1250 = vunpack.c.l.b16 %v1200
        %v1251 = vunpack.c.l.b16 %v1201
        %v1252 = vunpack.c.l.b16 %v1202
        %v1253 = vunpack.c.l.b16 %v1203
        %v1254 = vpack.c.b16 %v1230, %v1229
        %v1255 = vpack.c.b16 %v1232, %v1231
        %v1256 = vpack.c.b16 %v1234, %v1233
        %v1257 = vpack.c.b16 %v1236, %v1235
        %v1258 = vpack.c.b16 %v1238, %v1237
        %v1259 = vpack.c.b16 %v1240, %v1239
        %v1260 = vpack.c.b16 %v1242, %v1241
        %v1261 = vpack.c.b16 %v1244, %v1243
        %v1262 = vpack.c.b16 %v1246, %v1245
        %v1263 = vpack.c.b16 %v1248, %v1247
        %v1264 = vpack.c.b16 %v1250, %v1249
        %v1265 = vpack.c.b16 %v1252, %v1251
        %v1266 = vpack.c.b16 %v1253, %v1253
        %1280 = vmatprep.subr.bf16.mxu0 0
        %1281 = vmatpush1.bf16.msra.mxu0 %v770
        %1282 = vmatprep.subr.bf16.mxu0 0
        %1283 = vmatpush1.bf16.msra.mxu0 %v769
        %1284 = vmatprep.subr.bf16.mxu0 0
        %1285 = vmatpush1.bf16.msra.mxu0 %v768
        %1286 = vmatprep.subr.bf16.mxu0 0
        %1287 = vmatpush1.bf16.msra.mxu0 %v767
        %1288 = vmatprep.subr.bf16.mxu0 0
        %1289 = vmatpush1.bf16.msra.mxu0 %v766
        %1290 = vmatprep.subr.bf16.mxu0 0
        %1291 = vmatpush1.bf16.msra.mxu0 %v765
        %1292 = vmatprep.subr.bf16.mxu0 0
        %1293 = vmatpush1.bf16.msra.mxu0 %v764
        %1294 = vmatprep.subr.bf16.mxu0 0
        %1295 = vmatpush1.bf16.msra.mxu0 %v763
        %1296 = vmatprep.subr.bf16.mxu0 0
        %1297 = vmatpush2.bf16.msra.mxu0 0
        %1298 = vmatprep.subr.bf16.mxu0 0
        %1299 = vmatpush2.bf16.msra.mxu0 0
        %1300 = vmatprep.subr.bf16.mxu0 0
        %1301 = vmatpush2.bf16.msra.mxu0 0
        %1302 = vmatprep.subr.bf16.mxu0 0
        %1303 = vmatpush2.bf16.msra.mxu0 0
        %1304 = vmatprep.subr.bf16.mxu0 0
        %1305 = vmatpush2.bf16.msra.mxu0 0
        %1306 = vmatprep.subr.bf16.mxu0 0
        %1307 = vmatpush2.bf16.msra.mxu0 0
        %1308 = vmatprep.subr.bf16.mxu0 0
        %1309 = vmatpush2.bf16.msra.mxu0 0
        %1310 = vmatprep.subr.bf16.mxu0 0
        %1311 = vmatpush2.bf16.msra.mxu0 0
        %1312 = vmatprep.mubr.bf16.mxu0 0
        %1313 = vmatmul.mubr.bf16.gmra.mxu0 %v1254
        %v1314 = vpop.f32.mrf.mxu0
        %v1315 = vadd.f32 0.0, %v1314
        %v1316 = vpop.f32.mrf.mxu0
        %v1317 = vpop.f32.mrf.mxu0
        %v1318 = vadd.f32 0.0, %v1317
        %v1319 = vpop.f32.mrf.mxu0
        %1320 = vmatprep.mubr.bf16.mxu0 0
        %1321 = vmatmul.mubr.bf16.gmra.mxu0 %v1255
        %v1322 = vpop.f32.mrf.mxu0
        %v1323 = vadd.f32 0.0, %v1322
        %v1324 = vpop.f32.mrf.mxu0
        %v1325 = vpop.f32.mrf.mxu0
        %v1326 = vadd.f32 0.0, %v1325
        %v1327 = vpop.f32.mrf.mxu0
        %1328 = vmatprep.mubr.bf16.mxu0 0
        %1329 = vmatmul.mubr.bf16.gmra.mxu0 %v1256
        %v1330 = vpop.f32.mrf.mxu0
        %v1331 = vadd.f32 0.0, %v1330
        %v1332 = vpop.f32.mrf.mxu0
        %v1333 = vpop.f32.mrf.mxu0
        %v1334 = vadd.f32 0.0, %v1333
        %v1335 = vpop.f32.mrf.mxu0
        %1336 = vmatprep.mubr.bf16.mxu0 0
        %1337 = vmatmul.mubr.bf16.gmra.mxu0 %v1257
        %v1338 = vpop.f32.mrf.mxu0
        %v1339 = vadd.f32 0.0, %v1338
        %v1340 = vpop.f32.mrf.mxu0
        %v1341 = vpop.f32.mrf.mxu0
        %v1342 = vadd.f32 0.0, %v1341
        %v1343 = vpop.f32.mrf.mxu0
        %1344 = vmatprep.mubr.bf16.mxu0 0
        %1345 = vmatmul.mubr.bf16.gmra.mxu0 %v1258
        %v1346 = vpop.f32.mrf.mxu0
        %v1347 = vadd.f32 0.0, %v1346
        %v1348 = vpop.f32.mrf.mxu0
        %v1349 = vpop.f32.mrf.mxu0
        %v1350 = vadd.f32 0.0, %v1349
        %v1351 = vpop.f32.mrf.mxu0
        %1352 = vmatprep.mubr.bf16.mxu0 0
        %1353 = vmatmul.mubr.bf16.gmra.mxu0 %v1259
        %v1354 = vpop.f32.mrf.mxu0
        %v1355 = vadd.f32 0.0, %v1354
        %v1356 = vpop.f32.mrf.mxu0
        %v1357 = vpop.f32.mrf.mxu0
        %v1358 = vadd.f32 0.0, %v1357
        %v1359 = vpop.f32.mrf.mxu0
        %1360 = vmatprep.mubr.bf16.mxu0 0
        %1361 = vmatmul.mubr.bf16.gmra.mxu0 %v1260
        %v1362 = vpop.f32.mrf.mxu0
        %v1363 = vadd.f32 0.0, %v1362
        %v1364 = vpop.f32.mrf.mxu0
        %v1365 = vpop.f32.mrf.mxu0
        %v1366 = vadd.f32 0.0, %v1365
        %v1367 = vpop.f32.mrf.mxu0
        %1368 = vmatprep.mubr.bf16.mxu0 0
        %1369 = vmatmul.mubr.bf16.gmra.mxu0 %v1261
        %v1370 = vpop.f32.mrf.mxu0
        %v1371 = vadd.f32 0.0, %v1370
        %v1372 = vpop.f32.mrf.mxu0
        %v1373 = vpop.f32.mrf.mxu0
        %v1374 = vadd.f32 0.0, %v1373
        %v1375 = vpop.f32.mrf.mxu0
        %1376 = vmatprep.mubr.bf16.mxu0 0
        %1377 = vmatmul.mubr.bf16.gmra.mxu0 %v1262
        %v1378 = vpop.f32.mrf.mxu0
        %v1379 = vadd.f32 0.0, %v1378
        %v1380 = vpop.f32.mrf.mxu0
        %v1381 = vpop.f32.mrf.mxu0
        %v1382 = vadd.f32 0.0, %v1381
        %v1383 = vpop.f32.mrf.mxu0
        %1384 = vmatprep.mubr.bf16.mxu0 0
        %1385 = vmatmul.mubr.bf16.gmra.mxu0 %v1263
        %v1386 = vpop.f32.mrf.mxu0
        %v1387 = vadd.f32 0.0, %v1386
        %v1388 = vpop.f32.mrf.mxu0
        %v1389 = vpop.f32.mrf.mxu0
        %v1390 = vadd.f32 0.0, %v1389
        %v1391 = vpop.f32.mrf.mxu0
        %1392 = vmatprep.mubr.bf16.mxu0 0
        %1393 = vmatmul.mubr.bf16.gmra.mxu0 %v1264
        %v1394 = vpop.f32.mrf.mxu0
        %v1395 = vadd.f32 0.0, %v1394
        %v1396 = vpop.f32.mrf.mxu0
        %v1397 = vpop.f32.mrf.mxu0
        %v1398 = vadd.f32 0.0, %v1397
        %v1399 = vpop.f32.mrf.mxu0
        %1400 = vmatprep.mubr.bf16.mxu0 0
        %1401 = vmatmul.mubr.bf16.gmra.mxu0 %v1265
        %v1402 = vpop.f32.mrf.mxu0
        %v1403 = vadd.f32 0.0, %v1402
        %v1404 = vpop.f32.mrf.mxu0
        %v1405 = vpop.f32.mrf.mxu0
        %v1406 = vadd.f32 0.0, %v1405
        %v1407 = vpop.f32.mrf.mxu0
        %1408 = vmatprep.mubr.bf16.mxu0 0
        %1409 = vmatmul.mubr.bf16.gmra.mxu0 %v1266
        %v1410 = vpop.f32.mrf.mxu0
        %v1411 = vadd.f32 0.0, %v1410
        %v1412 = vpop.f32.mrf.mxu0
        %v1413 = vpop.f32.mrf.mxu0
        %v1414 = vpop.f32.mrf.mxu0
        %1415 = vdwg.mxu0
        %v1416 = vmax.f32 %v1153, %v1315
        %v1417 = vmax.f32 %v1154, %v1318
        %v1418 = vmax.f32 %v1155, %v1323
        %v1419 = vmax.f32 %v1156, %v1326
        %v1420 = vmax.f32 %v1157, %v1331
        %v1421 = vmax.f32 %v1158, %v1334
        %v1422 = vmax.f32 %v1159, %v1339
        %v1423 = vmax.f32 %v1160, %v1342
        %v1424 = vmax.f32 %v1161, %v1347
        %v1425 = vmax.f32 %v1162, %v1350
        %v1426 = vmax.f32 %v1163, %v1355
        %v1427 = vmax.f32 %v1164, %v1358
        %v1428 = vmax.f32 %v1165, %v1363
        %v1429 = vmax.f32 %v1166, %v1366
        %v1430 = vmax.f32 %v1167, %v1371
        %v1431 = vmax.f32 %v1168, %v1374
        %v1432 = vmax.f32 %v1169, %v1379
        %v1433 = vmax.f32 %v1170, %v1382
        %v1434 = vmax.f32 %v1171, %v1387
        %v1435 = vmax.f32 %v1172, %v1390
        %v1436 = vmax.f32 %v1173, %v1395
        %v1437 = vmax.f32 %v1174, %v1398
        %v1438 = vmax.f32 %v1175, %v1403
        %v1439 = vmax.f32 %v1176, %v1406
        %v1440 = vmax.f32 %v1177, %v1411
        %s1441 = scalar_lea.vmem %s585, 300 [#allocation2]
        %v1442 = vld [vmem:[%s1441] sm:$0xf]
        %v1443 = vld [vmem:[%s1441 + $0x4] sm:$0xf]
        %v1444 = vld [vmem:[%s1441 + $0x8] sm:$0xf]
        %v1445 = vld [vmem:[%s1441 + $0xc] sm:$0xf]
        %v1446 = vld [vmem:[%s1441 + $0x10] sm:$0xf]
        %v1447 = vld [vmem:[%s1441 + $0x14] sm:$0xf]
        %v1448 = vld [vmem:[%s1441 + $0x18] sm:$0xf]
        %v1449 = vld [vmem:[%s1441 + $0x1c] sm:$0xf]
        %v1450 = vld [vmem:[%s1441 + $0x20] sm:$0xf]
        %v1451 = vld [vmem:[%s1441 + $0x24] sm:$0xf]
        %v1452 = vld [vmem:[%s1441 + $0x28] sm:$0xf]
        %v1453 = vld [vmem:[%s1441 + $0x2c] sm:$0xf]
        %v1454 = vld [vmem:[%s1441 + $0x30] sm:$0xf]
        %v1455 = vld [vmem:[%s1441 + $0x34] sm:$0xf]
        %v1456 = vld [vmem:[%s1441 + $0x38] sm:$0xf]
        %v1457 = vld [vmem:[%s1441 + $0x3c] sm:$0xf]
        %v1458 = vld [vmem:[%s1441 + $0x40] sm:$0xf]
        %v1459 = vld [vmem:[%s1441 + $0x44] sm:$0xf]
        %v1460 = vld [vmem:[%s1441 + $0x48] sm:$0xf]
        %v1461 = vld [vmem:[%s1441 + $0x4c] sm:$0xf]
        %v1462 = vld [vmem:[%s1441 + $0x50] sm:$0xf]
        %v1463 = vld [vmem:[%s1441 + $0x54] sm:$0xf]
        %v1464 = vld [vmem:[%s1441 + $0x58] sm:$0xf]
        %v1465 = vld [vmem:[%s1441 + $0x5c] sm:$0xf]
        %v1466 = vld [vmem:[%s1441 + $0x60] sm:$0xf]
        %v1492 = vunpack.c.l.b16 %v1442
        %v1493 = vunpack.c.l.b16 %v1443
        %v1494 = vunpack.c.l.b16 %v1444
        %v1495 = vunpack.c.l.b16 %v1445
        %v1496 = vunpack.c.l.b16 %v1446
        %v1497 = vunpack.c.l.b16 %v1447
        %v1498 = vunpack.c.l.b16 %v1448
        %v1499 = vunpack.c.l.b16 %v1449
        %v1500 = vunpack.c.l.b16 %v1450
        %v1501 = vunpack.c.l.b16 %v1451
        %v1502 = vunpack.c.l.b16 %v1452
        %v1503 = vunpack.c.l.b16 %v1453
        %v1504 = vunpack.c.l.b16 %v1454
        %v1505 = vunpack.c.l.b16 %v1455
        %v1506 = vunpack.c.l.b16 %v1456
        %v1507 = vunpack.c.l.b16 %v1457
        %v1508 = vunpack.c.l.b16 %v1458
        %v1509 = vunpack.c.l.b16 %v1459
        %v1510 = vunpack.c.l.b16 %v1460
        %v1511 = vunpack.c.l.b16 %v1461
        %v1512 = vunpack.c.l.b16 %v1462
        %v1513 = vunpack.c.l.b16 %v1463
        %v1514 = vunpack.c.l.b16 %v1464
        %v1515 = vunpack.c.l.b16 %v1465
        %v1516 = vunpack.c.l.b16 %v1466
        %v1517 = vpack.c.b16 %v1493, %v1492
        %v1518 = vpack.c.b16 %v1495, %v1494
        %v1519 = vpack.c.b16 %v1497, %v1496
        %v1520 = vpack.c.b16 %v1499, %v1498
        %v1521 = vpack.c.b16 %v1501, %v1500
        %v1522 = vpack.c.b16 %v1503, %v1502
        %v1523 = vpack.c.b16 %v1505, %v1504
        %v1524 = vpack.c.b16 %v1507, %v1506
        %v1525 = vpack.c.b16 %v1509, %v1508
        %v1526 = vpack.c.b16 %v1511, %v1510
        %v1527 = vpack.c.b16 %v1513, %v1512
        %v1528 = vpack.c.b16 %v1515, %v1514
        %v1529 = vpack.c.b16 %v1516, %v1516
        %1543 = vmatprep.subr.bf16.mxu0 0
        %1544 = vmatpush1.bf16.msra.mxu0 %v770
        %1545 = vmatprep.subr.bf16.mxu0 0
        %1546 = vmatpush1.bf16.msra.mxu0 %v769
        %1547 = vmatprep.subr.bf16.mxu0 0
        %1548 = vmatpush1.bf16.msra.mxu0 %v768
        %1549 = vmatprep.subr.bf16.mxu0 0
        %1550 = vmatpush1.bf16.msra.mxu0 %v767
        %1551 = vmatprep.subr.bf16.mxu0 0
        %1552 = vmatpush1.bf16.msra.mxu0 %v766
        %1553 = vmatprep.subr.bf16.mxu0 0
        %1554 = vmatpush1.bf16.msra.mxu0 %v765
        %1555 = vmatprep.subr.bf16.mxu0 0
        %1556 = vmatpush1.bf16.msra.mxu0 %v764
        %1557 = vmatprep.subr.bf16.mxu0 0
        %1558 = vmatpush1.bf16.msra.mxu0 %v763
        %1559 = vmatprep.subr.bf16.mxu0 0
        %1560 = vmatpush2.bf16.msra.mxu0 0
        %1561 = vmatprep.subr.bf16.mxu0 0
        %1562 = vmatpush2.bf16.msra.mxu0 0
        %1563 = vmatprep.subr.bf16.mxu0 0
        %1564 = vmatpush2.bf16.msra.mxu0 0
        %1565 = vmatprep.subr.bf16.mxu0 0
        %1566 = vmatpush2.bf16.msra.mxu0 0
        %1567 = vmatprep.subr.bf16.mxu0 0
        %1568 = vmatpush2.bf16.msra.mxu0 0
        %1569 = vmatprep.subr.bf16.mxu0 0
        %1570 = vmatpush2.bf16.msra.mxu0 0
        %1571 = vmatprep.subr.bf16.mxu0 0
        %1572 = vmatpush2.bf16.msra.mxu0 0
        %1573 = vmatprep.subr.bf16.mxu0 0
        %1574 = vmatpush2.bf16.msra.mxu0 0
        %1575 = vmatprep.mubr.bf16.mxu0 0
        %1576 = vmatmul.mubr.bf16.gmra.mxu0 %v1517
        %v1577 = vpop.f32.mrf.mxu0
        %v1578 = vadd.f32 0.0, %v1577
        %v1579 = vpop.f32.mrf.mxu0
        %v1580 = vpop.f32.mrf.mxu0
        %v1581 = vadd.f32 0.0, %v1580
        %v1582 = vpop.f32.mrf.mxu0
        %1583 = vmatprep.mubr.bf16.mxu0 0
        %1584 = vmatmul.mubr.bf16.gmra.mxu0 %v1518
        %v1585 = vpop.f32.mrf.mxu0
        %v1586 = vadd.f32 0.0, %v1585
        %v1587 = vpop.f32.mrf.mxu0
        %v1588 = vpop.f32.mrf.mxu0
        %v1589 = vadd.f32 0.0, %v1588
        %v1590 = vpop.f32.mrf.mxu0
        %1591 = vmatprep.mubr.bf16.mxu0 0
        %1592 = vmatmul.mubr.bf16.gmra.mxu0 %v1519
        %v1593 = vpop.f32.mrf.mxu0
        %v1594 = vadd.f32 0.0, %v1593
        %v1595 = vpop.f32.mrf.mxu0
        %v1596 = vpop.f32.mrf.mxu0
        %v1597 = vadd.f32 0.0, %v1596
        %v1598 = vpop.f32.mrf.mxu0
        %1599 = vmatprep.mubr.bf16.mxu0 0
        %1600 = vmatmul.mubr.bf16.gmra.mxu0 %v1520
        %v1601 = vpop.f32.mrf.mxu0
        %v1602 = vadd.f32 0.0, %v1601
        %v1603 = vpop.f32.mrf.mxu0
        %v1604 = vpop.f32.mrf.mxu0
        %v1605 = vadd.f32 0.0, %v1604
        %v1606 = vpop.f32.mrf.mxu0
        %1607 = vmatprep.mubr.bf16.mxu0 0
        %1608 = vmatmul.mubr.bf16.gmra.mxu0 %v1521
        %v1609 = vpop.f32.mrf.mxu0
        %v1610 = vadd.f32 0.0, %v1609
        %v1611 = vpop.f32.mrf.mxu0
        %v1612 = vpop.f32.mrf.mxu0
        %v1613 = vadd.f32 0.0, %v1612
        %v1614 = vpop.f32.mrf.mxu0
        %1615 = vmatprep.mubr.bf16.mxu0 0
        %1616 = vmatmul.mubr.bf16.gmra.mxu0 %v1522
        %v1617 = vpop.f32.mrf.mxu0
        %v1618 = vadd.f32 0.0, %v1617
        %v1619 = vpop.f32.mrf.mxu0
        %v1620 = vpop.f32.mrf.mxu0
        %v1621 = vadd.f32 0.0, %v1620
        %v1622 = vpop.f32.mrf.mxu0
        %1623 = vmatprep.mubr.bf16.mxu0 0
        %1624 = vmatmul.mubr.bf16.gmra.mxu0 %v1523
        %v1625 = vpop.f32.mrf.mxu0
        %v1626 = vadd.f32 0.0, %v1625
        %v1627 = vpop.f32.mrf.mxu0
        %v1628 = vpop.f32.mrf.mxu0
        %v1629 = vadd.f32 0.0, %v1628
        %v1630 = vpop.f32.mrf.mxu0
        %1631 = vmatprep.mubr.bf16.mxu0 0
        %1632 = vmatmul.mubr.bf16.gmra.mxu0 %v1524
        %v1633 = vpop.f32.mrf.mxu0
        %v1634 = vadd.f32 0.0, %v1633
        %v1635 = vpop.f32.mrf.mxu0
        %v1636 = vpop.f32.mrf.mxu0
        %v1637 = vadd.f32 0.0, %v1636
        %v1638 = vpop.f32.mrf.mxu0
        %1639 = vmatprep.mubr.bf16.mxu0 0
        %1640 = vmatmul.mubr.bf16.gmra.mxu0 %v1525
        %v1641 = vpop.f32.mrf.mxu0
        %v1642 = vadd.f32 0.0, %v1641
        %v1643 = vpop.f32.mrf.mxu0
        %v1644 = vpop.f32.mrf.mxu0
        %v1645 = vadd.f32 0.0, %v1644
        %v1646 = vpop.f32.mrf.mxu0
        %1647 = vmatprep.mubr.bf16.mxu0 0
        %1648 = vmatmul.mubr.bf16.gmra.mxu0 %v1526
        %v1649 = vpop.f32.mrf.mxu0
        %v1650 = vadd.f32 0.0, %v1649
        %v1651 = vpop.f32.mrf.mxu0
        %v1652 = vpop.f32.mrf.mxu0
        %v1653 = vadd.f32 0.0, %v1652
        %v1654 = vpop.f32.mrf.mxu0
        %1655 = vmatprep.mubr.bf16.mxu0 0
        %1656 = vmatmul.mubr.bf16.gmra.mxu0 %v1527
        %v1657 = vpop.f32.mrf.mxu0
        %v1658 = vadd.f32 0.0, %v1657
        %v1659 = vpop.f32.mrf.mxu0
        %v1660 = vpop.f32.mrf.mxu0
        %v1661 = vadd.f32 0.0, %v1660
        %v1662 = vpop.f32.mrf.mxu0
        %1663 = vmatprep.mubr.bf16.mxu0 0
        %1664 = vmatmul.mubr.bf16.gmra.mxu0 %v1528
        %v1665 = vpop.f32.mrf.mxu0
        %v1666 = vadd.f32 0.0, %v1665
        %v1667 = vpop.f32.mrf.mxu0
        %v1668 = vpop.f32.mrf.mxu0
        %v1669 = vadd.f32 0.0, %v1668
        %v1670 = vpop.f32.mrf.mxu0
        %1671 = vmatprep.mubr.bf16.mxu0 0
        %1672 = vmatmul.mubr.bf16.gmra.mxu0 %v1529
        %v1673 = vpop.f32.mrf.mxu0
        %v1674 = vadd.f32 0.0, %v1673
        %v1675 = vpop.f32.mrf.mxu0
        %v1676 = vpop.f32.mrf.mxu0
        %v1677 = vpop.f32.mrf.mxu0
        %1678 = vdwg.mxu0
        %v1679 = vmax.f32 %v1416, %v1578
        %v1680 = vmax.f32 %v1417, %v1581
        %v1681 = vmax.f32 %v1418, %v1586
        %v1682 = vmax.f32 %v1419, %v1589
        %v1683 = vmax.f32 %v1420, %v1594
        %v1684 = vmax.f32 %v1421, %v1597
        %v1685 = vmax.f32 %v1422, %v1602
        %v1686 = vmax.f32 %v1423, %v1605
        %v1687 = vmax.f32 %v1424, %v1610
        %v1688 = vmax.f32 %v1425, %v1613
        %v1689 = vmax.f32 %v1426, %v1618
        %v1690 = vmax.f32 %v1427, %v1621
        %v1691 = vmax.f32 %v1428, %v1626
        %v1692 = vmax.f32 %v1429, %v1629
        %v1693 = vmax.f32 %v1430, %v1634
        %v1694 = vmax.f32 %v1431, %v1637
        %v1695 = vmax.f32 %v1432, %v1642
        %v1696 = vmax.f32 %v1433, %v1645
        %v1697 = vmax.f32 %v1434, %v1650
        %v1698 = vmax.f32 %v1435, %v1653
        %v1699 = vmax.f32 %v1436, %v1658
        %v1700 = vmax.f32 %v1437, %v1661
        %v1701 = vmax.f32 %v1438, %v1666
        %v1702 = vmax.f32 %v1439, %v1669
        %v1703 = vmax.f32 %v1440, %v1674
        %v1704 = vld [vmem:[%s2] sm:$0x1]
        %v1706 = vlaneseq
        %v1707 = vshrl.u32 %v1706, 7
        %v1708 = vsub.s32 0, %v1707
        %v1709 = vrot.slane %v1704, %v1708
        %v1711 = vadd.f32 %v1679, %v1709
        %v1712 = vadd.f32 %v1680, %v1709
        %v1713 = vadd.f32 %v1681, %v1709
        %v1714 = vadd.f32 %v1682, %v1709
        %v1715 = vadd.f32 %v1683, %v1709
        %v1716 = vadd.f32 %v1684, %v1709
        %v1717 = vadd.f32 %v1685, %v1709
        %v1718 = vadd.f32 %v1686, %v1709
        %v1719 = vadd.f32 %v1687, %v1709
        %v1720 = vadd.f32 %v1688, %v1709
        %v1721 = vadd.f32 %v1689, %v1709
        %v1722 = vadd.f32 %v1690, %v1709
        %v1723 = vadd.f32 %v1691, %v1709
        %v1724 = vadd.f32 %v1692, %v1709
        %v1725 = vadd.f32 %v1693, %v1709
        %v1726 = vadd.f32 %v1694, %v1709
        %v1727 = vadd.f32 %v1695, %v1709
        %v1728 = vadd.f32 %v1696, %v1709
        %v1729 = vadd.f32 %v1697, %v1709
        %v1730 = vadd.f32 %v1698, %v1709
        %v1731 = vadd.f32 %v1699, %v1709
        %v1732 = vadd.f32 %v1700, %v1709
        %v1733 = vadd.f32 %v1701, %v1709
        %v1734 = vadd.f32 %v1702, %v1709
        %v1735 = vadd.f32 %v1703, %v1709
        %v1736 = vmax.f32 %v1711, 0.0
        %v1737 = vmax.f32 %v1712, 0.0
        %v1738 = vmax.f32 %v1713, 0.0
        %v1739 = vmax.f32 %v1714, 0.0
        %v1740 = vmax.f32 %v1715, 0.0
        %v1741 = vmax.f32 %v1716, 0.0
        %v1742 = vmax.f32 %v1717, 0.0
        %v1743 = vmax.f32 %v1718, 0.0
        %v1744 = vmax.f32 %v1719, 0.0
        %v1745 = vmax.f32 %v1720, 0.0
        %v1746 = vmax.f32 %v1721, 0.0
        %v1747 = vmax.f32 %v1722, 0.0
        %v1748 = vmax.f32 %v1723, 0.0
        %v1749 = vmax.f32 %v1724, 0.0
        %v1750 = vmax.f32 %v1725, 0.0
        %v1751 = vmax.f32 %v1726, 0.0
        %v1752 = vmax.f32 %v1727, 0.0
        %v1753 = vmax.f32 %v1728, 0.0
        %v1754 = vmax.f32 %v1729, 0.0
        %v1755 = vmax.f32 %v1730, 0.0
        %v1756 = vmax.f32 %v1731, 0.0
        %v1757 = vmax.f32 %v1732, 0.0
        %v1758 = vmax.f32 %v1733, 0.0
        %v1759 = vmax.f32 %v1734, 0.0
        %v1760 = vmax.f32 %v1735, 0.0
        %v1761 = vpack.c.bf16 %v1737, %v1736
        %v1762 = vpack.c.bf16 %v1739, %v1738
        %v1763 = vpack.c.bf16 %v1741, %v1740
        %v1764 = vpack.c.bf16 %v1743, %v1742
        %v1765 = vpack.c.bf16 %v1745, %v1744
        %v1766 = vpack.c.bf16 %v1747, %v1746
        %v1767 = vpack.c.bf16 %v1749, %v1748
        %v1768 = vpack.c.bf16 %v1751, %v1750
        %v1769 = vpack.c.bf16 %v1753, %v1752
        %v1770 = vpack.c.bf16 %v1755, %v1754
        %v1771 = vpack.c.bf16 %v1757, %v1756
        %v1772 = vpack.c.bf16 %v1759, %v1758
        %v1773 = vpack.c.bf16 %v1760, %v1760
        %v1787 = vunpack.c.l.b16 %v1761
        %v1788 = vunpack.c.h.b16 %v1761
        %v1789 = vunpack.c.l.b16 %v1762
        %v1790 = vunpack.c.h.b16 %v1762
        %v1791 = vunpack.c.l.b16 %v1763
        %v1792 = vunpack.c.h.b16 %v1763
        %v1793 = vunpack.c.l.b16 %v1764
        %v1794 = vunpack.c.h.b16 %v1764
        %v1795 = vunpack.c.l.b16 %v1765
        %v1796 = vunpack.c.h.b16 %v1765
        %v1797 = vunpack.c.l.b16 %v1766
        %v1798 = vunpack.c.h.b16 %v1766
        %v1799 = vunpack.c.l.b16 %v1767
        %v1800 = vunpack.c.h.b16 %v1767
        %v1801 = vunpack.c.l.b16 %v1768
        %v1802 = vunpack.c.h.b16 %v1768
        %v1803 = vunpack.c.l.b16 %v1769
        %v1804 = vunpack.c.h.b16 %v1769
        %v1805 = vunpack.c.l.b16 %v1770
        %v1806 = vunpack.c.h.b16 %v1770
        %v1807 = vunpack.c.l.b16 %v1771
        %v1808 = vunpack.c.h.b16 %v1771
        %v1809 = vunpack.c.l.b16 %v1772
        %v1810 = vunpack.c.h.b16 %v1772
        %v1811 = vunpack.c.l.b16 %v1773
        %v1812 = vpack.c.b16 %v1787, %v1787
        %v1813 = vpack.c.b16 %v1788, %v1788
        %v1814 = vpack.c.b16 %v1789, %v1789
        %v1815 = vpack.c.b16 %v1790, %v1790
        %v1816 = vpack.c.b16 %v1791, %v1791
        %v1817 = vpack.c.b16 %v1792, %v1792
        %v1818 = vpack.c.b16 %v1793, %v1793
        %v1819 = vpack.c.b16 %v1794, %v1794
        %v1820 = vpack.c.b16 %v1795, %v1795
        %v1821 = vpack.c.b16 %v1796, %v1796
        %v1822 = vpack.c.b16 %v1797, %v1797
        %v1823 = vpack.c.b16 %v1798, %v1798
        %v1824 = vpack.c.b16 %v1799, %v1799
        %v1825 = vpack.c.b16 %v1800, %v1800
        %v1826 = vpack.c.b16 %v1801, %v1801
        %v1827 = vpack.c.b16 %v1802, %v1802
        %v1828 = vpack.c.b16 %v1803, %v1803
        %v1829 = vpack.c.b16 %v1804, %v1804
        %v1830 = vpack.c.b16 %v1805, %v1805
        %v1831 = vpack.c.b16 %v1806, %v1806
        %v1832 = vpack.c.b16 %v1807, %v1807
        %v1833 = vpack.c.b16 %v1808, %v1808
        %v1834 = vpack.c.b16 %v1809, %v1809
        %v1835 = vpack.c.b16 %v1810, %v1810
        %v1836 = vpack.c.b16 %v1811, %v1811
        %1862 = vst [vmem:[%s611] sm:$0xf] %v1812
        %1863 = vst [vmem:[%s611 + $0x4] sm:$0xf] %v1813
        %1864 = vst [vmem:[%s611 + $0x8] sm:$0xf] %v1814
        %1865 = vst [vmem:[%s611 + $0xc] sm:$0xf] %v1815
        %1866 = vst [vmem:[%s611 + $0x10] sm:$0xf] %v1816
        %1867 = vst [vmem:[%s611 + $0x14] sm:$0xf] %v1817
        %1868 = vst [vmem:[%s611 + $0x18] sm:$0xf] %v1818
        %1869 = vst [vmem:[%s611 + $0x1c] sm:$0xf] %v1819
        %1870 = vst [vmem:[%s611 + $0x20] sm:$0xf] %v1820
        %1871 = vst [vmem:[%s611 + $0x24] sm:$0xf] %v1821
        %1872 = vst [vmem:[%s611 + $0x28] sm:$0xf] %v1822
        %1873 = vst [vmem:[%s611 + $0x2c] sm:$0xf] %v1823
        %1874 = vst [vmem:[%s611 + $0x30] sm:$0xf] %v1824
        %1875 = vst [vmem:[%s611 + $0x34] sm:$0xf] %v1825
        %1876 = vst [vmem:[%s611 + $0x38] sm:$0xf] %v1826
        %1877 = vst [vmem:[%s611 + $0x3c] sm:$0xf] %v1827
        %1878 = vst [vmem:[%s611 + $0x40] sm:$0xf] %v1828
        %1879 = vst [vmem:[%s611 + $0x44] sm:$0xf] %v1829
        %1880 = vst [vmem:[%s611 + $0x48] sm:$0xf] %v1830
        %1881 = vst [vmem:[%s611 + $0x4c] sm:$0xf] %v1831
        %1882 = vst [vmem:[%s611 + $0x50] sm:$0xf] %v1832
        %1883 = vst [vmem:[%s611 + $0x54] sm:$0xf] %v1833
        %1884 = vst [vmem:[%s611 + $0x58] sm:$0xf] %v1834
        %1885 = vst [vmem:[%s611 + $0x5c] sm:$0xf] %v1835
        %1886 = vst [vmem:[%s611 + $0x60] sm:$0xf] %v1836
        %s1887 = smul.u32 25, %s14
        %p1888 = scmp.lt.s32.totalorder %s1887, 49
        %s1889 = scalar_select %p1888, %s1887, 49
        %s1890 = smul.addr %s1889, 4
        %s1891 = scalar_lea.vmem %s3, %s1890
        // Predicated region
        $region74: #{convnet_forward.3} parent=68 // pred_check
          %p1892 = pneg %p100
        $region75: #{convnet_forward.3} parent=68 // pred_check_branch
          %1894 = sbr.rel (%p1892) target = $region77
        $region76: #{convnet_forward.3} parent=68 // pred_region
          %s1895 = smul.u32 25, %s14
        $region77: #{convnet_forward.3} parent=68 // pred_fallthru
          _
      $region69: #{convnet_forward.3} parent=5 // pred_fallthru
        _
      %p1896 = scmp.le.s32.totalorder 2, %s9
      // Predicated region
      $region78: #{convnet_forward.3} parent=5 // pred_check
        %p1897 = pneg %p1896
      $region79: #{convnet_forward.3} parent=5 // pred_check_branch
        %1899 = sbr.rel (%p1897) target = $region81
      $region80: #{convnet_forward.3} parent=5 // pred_region
        %s1900 = ssub.s32 %s9, 2
        // Predicated region
        $region82: #{convnet_forward.3} parent=80 // pred_check
          %p1901 = pneg %p106
        $region83: #{convnet_forward.3} parent=80 // pred_check_branch
          %1903 = sbr.rel (%p1901) target = $region85
        $region84: #{convnet_forward.3} parent=80 // pred_region
          %s1904 = smul.u32 25, %s15
          %p1905 = scmp.lt.s32.totalorder %s1904, 49
          %s1906 = scalar_select %p1905, %s1904, 49
          %s1907 = smul.addr %s1906, 4
          %s1908 = scalar_lea.vmem %s3, %s1907
        $region85: #{convnet_forward.3} parent=80 // pred_fallthru
          _
      $region81: #{convnet_forward.3} parent=5 // pred_fallthru
        _
    $region6: #{convnet_forward.3} parent=1 // loop_footer
      %s13 = sadd.s32 1, %s9
    $region7: #{convnet_forward.3} parent=1 // loop_footer_branch
      %8 = sbr.rel target = $region3
    $region8: #{convnet_forward.3} parent=1 // loop_exit
      _

// kernel: convnet_forward.4
$region0: #{convnet_forward.4}
  #allocation0 [shape = 'u32[]', space=smem, size = 0x4, offset = 0x4, fixed_abs, tag = 'smem constant byte address 0x4 - core index']
  #allocation1 [shape = 'u32[144,128]{1,0:T(1,128)}', space=vmem, size = 0x12000, scoped, tag = 'internal scratch']
  %s0 = inlined_call_operand.vmem [shape: bf16[4,64,800], index: 0, kind: input, shape index: {}]
  %s1 = inlined_call_operand.vmem [shape: bf16[800,128], index: 1, kind: input, shape index: {}]
  %s2 = inlined_call_operand.vmem [shape: f32[1,128], index: 2, kind: input, shape index: {}]
  %s3 = inlined_call_operand.vmem [shape: bf16[64,128], index: 3, kind: output, shape index: {}]
  %s4 = sld [smem:[#allocation0]]
  $region71: #{convnet_forward.4} parent=0
    _
  %s6 = ssub.s32 1, %s4
  %s7 = scalar_select 0, %s6, %s4
  $region1: #{convnet_forward.4} parent=0
    #allocation2 [shape = 'u8[458752]{0}', space=vmem, size = 0x70000, scoped, tag = 'input window, operand 0']
    loop: start=0, step=1, limit=4
    $region2: #{convnet_forward.4} parent=1 // loop_pre_header
      _
    $region3: #{convnet_forward.4} parent=1 // loop_header
      %s9 = sphi 0, %s13
      %p10 = scmp.ge.s32.totalorder %s9, 4
      %s19 = sphi 0, %s21
      %s22 = sphi 0, %s19
      %s23 = sphi 0, %s22
      %s39 = sphi 0, %s23
      %s43 = sphi 0, %s43
      %s45 = sphi 0, %s43
      %s46 = sphi 0, %s45
      %s60 = sphi 0, %s46
      %s64 = sphi 0, %s64
      %s66 = sphi 0, %s64
      %s67 = sphi 0, %s66
      %s81 = sphi 0, %s67
      %s87 = sphi 0, %s89
      %s90 = sphi 0, %s87
      %s91 = sphi 0, %s90
      %s107 = sphi 0, %s91
    $region4: #{convnet_forward.4} parent=1 // loop_header_branch
      %12 = sbr.rel (%p10) target = $region8
    $region5: #{convnet_forward.4} parent=1 // loop_body
      %s14 = ssub.s32 %s9, 1
      %s15 = ssub.s32 %s9, 2
      %s16 = sadd.s32 %s9, 1
      %s17 = ssub.s32 %s9, %s16
      %p18 = scmp.eq.s32.totalorder %s17, 0
      %s20 = sadd.s32 %s19, 1
      %s21 = scalar_select %p18, %s19, %s20
      %p24 = pneg %p18
      %p25 = scmp.eq.s32.totalorder %s9, 1
      %p26 = por %p24, %p25
      %p27 = scmp.ne.s32.totalorder %s19, %s22
      %p28 = scmp.eq.s32.totalorder %s9, 0
      %p29 = por %p27, %p28
      %p30 = scmp.ne.s32.totalorder %s19, %s22
      %p31 = scmp.eq.s32.totalorder %s14, 1
      %p32 = por %p30, %p31
      %p33 = scmp.ne.s32.totalorder %s22, %s23
      %p34 = scmp.eq.s32.totalorder %s14, 0
      %p35 = por %p33, %p34
      %p36 = scmp.ne.s32.totalorder %s22, %s23
      %p37 = scmp.eq.s32.totalorder %s15, 1
      %p38 = por %p36, %p37
      %p40 = scmp.ne.s32.totalorder %s23, %s39
      %p41 = scmp.eq.s32.totalorder %s15, 0
      %p42 = por %p40, %p41
      %s44 = sadd.s32 %s43, 1
      %p47 = scmp.eq.s32.totalorder %s9, 1
      %p48 = scmp.ne.s32.totalorder %s43, %s45
      %p49 = scmp.eq.s32.totalorder %s9, 0
      %p50 = por %p48, %p49
      %p51 = scmp.ne.s32.totalorder %s43, %s45
      %p52 = scmp.eq.s32.totalorder %s14, 1
      %p53 = por %p51, %p52
      %p54 = scmp.ne.s32.totalorder %s45, %s46
      %p55 = scmp.eq.s32.totalorder %s14, 0
      %p56 = por %p54, %p55
      %p57 = scmp.ne.s32.totalorder %s45, %s46
      %p58 = scmp.eq.s32.totalorder %s15, 1
      %p59 = por %p57, %p58
      %p61 = scmp.ne.s32.totalorder %s46, %s60
      %p62 = scmp.eq.s32.totalorder %s15, 0
      %p63 = por %p61, %p62
      %s65 = sadd.s32 %s64, 1
      %p68 = scmp.eq.s32.totalorder %s9, 1
      %p69 = scmp.ne.s32.totalorder %s64, %s66
      %p70 = scmp.eq.s32.totalorder %s9, 0
      %p71 = por %p69, %p70
      %p72 = scmp.ne.s32.totalorder %s64, %s66
      %p73 = scmp.eq.s32.totalorder %s14, 1
      %p74 = por %p72, %p73
      %p75 = scmp.ne.s32.totalorder %s66, %s67
      %p76 = scmp.eq.s32.totalorder %s14, 0
      %p77 = por %p75, %p76
      %p78 = scmp.ne.s32.totalorder %s66, %s67
      %p79 = scmp.eq.s32.totalorder %s15, 1
      %p80 = por %p78, %p79
      %p82 = scmp.ne.s32.totalorder %s67, %s81
      %p83 = scmp.eq.s32.totalorder %s15, 0
      %p84 = por %p82, %p83
      %s85 = ssub.s32 %s9, %s16
      %p86 = scmp.eq.s32.totalorder %s85, 0
      %s88 = sadd.s32 %s87, 1
      %s89 = scalar_select %p86, %s87, %s88
      %p92 = pneg %p86
      %p93 = scmp.eq.s32.totalorder %s9, 1
      %p94 = por %p92, %p93
      %p95 = scmp.ne.s32.totalorder %s87, %s90
      %p96 = scmp.eq.s32.totalorder %s9, 0
      %p97 = por %p95, %p96
      %p98 = scmp.ne.s32.totalorder %s87, %s90
      %p99 = scmp.eq.s32.totalorder %s14, 1
      %p100 = por %p98, %p99
      %p101 = scmp.ne.s32.totalorder %s90, %s91
      %p102 = scmp.eq.s32.totalorder %s14, 0
      %p103 = por %p101, %p102
      %p104 = scmp.ne.s32.totalorder %s90, %s91
      %p105 = scmp.eq.s32.totalorder %s15, 1
      %p106 = por %p104, %p105
      %p108 = scmp.ne.s32.totalorder %s91, %s107
      %p109 = scmp.eq.s32.totalorder %s15, 0
      %p110 = por %p108, %p109
      %p111 = scmp.le.s32.totalorder 1, %s9
      %p112 = scmp.lt.s32.totalorder %s9, 3
      %p113 = pnand %p111, %p112
      %p114 = pneg %p113
      // Predicated region
      $region9: #{convnet_forward.4} parent=5 // pred_check
        _
      $region10: #{convnet_forward.4} parent=5 // pred_check_branch
        %116 = sbr.rel (%p113) target = $region12
      $region11: #{convnet_forward.4} parent=5 // pred_region
        %s117 = ssub.s32 %s9, 1
        // Predicated region
        $region13: #{convnet_forward.4} parent=11 // pred_check
          %p118 = pneg %p56
        $region14: #{convnet_forward.4} parent=11 // pred_check_branch
          %120 = sbr.rel (%p118) target = $region16
        $region15: #{convnet_forward.4} parent=11 // pred_region
          _
        $region16: #{convnet_forward.4} parent=11 // pred_fallthru
          _
        // Predicated region
        $region17: #{convnet_forward.4} parent=11 // pred_check
          %p121 = pneg %p77
        $region18: #{convnet_forward.4} parent=11 // pred_check_branch
          %123 = sbr.rel (%p121) target = $region20
        $region19: #{convnet_forward.4} parent=11 // pred_region
          _
        $region20: #{convnet_forward.4} parent=11 // pred_fallthru
          _
      $region12: #{convnet_forward.4} parent=5 // pred_fallthru
        _
      %p124 = scmp.lt.s32.totalorder %s9, 2
      // Predicated region
      $region21: #{convnet_forward.4} parent=5 // pred_check
        %p125 = pneg %p124
      $region22: #{convnet_forward.4} parent=5 // pred_check_branch
        %127 = sbr.rel (%p125) target = $region24
      $region23: #{convnet_forward.4} parent=5 // pred_region
        // Predicated region
        $region25: #{convnet_forward.4} parent=23 // pred_check
          %p128 = pneg %p29
        $region26: #{convnet_forward.4} parent=23 // pred_check_branch
          %130 = sbr.rel (%p128) target = $region28
        $region27: #{convnet_forward.4} parent=23 // pred_region
          %s131 = sand.u32 %s19, 1
          %s132 = sand.u32 %s19, 1
          %s133 = smul.addr %s132, 448
          %s134 = scalar_lea.vmem [#allocation2], %s133
          %s135 = smul.u32 4, %s9
          %s136 = smul.addr %s135, 7
          %s137 = smul.addr %s136, 4
          %s138 = scalar_lea.vmem %s0, %s137
          // Predicated region
          $region29: #{convnet_forward.4} parent=27 // pred_check
            _
          $region30: #{convnet_forward.4} parent=27 // pred_check_branch
            %140 = sbr.rel (0) target = $region32
          $region31: #{convnet_forward.4} parent=27 // pred_region
            // Predicated region
            $region33: #{convnet_forward.4} parent=31 // pred_check
              _
            $region34: #{convnet_forward.4} parent=31 // pred_check_branch
              %142 = sbr.rel (0) target = $region36
            $region35: #{convnet_forward.4} parent=31 // pred_region
              %s143 = scalar_lea.vmem %s138, 24
              %s144 = scalar_lea.vmem %s134, 24 [#allocation2]
              loop: start=0, step=1, limit=1
              $region37: #{convnet_forward.4} parent=35 // loop_pre_header
                _
              $region38: #{convnet_forward.4} parent=35 // loop_header
                %s146 = sphi 0, %s150
                %p147 = scmp.ge.s32.totalorder %s146, 1
                %s151 = sphi %s138, %s138
                %s152 = sphi %s134, %s134
              $region39: #{convnet_forward.4} parent=35 // loop_header_branch
                %149 = sbr.rel (%p147) target = $region43
              $region40: #{convnet_forward.4} parent=35 // loop_body
                %v153 = vld [vmem:[%s151] sm:$0xff]
                %154 = vst [vmem:[%s152] sm:$0xff] %v153
                %v155 = vld [vmem:[%s151 + $0x8] sm:$0xff]
                %156 = vst [vmem:[%s152 + $0x8] sm:$0xff] %v155
                %v157 = vld [vmem:[%s151 + $0x10] sm:$0xff]
                %158 = vst [vmem:[%s152 + $0x10] sm:$0xff] %v157
                %v159 = vld [vmem:[%s151 + $0x1c] sm:$0xff]
                %160 = vst [vmem:[%s152 + $0x1c] sm:$0xff] %v159
                %v161 = vld [vmem:[%s151 + $0x24] sm:$0xff]
                %162 = vst [vmem:[%s152 + $0x24] sm:$0xff] %v161
                %v163 = vld [vmem:[%s151 + $0x2c] sm:$0xff]
                %164 = vst [vmem:[%s152 + $0x2c] sm:$0xff] %v163
                %v165 = vld [vmem:[%s151 + $0x38] sm:$0xff]
                %166 = vst [vmem:[%s152 + $0x38] sm:$0xff] %v165
                %v167 = vld [vmem:[%s151 + $0x40] sm:$0xff]
                %168 = vst [vmem:[%s152 + $0x40] sm:$0xff] %v167
                %v169 = vld [vmem:[%s151 + $0x48] sm:$0xff]
                %170 = vst [vmem:[%s152 + $0x48] sm:$0xff] %v169
                %v171 = vld [vmem:[%s151 + $0x54] sm:$0xff]
                %172 = vst [vmem:[%s152 + $0x54] sm:$0xff] %v171
                %v173 = vld [vmem:[%s151 + $0x5c] sm:$0xff]
                %174 = vst [vmem:[%s152 + $0x5c] sm:$0xff] %v173
                %v175 = vld [vmem:[%s151 + $0x64] sm:$0xff]
                %176 = vst [vmem:[%s152 + $0x64] sm:$0xff] %v175
                %v177 = vld [vmem:[%s151 + $0xe0] sm:$0xff]
                %178 = vst [vmem:[%s152 + $0x70] sm:$0xff] %v177
                %v179 = vld [vmem:[%s151 + $0xe8] sm:$0xff]
                %180 = vst [vmem:[%s152 + $0x78] sm:$0xff] %v179
                %v181 = vld [vmem:[%s151 + $0xf0] sm:$0xff]
                %182 = vst [vmem:[%s152 + $0x80] sm:$0xff] %v181
                %v183 = vld [vmem:[%s151 + $0xfc] sm:$0xff]
                %184 = vst [vmem:[%s152 + $0x8c] sm:$0xff] %v183
                %v185 = vld [vmem:[%s151 + $0x104] sm:$0xff]
                %186 = vst [vmem:[%s152 + $0x94] sm:$0xff] %v185
                %v187 = vld [vmem:[%s151 + $0x10c] sm:$0xff]
                %188 = vst [vmem:[%s152 + $0x9c] sm:$0xff] %v187
                %v189 = vld [vmem:[%s151 + $0x118] sm:$0xff]
                %190 = vst [vmem:[%s152 + $0xa8] sm:$0xff] %v189
                %v191 = vld [vmem:[%s151 + $0x120] sm:$0xff]
                %192 = vst [vmem:[%s152 + $0xb0] sm:$0xff] %v191
                %v193 = vld [vmem:[%s151 + $0x128] sm:$0xff]
                %194 = vst [vmem:[%s152 + $0xb8] sm:$0xff] %v193
                %v195 = vld [vmem:[%s151 + $0x134] sm:$0xff]
                %196 = vst [vmem:[%s152 + $0xc4] sm:$0xff] %v195
                %v197 = vld [vmem:[%s151 + $0x13c] sm:$0xff]
                %198 = vst [vmem:[%s152 + $0xcc] sm:$0xff] %v197
                %v199 = vld [vmem:[%s151 + $0x144] sm:$0xff]
                %200 = vst [vmem:[%s152 + $0xd4] sm:$0xff] %v199
                %v201 = vld [vmem:[%s151 + $0x1c0] sm:$0xff]
                %202 = vst [vmem:[%s152 + $0xe0] sm:$0xff] %v201
                %v203 = vld [vmem:[%s151 + $0x1c8] sm:$0xff]
                %204 = vst [vmem:[%s152 + $0xe8] sm:$0xff] %v203
                %v205 = vld [vmem:[%s151 + $0x1d0] sm:$0xff]
                %206 = vst [vmem:[%s152 + $0xf0] sm:$0xff] %v205
                %v207 = vld [vmem:[%s151 + $0x1dc] sm:$0xff]
                %208 = vst [vmem:[%s152 + $0xfc] sm:$0xff] %v207
                %v209 = vld [vmem:[%s151 + $0x1e4] sm:$0xff]
                %210 = vst [vmem:[%s152 + $0x104] sm:$0xff] %v209
                %v211 = vld [vmem:[%s151 + $0x1ec] sm:$0xff]
                %212 = vst [vmem:[%s152 + $0x10c] sm:$0xff] %v211
                %v213 = vld [vmem:[%s151 + $0x1f8] sm:$0xff]
                %214 = vst [vmem:[%s152 + $0x118] sm:$0xff] %v213
                %v215 = vld [vmem:[%s151 + $0x200] sm:$0xff]
                %216 = vst [vmem:[%s152 + $0x120] sm:$0xff] %v215
                %v217 = vld [vmem:[%s151 + $0x208] sm:$0xff]
                %218 = vst [vmem:[%s152 + $0x128] sm:$0xff] %v217
                %v219 = vld [vmem:[%s151 + $0x214] sm:$0xff]
                %220 = vst [vmem:[%s152 + $0x134] sm:$0xff] %v219
                %v221 = vld [vmem:[%s151 + $0x21c] sm:$0xff]
                %222 = vst [vmem:[%s152 + $0x13c] sm:$0xff] %v221
                %v223 = vld [vmem:[%s151 + $0x224] sm:$0xff]
                %224 = vst [vmem:[%s152 + $0x144] sm:$0xff] %v223
                %v225 = vld [vmem:[%s151 + $0x2a0] sm:$0xff]
                %226 = vst [vmem:[%s152 + $0x150] sm:$0xff] %v225
                %v227 = vld [vmem:[%s151 + $0x2a8] sm:$0xff]
                %228 = vst [vmem:[%s152 + $0x158] sm:$0xff] %v227
                %v229 = vld [vmem:[%s151 + $0x2b0] sm:$0xff]
                %230 = vst [vmem:[%s152 + $0x160] sm:$0xff] %v229
                %v231 = vld [vmem:[%s151 + $0x2bc] sm:$0xff]
                %232 = vst [vmem:[%s152 + $0x16c] sm:$0xff] %v231
                %v233 = vld [vmem:[%s151 + $0x2c4] sm:$0xff]
                %234 = vst [vmem:[%s152 + $0x174] sm:$0xff] %v233
                %v235 = vld [vmem:[%s151 + $0x2cc] sm:$0xff]
                %236 = vst [vmem:[%s152 + $0x17c] sm:$0xff] %v235
                %v237 = vld [vmem:[%s151 + $0x2d8] sm:$0xff]
                %238 = vst [vmem:[%s152 + $0x188] sm:$0xff] %v237
                %v239 = vld [vmem:[%s151 + $0x2e0] sm:$0xff]
                %240 = vst [vmem:[%s152 + $0x190] sm:$0xff] %v239
                %v241 = vld [vmem:[%s151 + $0x2e8] sm:$0xff]
                %242 = vst [vmem:[%s152 + $0x198] sm:$0xff] %v241
                %v243 = vld [vmem:[%s151 + $0x2f4] sm:$0xff]
                %244 = vst [vmem:[%s152 + $0x1a4] sm:$0xff] %v243
                %v245 = vld [vmem:[%s151 + $0x2fc] sm:$0xff]
                %246 = vst [vmem:[%s152 + $0x1ac] sm:$0xff] %v245
                %v247 = vld [vmem:[%s151 + $0x304] sm:$0xff]
                %248 = vst [vmem:[%s152 + $0x1b4] sm:$0xff] %v247
              $region41: #{convnet_forward.4} parent=35 // loop_footer
                %s150 = sadd.s32 1, %s146
              $region42: #{convnet_forward.4} parent=35 // loop_footer_branch
                %145 = sbr.rel target = $region38
              $region43: #{convnet_forward.4} parent=35 // loop_exit
                _
              %s250 = ssub.s32 16, 1
              loop: start=0, step=1, limit=1
              $region44: #{convnet_forward.4} parent=35 // loop_pre_header
                _
              $region45: #{convnet_forward.4} parent=35 // loop_header
                %s252 = sphi 0, %s256
                %p253 = scmp.ge.s32.totalorder %s252, 1
                %s257 = sphi %s143, %s143
                %s258 = sphi %s144, %s144
              $region46: #{convnet_forward.4} parent=35 // loop_header_branch
                %255 = sbr.rel (%p253) target = $region50
              $region47: #{convnet_forward.4} parent=35 // loop_body
                %v259 = vld [vmem:[%s257] sm:%s250]
                %260 = vst [vmem:[%s258] sm:%s250] %v259
                %v261 = vld [vmem:[%s257 + $0x1c] sm:%s250]
                %262 = vst [vmem:[%s258 + $0x1c] sm:%s250] %v261
                %v263 = vld [vmem:[%s257 + $0x38] sm:%s250]
                %264 = vst [vmem:[%s258 + $0x38] sm:%s250] %v263
                %v265 = vld [vmem:[%s257 + $0x54] sm:%s250]
                %266 = vst [vmem:[%s258 + $0x54] sm:%s250] %v265
                %v267 = vld [vmem:[%s257 + $0xe0] sm:%s250]
                %268 = vst [vmem:[%s258 + $0x70] sm:%s250] %v267
                %v269 = vld [vmem:[%s257 + $0xfc] sm:%s250]
                %270 = vst [vmem:[%s258 + $0x8c] sm:%s250] %v269
                %v271 = vld [vmem:[%s257 + $0x118] sm:%s250]
                %272 = vst [vmem:[%s258 + $0xa8] sm:%s250] %v271
                %v273 = vld [vmem:[%s257 + $0x134] sm:%s250]
                %274 = vst [vmem:[%s258 + $0xc4] sm:%s250] %v273
                %v275 = vld [vmem:[%s257 + $0x1c0] sm:%s250]
                %276 = vst [vmem:[%s258 + $0xe0] sm:%s250] %v275
                %v277 = vld [vmem:[%s257 + $0x1dc] sm:%s250]
                %278 = vst [vmem:[%s258 + $0xfc] sm:%s250] %v277
                %v279 = vld [vmem:[%s257 + $0x1f8] sm:%s250]
                %280 = vst [vmem:[%s258 + $0x118] sm:%s250] %v279
                %v281 = vld [vmem:[%s257 + $0x214] sm:%s250]
                %282 = vst [vmem:[%s258 + $0x134] sm:%s250] %v281
                %v283 = vld [vmem:[%s257 + $0x2a0] sm:%s250]
                %284 = vst [vmem:[%s258 + $0x150] sm:%s250] %v283
                %v285 = vld [vmem:[%s257 + $0x2bc] sm:%s250]
                %286 = vst [vmem:[%s258 + $0x16c] sm:%s250] %v285
                %v287 = vld [vmem:[%s257 + $0x2d8] sm:%s250]
                %288 = vst [vmem:[%s258 + $0x188] sm:%s250] %v287
                %v289 = vld [vmem:[%s257 + $0x2f4] sm:%s250]
                %290 = vst [vmem:[%s258 + $0x1a4] sm:%s250] %v289
              $region48: #{convnet_forward.4} parent=35 // loop_footer
                %s256 = sadd.s32 1, %s252
              $region49: #{convnet_forward.4} parent=35 // loop_footer_branch
                %251 = sbr.rel target = $region45
              $region50: #{convnet_forward.4} parent=35 // loop_exit
                _
            $region36: #{convnet_forward.4} parent=31 // pred_fallthru
              _
          $region32: #{convnet_forward.4} parent=27 // pred_fallthru
            _
          %291 = vnop
        $region28: #{convnet_forward.4} parent=23 // pred_fallthru
          _
      $region24: #{convnet_forward.4} parent=5 // pred_fallthru
        _
      %p292 = scmp.le.s32.totalorder 1, %s9
      %p293 = scmp.lt.s32.totalorder %s9, 3
      %p294 = pnand %p292, %p293
      %p295 = pneg %p294
      // Predicated region
      $region51: #{convnet_forward.4} parent=5 // pred_check
        _
      $region52: #{convnet_forward.4} parent=5 // pred_check_branch
        %297 = sbr.rel (%p294) target = $region54
      $region53: #{convnet_forward.4} parent=5 // pred_region
        %s298 = ssub.s32 %s9, 1
        %s299 = sand.u32 %s22, 1
        %s300 = sand.u32 %s22, 1
        %s301 = smul.addr %s300, 448
        %s302 = scalar_lea.vmem [#allocation2], %s301
        // Predicated region
        $region55: #{convnet_forward.4} parent=53 // pred_check
          %p303 = pneg %p35
        $region56: #{convnet_forward.4} parent=53 // pred_check_branch
          %305 = sbr.rel (%p303) target = $region58
        $region57: #{convnet_forward.4} parent=53 // pred_region
          _
        $region58: #{convnet_forward.4} parent=53 // pred_fallthru
          _
        %s306 = sand.u32 %s22, 1
        %s307 = sand.u32 %s22, 1
        %s308 = smul.addr %s307, 448
        %s309 = scalar_lea.vmem [#allocation2], %s308
        %p310 = pneg %p35
        %p311 = pneg %p32
        %p312 = pneg %p56
        %p313 = pneg %p53
        %p314 = pneg %p77
        %p315 = pneg %p74
        %p316 = pneg %p103
        %p317 = pneg %p100
        %s318 = smul.u32 4, %s14
        %p319 = scmp.lt.s32.totalorder %s318, 7
        %s320 = scalar_select %p319, %s318, 7
        %s321 = smul.addr %s320, 4
        %s322 = scalar_lea.vmem %s3, %s321
        %s323 = smul.u32 4, %s14
        %s324 = smul.u32 4, %s14
        %p325 = scmp.lt.s32.totalorder %s324, 7
        %s326 = scalar_select %p325, %s324, 7
        %s327 = smul.addr %s326, 4
        %s328 = scalar_lea.vmem %s3, %s327
        %s329 = smul.u32 4, %s14
        %v331 = vld [vmem:[%s1] sm:$0xf]
        %v332 = vld [vmem:[%s1 + $0x4] sm:$0xf]
        %v333 = vld [vmem:[%s1 + $0x8] sm:$0xf]
        %v334 = vld [vmem:[%s1 + $0xc] sm:$0xf]
        %v335 = vld [vmem:[%s1 + $0x10] sm:$0xf]
        %v336 = vld [vmem:[%s1 + $0x14] sm:$0xf]
        %v337 = vld [vmem:[%s1 + $0x18] sm:$0xf]
        %v338 = vld [vmem:[%s1 + $0x1c] sm:$0xf]
        %v339 = vld [vmem:[%s1 + $0x20] sm:$0xf]
        %v340 = vld [vmem:[%s1 + $0x24] sm:$0xf]
        %v341 = vld [vmem:[%s1 + $0x28] sm:$0xf]
        %v342 = vld [vmem:[%s1 + $0x2c] sm:$0xf]
        %v343 = vld [vmem:[%s1 + $0x30] sm:$0xf]
        %v344 = vld [vmem:[%s1 + $0x34] sm:$0xf]
        %v345 = vld [vmem:[%s1 + $0x38] sm:$0xf]
        %v346 = vld [vmem:[%s1 + $0x3c] sm:$0xf]
        %v347 = vld [vmem:[%s1 + $0x40] sm:$0xf]
        %v348 = vld [vmem:[%s1 + $0x44] sm:$0xf]
        %v349 = vld [vmem:[%s1 + $0x48] sm:$0xf]
        %v350 = vld [vmem:[%s1 + $0x4c] sm:$0xf]
        %v351 = vld [vmem:[%s1 + $0x50] sm:$0xf]
        %v352 = vld [vmem:[%s1 + $0x54] sm:$0xf]
        %v353 = vld [vmem:[%s1 + $0x58] sm:$0xf]
        %v354 = vld [vmem:[%s1 + $0x5c] sm:$0xf]
        %v355 = vld [vmem:[%s1 + $0x60] sm:$0xf]
        %v356 = vld [vmem:[%s1 + $0x64] sm:$0xf]
        %v357 = vld [vmem:[%s1 + $0x68] sm:$0xf]
        %v358 = vld [vmem:[%s1 + $0x6c] sm:$0xf]
        %v359 = vld [vmem:[%s1 + $0x70] sm:$0xf]
        %v360 = vld [vmem:[%s1 + $0x74] sm:$0xf]
        %v361 = vld [vmem:[%s1 + $0x78] sm:$0xf]
        %v362 = vld [vmem:[%s1 + $0x7c] sm:$0xf]
        %v363 = vld [vmem:[%s1 + $0x80] sm:$0xf]
        %v364 = vld [vmem:[%s1 + $0x84] sm:$0xf]
        %v365 = vld [vmem:[%s1 + $0x88] sm:$0xf]
        %v366 = vld [vmem:[%s1 + $0x8c] sm:$0xf]
        %v367 = vld [vmem:[%s1 + $0x90] sm:$0xf]
        %v368 = vld [vmem:[%s1 + $0x94] sm:$0xf]
        %v369 = vld [vmem:[%s1 + $0x98] sm:$0xf]
        %v370 = vld [vmem:[%s1 + $0x9c] sm:$0xf]
        %v371 = vld [vmem:[%s1 + $0xa0] sm:$0xf]
        %v372 = vld [vmem:[%s1 + $0xa4] sm:$0xf]
        %v373 = vld [vmem:[%s1 + $0xa8] sm:$0xf]
        %v374 = vld [vmem:[%s1 + $0xac] sm:$0xf]
        %v375 = vld [vmem:[%s1 + $0xb0] sm:$0xf]
        %v376 = vld [vmem:[%s1 + $0xb4] sm:$0xf]
        %v377 = vld [vmem:[%s1 + $0xb8] sm:$0xf]
        %v378 = vld [vmem:[%s1 + $0xbc] sm:$0xf]
        %v379 = vld [vmem:[%s1 + $0xc0] sm:$0xf]
        %v380 = vld [vmem:[%s1 + $0xc4] sm:$0xf]
        %v381 = vld [vmem:[%s1 + $0xc8] sm:$0xf]
        %v382 = vld [vmem:[%s1 + $0xcc] sm:$0xf]
        %v383 = vld [vmem:[%s1 + $0xd0] sm:$0xf]
        %v384 = vld [vmem:[%s1 + $0xd4] sm:$0xf]
        %v385 = vld [vmem:[%s1 + $0xd8] sm:$0xf]
        %v386 = vld [vmem:[%s1 + $0xdc] sm:$0xf]
        %v387 = vld [vmem:[%s1 + $0xe0] sm:$0xf]
        %v388 = vld [vmem:[%s1 + $0xe4] sm:$0xf]
        %v389 = vld [vmem:[%s1 + $0xe8] sm:$0xf]
        %v390 = vld [vmem:[%s1 + $0xec] sm:$0xf]
        %v391 = vld [vmem:[%s1 + $0xf0] sm:$0xf]
        %v392 = vld [vmem:[%s1 + $0xf4] sm:$0xf]
        %v393 = vld [vmem:[%s1 + $0xf8] sm:$0xf]
        %v394 = vld [vmem:[%s1 + $0xfc] sm:$0xf]
        %v395 = vld [vmem:[%s1 + $0x100] sm:$0xf]
        %v396 = vld [vmem:[%s1 + $0x104] sm:$0xf]
        %v397 = vld [vmem:[%s1 + $0x108] sm:$0xf]
        %v398 = vld [vmem:[%s1 + $0x10c] sm:$0xf]
        %v399 = vld [vmem:[%s1 + $0x110] sm:$0xf]
        %v400 = vld [vmem:[%s1 + $0x114] sm:$0xf]
        %v401 = vld [vmem:[%s1 + $0x118] sm:$0xf]
        %v402 = vld [vmem:[%s1 + $0x11c] sm:$0xf]
        %v403 = vld [vmem:[%s1 + $0x120] sm:$0xf]
        %v404 = vld [vmem:[%s1 + $0x124] sm:$0xf]
        %v405 = vld [vmem:[%s1 + $0x128] sm:$0xf]
        %v406 = vld [vmem:[%s1 + $0x12c] sm:$0xf]
        %v407 = vld [vmem:[%s1 + $0x130] sm:$0xf]
        %v408 = vld [vmem:[%s1 + $0x134] sm:$0xf]
        %v409 = vld [vmem:[%s1 + $0x138] sm:$0xf]
        %v410 = vld [vmem:[%s1 + $0x13c] sm:$0xf]
        %v411 = vld [vmem:[%s1 + $0x140] sm:$0xf]
        %v412 = vld [vmem:[%s1 + $0x144] sm:$0xf]
        %v413 = vld [vmem:[%s1 + $0x148] sm:$0xf]
        %v414 = vld [vmem:[%s1 + $0x14c] sm:$0xf]
        %v415 = vld [vmem:[%s1 + $0x150] sm:$0xf]
        %v416 = vld [vmem:[%s1 + $0x154] sm:$0xf]
        %v417 = vld [vmem:[%s1 + $0x158] sm:$0xf]
        %v418 = vld [vmem:[%s1 + $0x15c] sm:$0xf]
        %v419 = vld [vmem:[%s1 + $0x160] sm:$0xf]
        %v420 = vld [vmem:[%s1 + $0x164] sm:$0xf]
        %v421 = vld [vmem:[%s1 + $0x168] sm:$0xf]
        %v422 = vld [vmem:[%s1 + $0x16c] sm:$0xf]
        %v423 = vld [vmem:[%s1 + $0x170] sm:$0xf]
        %v424 = vld [vmem:[%s1 + $0x174] sm:$0xf]
        %v425 = vld [vmem:[%s1 + $0x178] sm:$0xf]
        %v426 = vld [vmem:[%s1 + $0x17c] sm:$0xf]
        %v427 = vld [vmem:[%s1 + $0x180] sm:$0xf]
        %v428 = vld [vmem:[%s1 + $0x184] sm:$0xf]
        %v429 = vld [vmem:[%s1 + $0x188] sm:$0xf]
        %v430 = vld [vmem:[%s1 + $0x18c] sm:$0xf]
        %v431 = vld [vmem:[%s302] sm:$0xff]
        %v432 = vld [vmem:[%s302 + $0x8] sm:$0xff]
        %v433 = vld [vmem:[%s302 + $0x10] sm:$0xff]
        %v434 = vld [vmem:[%s302 + $0x18] sm:$0xf]
        %v435 = vld [vmem:[%s302 + $0x1c] sm:$0xff]
        %v436 = vld [vmem:[%s302 + $0x24] sm:$0xff]
        %v437 = vld [vmem:[%s302 + $0x2c] sm:$0xff]
        %v438 = vld [vmem:[%s302 + $0x34] sm:$0xf]
        %v439 = vld [vmem:[%s302 + $0x38] sm:$0xff]
        %v440 = vld [vmem:[%s302 + $0x40] sm:$0xff]
        %v441 = vld [vmem:[%s302 + $0x48] sm:$0xff]
        %v442 = vld [vmem:[%s302 + $0x50] sm:$0xf]
        %v443 = vld [vmem:[%s302 + $0x54] sm:$0xff]
        %v444 = vld [vmem:[%s302 + $0x5c] sm:$0xff]
        %v445 = vld [vmem:[%s302 + $0x64] sm:$0xff]
        %v446 = vld [vmem:[%s302 + $0x6c] sm:$0xf]
        %v463 = vunpack.c.l.b16 %v431
        %v464 = vunpack.c.h.b16 %v431
        %v465 = vunpack.c.l.b16 %v432
        %v466 = vunpack.c.h.b16 %v432
        %v467 = vunpack.c.l.b16 %v433
        %v468 = vunpack.c.h.b16 %v433
        %v469 = vunpack.c.l.b16 %v434
        %v470 = vunpack.c.l.b16 %v435
        %v471 = vunpack.c.h.b16 %v435
        %v472 = vunpack.c.l.b16 %v436
        %v473 = vunpack.c.h.b16 %v436
        %v474 = vunpack.c.l.b16 %v437
        %v475 = vunpack.c.h.b16 %v437
        %v476 = vunpack.c.l.b16 %v438
        %v477 = vunpack.c.l.b16 %v439
        %v478 = vunpack.c.h.b16 %v439
        %v479 = vunpack.c.l.b16 %v440
        %v480 = vunpack.c.h.b16 %v440
        %v481 = vunpack.c.l.b16 %v441
        %v482 = vunpack.c.h.b16 %v441
        %v483 = vunpack.c.l.b16 %v442
        %v484 = vunpack.c.l.b16 %v443
        %v485 = vunpack.c.h.b16 %v443
        %v486 = vunpack.c.l.b16 %v444
        %v487 = vunpack.c.h.b16 %v444
        %v488 = vunpack.c.l.b16 %v445
        %v489 = vunpack.c.h.b16 %v445
        %v490 = vunpack.c.l.b16 %v446
        %v491 = vpack.c.b16 %v470, %v463
        %v492 = vpack.c.b16 %v471, %v464
        %v493 = vpack.c.b16 %v472, %v465
        %v494 = vpack.c.b16 %v473, %v466
        %v495 = vpack.c.b16 %v474, %v467
        %v496 = vpack.c.b16 %v475, %v468
        %v497 = vpack.c.b16 %v476, %v469
        %v498 = vpack.c.b16 %v484, %v477
        %v499 = vpack.c.b16 %v485, %v478
        %v500 = vpack.c.b16 %v486, %v479
        %v501 = vpack.c.b16 %v487, %v480
        %v502 = vpack.c.b16 %v488, %v481
        %v503 = vpack.c.b16 %v489, %v482
        %v504 = vpack.c.b16 %v490, %v483
        %v617 = vunpack.c.l.b16 %v331
        %v618 = vunpack.c.l.b16 %v332
        %v619 = vunpack.c.l.b16 %v333
        %v620 = vunpack.c.l.b16 %v334
        %v621 = vunpack.c.l.b16 %v335
        %v622 = vunpack.c.l.b16 %v336
        %v623 = vunpack.c.l.b16 %v337
        %v624 = vunpack.c.l.b16 %v338
        %v625 = vunpack.c.l.b16 %v339
        %v626 = vunpack.c.l.b16 %v340
        %v627 = vunpack.c.l.b16 %v341
        %v628 = vunpack.c.l.b16 %v342
        %v629 = vunpack.c.l.b16 %v343
        %v630 = vunpack.c.l.b16 %v344
        %v631 = vunpack.c.l.b16 %v345
        %v632 = vunpack.c.l.b16 %v346
        %v633 = vunpack.c.l.b16 %v347
        %v634 = vunpack.c.l.b16 %v348
        %v635 = vunpack.c.l.b16 %v349
        %v636 = vunpack.c.l.b16 %v350
        %v637 = vunpack.c.l.b16 %v351
        %v638 = vunpack.c.l.b16 %v352
        %v639 = vunpack.c.l.b16 %v353
        %v640 = vunpack.c.l.b16 %v354
        %v641 = vunpack.c.l.b16 %v355
        %v642 = vunpack.c.l.b16 %v356
        %v643 = vunpack.c.l.b16 %v357
        %v644 = vunpack.c.l.b16 %v358
        %v645 = vunpack.c.l.b16 %v359
        %v646 = vunpack.c.l.b16 %v360
        %v647 = vunpack.c.l.b16 %v361
        %v648 = vunpack.c.l.b16 %v362
        %v649 = vunpack.c.l.b16 %v363
        %v650 = vunpack.c.l.b16 %v364
        %v651 = vunpack.c.l.b16 %v365
        %v652 = vunpack.c.l.b16 %v366
        %v653 = vunpack.c.l.b16 %v367
        %v654 = vunpack.c.l.b16 %v368
        %v655 = vunpack.c.l.b16 %v369
        %v656 = vunpack.c.l.b16 %v370
        %v657 = vunpack.c.l.b16 %v371
        %v658 = vunpack.c.l.b16 %v372
        %v659 = vunpack.c.l.b16 %v373
        %v660 = vunpack.c.l.b16 %v374
        %v661 = vunpack.c.l.b16 %v375
        %v662 = vunpack.c.l.b16 %v376
        %v663 = vunpack.c.l.b16 %v377
        %v664 = vunpack.c.l.b16 %v378
        %v665 = vunpack.c.l.b16 %v379
        %v666 = vunpack.c.l.b16 %v380
        %v667 = vunpack.c.l.b16 %v381
        %v668 = vunpack.c.l.b16 %v382
        %v669 = vunpack.c.l.b16 %v383
        %v670 = vunpack.c.l.b16 %v384
        %v671 = vunpack.c.l.b16 %v385
        %v672 = vunpack.c.l.b16 %v386
        %v673 = vunpack.c.l.b16 %v387
        %v674 = vunpack.c.l.b16 %v388
        %v675 = vunpack.c.l.b16 %v389
        %v676 = vunpack.c.l.b16 %v390
        %v677 = vunpack.c.l.b16 %v391
        %v678 = vunpack.c.l.b16 %v392
        %v679 = vunpack.c.l.b16 %v393
        %v680 = vunpack.c.l.b16 %v394
        %v681 = vunpack.c.l.b16 %v395
        %v682 = vunpack.c.l.b16 %v396
        %v683 = vunpack.c.l.b16 %v397
        %v684 = vunpack.c.l.b16 %v398
        %v685 = vunpack.c.l.b16 %v399
        %v686 = vunpack.c.l.b16 %v400
        %v687 = vunpack.c.l.b16 %v401
        %v688 = vunpack.c.l.b16 %v402
        %v689 = vunpack.c.l.b16 %v403
        %v690 = vunpack.c.l.b16 %v404
        %v691 = vunpack.c.l.b16 %v405
        %v692 = vunpack.c.l.b16 %v406
        %v693 = vunpack.c.l.b16 %v407
        %v694 = vunpack.c.l.b16 %v408
        %v695 = vunpack.c.l.b16 %v409
        %v696 = vunpack.c.l.b16 %v410
        %v697 = vunpack.c.l.b16 %v411
        %v698 = vunpack.c.l.b16 %v412
        %v699 = vunpack.c.l.b16 %v413
        %v700 = vunpack.c.l.b16 %v414
        %v701 = vunpack.c.l.b16 %v415
        %v702 = vunpack.c.l.b16 %v416
        %v703 = vunpack.c.l.b16 %v417
        %v704 = vunpack.c.l.b16 %v418
        %v705 = vunpack.c.l.b16 %v419
        %v706 = vunpack.c.l.b16 %v420
        %v707 = vunpack.c.l.b16 %v421
        %v708 = vunpack.c.l.b16 %v422
        %v709 = vunpack.c.l.b16 %v423
        %v710 = vunpack.c.l.b16 %v424
        %v711 = vunpack.c.l.b16 %v425
        %v712 = vunpack.c.l.b16 %v426
        %v713 = vunpack.c.l.b16 %v427
        %v714 = vunpack.c.l.b16 %v428
        %v715 = vunpack.c.l.b16 %v429
        %v716 = vunpack.c.l.b16 %v430
        %v717 = vpack.c.b16 %v618, %v617
        %v718 = vpack.c.b16 %v620, %v619
        %v719 = vpack.c.b16 %v622, %v621
        %v720 = vpack.c.b16 %v624, %v623
        %v721 = vpack.c.b16 %v626, %v625
        %v722 = vpack.c.b16 %v628, %v627
        %v723 = vpack.c.b16 %v630, %v629
        %v724 = vpack.c.b16 %v632, %v631
        %v725 = vpack.c.b16 %v634, %v633
        %v726 = vpack.c.b16 %v636, %v635
        %v727 = vpack.c.b16 %v638, %v637
        %v728 = vpack.c.b16 %v640, %v639
        %v729 = vpack.c.b16 %v642, %v641
        %v730 = vpack.c.b16 %v644, %v643
        %v731 = vpack.c.b16 %v646, %v645
        %v732 = vpack.c.b16 %v648, %v647
        %v733 = vpack.c.b16 %v650, %v649
        %v734 = vpack.c.b16 %v652, %v651
        %v735 = vpack.c.b16 %v654, %v653
        %v736 = vpack.c.b16 %v656, %v655
        %v737 = vpack.c.b16 %v658, %v657
        %v738 = vpack.c.b16 %v660, %v659
        %v739 = vpack.c.b16 %v662, %v661
        %v740 = vpack.c.b16 %v664, %v663
        %v741 = vpack.c.b16 %v666, %v665
        %v742 = vpack.c.b16 %v668, %v667
        %v743 = vpack.c.b16 %v670, %v669
        %v744 = vpack.c.b16 %v672, %v671
        %v745 = vpack.c.b16 %v674, %v673
        %v746 = vpack.c.b16 %v676, %v675
        %v747 = vpack.c.b16 %v678, %v677
        %v748 = vpack.c.b16 %v680, %v679
        %v749 = vpack.c.b16 %v682, %v681
        %v750 = vpack.c.b16 %v684, %v683
        %v751 = vpack.c.b16 %v686, %v685
        %v752 = vpack.c.b16 %v688, %v687
        %v753 = vpack.c.b16 %v690, %v689
        %v754 = vpack.c.b16 %v692, %v691
        %v755 = vpack.c.b16 %v694, %v693
        %v756 = vpack.c.b16 %v696, %v695
        %v757 = vpack.c.b16 %v698, %v697
        %v758 = vpack.c.b16 %v700, %v699
        %v759 = vpack.c.b16 %v702, %v701
        %v760 = vpack.c.b16 %v704, %v703
        %v761 = vpack.c.b16 %v706, %v705
        %v762 = vpack.c.b16 %v708, %v707
        %v763 = vpack.c.b16 %v710, %v709
        %v764 = vpack.c.b16 %v712, %v711
        %v765 = vpack.c.b16 %v714, %v713
        %v766 = vpack.c.b16 %v716, %v715
        %vm817 = vcmask 261120
        %v819 = vsel %vm817, %v497, 0
        %v822 = vsel %vm817, %v504, 0
        %824 = vmatprep.subr.bf16.mxu0 0
        %825 = vmatpush1.bf16.msra.mxu0 %v724
        %826 = vmatprep.subr.bf16.mxu0 0
        %827 = vmatpush1.bf16.msra.mxu0 %v723
        %828 = vmatprep.subr.bf16.mxu0 0
        %829 = vmatpush1.bf16.msra.mxu0 %v722
        %830 = vmatprep.subr.bf16.mxu0 0
        %831 = vmatpush1.bf16.msra.mxu0 %v721
        %832 = vmatprep.subr.bf16.mxu0 0
        %833 = vmatpush1.bf16.msra.mxu0 %v720
        %834 = vmatprep.subr.bf16.mxu0 0
        %835 = vmatpush1.bf16.msra.mxu0 %v719
        %836 = vmatprep.subr.bf16.mxu0 0
        %837 = vmatpush1.bf16.msra.mxu0 %v718
        %838 = vmatprep.subr.bf16.mxu0 0
        %839 = vmatpush1.bf16.msra.mxu0 %v717
        %840 = vmatprep.subr.bf16.mxu0 0
        %841 = vmatpush2.bf16.msra.mxu0 %v732
        %842 = vmatprep.subr.bf16.mxu0 0
        %843 = vmatpush2.bf16.msra.mxu0 %v731
        %844 = vmatprep.subr.bf16.mxu0 0
        %845 = vmatpush2.bf16.msra.mxu0 %v730
        %846 = vmatprep.subr.bf16.mxu0 0
        %847 = vmatpush2.bf16.msra.mxu0 %v729
        %848 = vmatprep.subr.bf16.mxu0 0
        %849 = vmatpush2.bf16.msra.mxu0 %v728
        %850 = vmatprep.subr.bf16.mxu0 0
        %851 = vmatpush2.bf16.msra.mxu0 %v727
        %852 = vmatprep.subr.bf16.mxu0 0
        %853 = vmatpush2.bf16.msra.mxu0 %v726
        %854 = vmatprep.subr.bf16.mxu0 0
        %855 = vmatpush2.bf16.msra.mxu0 %v725
        %856 = vmatprep.mubr.bf16.mxu0 %v492
        %857 = vmatmul.mubr.bf16.gmra.mxu0 %v491
        %v858 = vpop.f32.mrf.mxu0
        %v859 = vadd.f32 0.0, %v858
        %v860 = vpop.f32.mrf.mxu0
        %v861 = vpop.f32.mrf.mxu0
        %v862 = vadd.f32 0.0, %v861
        %v863 = vpop.f32.mrf.mxu0
        %864 = vmatprep.mubr.bf16.mxu0 %v499
        %865 = vmatmul.mubr.bf16.gmra.mxu0 %v498
        %v866 = vpop.f32.mrf.mxu0
        %v867 = vadd.f32 0.0, %v866
        %v868 = vpop.f32.mrf.mxu0
        %v869 = vpop.f32.mrf.mxu0
        %v870 = vadd.f32 0.0, %v869
        %v871 = vpop.f32.mrf.mxu0
        %872 = vdwg.mxu0
        %873 = vmatprep.subr.bf16.mxu0 0
        %874 = vmatpush1.bf16.msra.mxu0 %v740
        %875 = vmatprep.subr.bf16.mxu0 0
        %876 = vmatpush1.bf16.msra.mxu0 %v739
        %877 = vmatprep.subr.bf16.mxu0 0
        %878 = vmatpush1.bf16.msra.mxu0 %v738
        %879 = vmatprep.subr.bf16.mxu0 0
        %880 = vmatpush1.bf16.msra.mxu0 %v737
        %881 = vmatprep.subr.bf16.mxu0 0
        %882 = vmatpush1.bf16.msra.mxu0 %v736
        %883 = vmatprep.subr.bf16.mxu0 0
        %884 = vmatpush1.bf16.msra.mxu0 %v735
        %885 = vmatprep.subr.bf16.mxu0 0
        %886 = vmatpush1.bf16.msra.mxu0 %v734
        %887 = vmatprep.subr.bf16.mxu0 0
        %888 = vmatpush1.bf16.msra.mxu0 %v733
        %889 = vmatprep.subr.bf16.mxu0 0
        %890 = vmatpush2.bf16.msra.mxu0 %v748
        %891 = vmatprep.subr.bf16.mxu0 0
        %892 = vmatpush2.bf16.msra.mxu0 %v747
        %893 = vmatprep.subr.bf16.mxu0 0
        %894 = vmatpush2.bf16.msra.mxu0 %v746
        %895 = vmatprep.subr.bf16.mxu0 0
        %896 = vmatpush2.bf16.msra.mxu0 %v745
        %897 = vmatprep.subr.bf16.mxu0 0
        %898 = vmatpush2.bf16.msra.mxu0 %v744
        %899 = vmatprep.subr.bf16.mxu0 0
        %900 = vmatpush2.bf16.msra.mxu0 %v743
        %901 = vmatprep.subr.bf16.mxu0 0
        %902 = vmatpush2.bf16.msra.mxu0 %v742
        %903 = vmatprep.subr.bf16.mxu0 0
        %904 = vmatpush2.bf16.msra.mxu0 %v741
        %905 = vmatprep.mubr.bf16.mxu0 %v494
        %906 = vmatmul.mubr.bf16.gmra.mxu0 %v493
        %v907 = vpop.f32.mrf.mxu0
        %v908 = vadd.f32 %v859, %v907
        %v909 = vpop.f32.mrf.mxu0
        %v910 = vpop.f32.mrf.mxu0
        %v911 = vadd.f32 %v862, %v910
        %v912 = vpop.f32.mrf.mxu0
        %913 = vmatprep.mubr.bf16.mxu0 %v501
        %914 = vmatmul.mubr.bf16.gmra.mxu0 %v500
        %v915 = vpop.f32.mrf.mxu0
        %v916 = vadd.f32 %v867, %v915
        %v917 = vpop.f32.mrf.mxu0
        %v918 = vpop.f32.mrf.mxu0
        %v919 = vadd.f32 %v870, %v918
        %v920 = vpop.f32.mrf.mxu0
        %921 = vdwg.mxu0
        %922 = vmatprep.subr.bf16.mxu0 0
        %923 = vmatpush1.bf16.msra.mxu0 %v756
        %924 = vmatprep.subr.bf16.mxu0 0
        %925 = vmatpush1.bf16.msra.mxu0 %v755
        %926 = vmatprep.subr.bf16.mxu0 0
        %927 = vmatpush1.bf16.msra.mxu0 %v754
        %928 = vmatprep.subr.bf16.mxu0 0
        %929 = vmatpush1.bf16.msra.mxu0 %v753
        %930 = vmatprep.subr.bf16.mxu0 0
        %931 = vmatpush1.bf16.msra.mxu0 %v752
        %932 = vmatprep.subr.bf16.mxu0 0
        %933 = vmatpush1.bf16.msra.mxu0 %v751
        %934 = vmatprep.subr.bf16.mxu0 0
        %935 = vmatpush1.bf16.msra.mxu0 %v750
        %936 = vmatprep.subr.bf16.mxu0 0
        %937 = vmatpush1.bf16.msra.mxu0 %v749
        %938 = vmatprep.subr.bf16.mxu0 0
        %939 = vmatpush2.bf16.msra.mxu0 %v764
        %940 = vmatprep.subr.bf16.mxu0 0
        %941 = vmatpush2.bf16.msra.mxu0 %v763
        %942 = vmatprep.subr.bf16.mxu0 0
        %943 = vmatpush2.bf16.msra.mxu0 %v762
        %944 = vmatprep.subr.bf16.mxu0 0
        %945 = vmatpush2.bf16.msra.mxu0 %v761
        %946 = vmatprep.subr.bf16.mxu0 0
        %947 = vmatpush2.bf16.msra.mxu0 %v760
        %948 = vmatprep.subr.bf16.mxu0 0
        %949 = vmatpush2.bf16.msra.mxu0 %v759
        %950 = vmatprep.subr.bf16.mxu0 0
        %951 = vmatpush2.bf16.msra.mxu0 %v758
        %952 = vmatprep.subr.bf16.mxu0 0
        %953 = vmatpush2.bf16.msra.mxu0 %v757
        %954 = vmatprep.mubr.bf16.mxu0 %v496
        %955 = vmatmul.mubr.bf16.gmra.mxu0 %v495
        %v956 = vpop.f32.mrf.mxu0
        %v957 = vadd.f32 %v908, %v956
        %v958 = vpop.f32.mrf.mxu0
        %v959 = vpop.f32.mrf.mxu0
        %v960 = vadd.f32 %v911, %v959
        %v961 = vpop.f32.mrf.mxu0
        %962 = vmatprep.mubr.bf16.mxu0 %v503
        %963 = vmatmul.mubr.bf16.gmra.mxu0 %v502
        %v964 = vpop.f32.mrf.mxu0
        %v965 = vadd.f32 %v916, %v964
        %v966 = vpop.f32.mrf.mxu0
        %v967 = vpop.f32.mrf.mxu0
        %v968 = vadd.f32 %v919, %v967
        %v969 = vpop.f32.mrf.mxu0
        %970 = vdwg.mxu0
        %971 = vmatprep.subr.bf16.mxu0 0
        %972 = vmatpush1.bf16.msra.mxu0 0
        %973 = vmatprep.subr.bf16.mxu0 0
        %974 = vmatpush1.bf16.msra.mxu0 0
        %975 = vmatprep.subr.bf16.mxu0 0
        %976 = vmatpush1.bf16.msra.mxu0 0
        %977 = vmatprep.subr.bf16.mxu0 0
        %978 = vmatpush1.bf16.msra.mxu0 0
        %979 = vmatprep.subr.bf16.mxu0 0
        %980 = vmatpush1.bf16.msra.mxu0 0
        %981 = vmatprep.subr.bf16.mxu0 0
        %982 = vmatpush1.bf16.msra.mxu0 0
        %983 = vmatprep.subr.bf16.mxu0 0
        %984 = vmatpush1.bf16.msra.mxu0 %v766
        %985 = vmatprep.subr.bf16.mxu0 0
        %986 = vmatpush1.bf16.msra.mxu0 %v765
        %987 = vmatprep.subr.bf16.mxu0 0
        %988 = vmatpush2.bf16.msra.mxu0 0
        %989 = vmatprep.subr.bf16.mxu0 0
        %990 = vmatpush2.bf16.msra.mxu0 0
        %991 = vmatprep.subr.bf16.mxu0 0
        %992 = vmatpush2.bf16.msra.mxu0 0
        %993 = vmatprep.subr.bf16.mxu0 0
        %994 = vmatpush2.bf16.msra.mxu0 0
        %995 = vmatprep.subr.bf16.mxu0 0
        %996 = vmatpush2.bf16.msra.mxu0 0
        %997 = vmatprep.subr.bf16.mxu0 0
        %998 = vmatpush2.bf16.msra.mxu0 0
        %999 = vmatprep.subr.bf16.mxu0 0
        %1000 = vmatpush2.bf16.msra.mxu0 0
        %1001 = vmatprep.subr.bf16.mxu0 0
        %1002 = vmatpush2.bf16.msra.mxu0 0
        %1003 = vmatprep.mubr.bf16.mxu0 0
        %1004 = vmatmul.mubr.bf16.gmra.mxu0 %v819
        %v1005 = vpop.f32.mrf.mxu0
        %v1006 = vadd.f32 %v957, %v1005
        %v1007 = vpop.f32.mrf.mxu0
        %v1008 = vpop.f32.mrf.mxu0
        %v1009 = vadd.f32 %v960, %v1008
        %v1010 = vpop.f32.mrf.mxu0
        %1011 = vmatprep.mubr.bf16.mxu0 0
        %1012 = vmatmul.mubr.bf16.gmra.mxu0 %v822
        %v1013 = vpop.f32.mrf.mxu0
        %v1014 = vadd.f32 %v965, %v1013
        %v1015 = vpop.f32.mrf.mxu0
        %v1016 = vpop.f32.mrf.mxu0
        %v1017 = vadd.f32 %v968, %v1016
        %v1018 = vpop.f32.mrf.mxu0
        %1019 = vdwg.mxu0
        %s1020 = scalar_lea.vmem %s302, 112 [#allocation2]
        %v1021 = vld [vmem:[%s1020] sm:$0xff]
        %v1022 = vld [vmem:[%s1020 + $0x8] sm:$0xff]
        %v1023 = vld [vmem:[%s1020 + $0x10] sm:$0xff]
        %v1024 = vld [vmem:[%s1020 + $0x18] sm:$0xf]
        %v1025 = vld [vmem:[%s1020 + $0x1c] sm:$0xff]
        %v1026 = vld [vmem:[%s1020 + $0x24] sm:$0xff]
        %v1027 = vld [vmem:[%s1020 + $0x2c] sm:$0xff]
        %v1028 = vld [vmem:[%s1020 + $0x34] sm:$0xf]
        %v1029 = vld [vmem:[%s1020 + $0x38] sm:$0xff]
        %v1030 = vld [vmem:[%s1020 + $0x40] sm:$0xff]
        %v1031 = vld [vmem:[%s1020 + $0x48] sm:$0xff]
        %v1032 = vld [vmem:[%s1020 + $0x50] sm:$0xf]
        %v1033 = vld [vmem:[%s1020 + $0x54] sm:$0xff]
        %v1034 = vld [vmem:[%s1020 + $0x5c] sm:$0xff]
        %v1035 = vld [vmem:[%s1020 + $0x64] sm:$0xff]
        %v1036 = vld [vmem:[%s1020 + $0x6c] sm:$0xf]
        %v1053 = vunpack.c.l.b16 %v1021
        %v1054 = vunpack.c.h.b16 %v1021
        %v1055 = vunpack.c.l.b16 %v1022
        %v1056 = vunpack.c.h.b16 %v1022
        %v1057 = vunpack.c.l.b16 %v1023
        %v1058 = vunpack.c.h.b16 %v1023
        %v1059 = vunpack.c.l.b16 %v1024
        %v1060 = vunpack.c.l.b16 %v1025
        %v1061 = vunpack.c.h.b16 %v1025
        %v1062 = vunpack.c.l.b16 %v1026
        %v1063 = vunpack.c.h.b16 %v1026
        %v1064 = vunpack.c.l.b16 %v1027
        %v1065 = vunpack.c.h.b16 %v1027
        %v1066 = vunpack.c.l.b16 %v1028
        %v1067 = vunpack.c.l.b16 %v1029
        %v1068 = vunpack.c.h.b16 %v1029
        %v1069 = vunpack.c.l.b16 %v1030
        %v1070 = vunpack.c.h.b16 %v1030
        %v1071 = vunpack.c.l.b16 %v1031
        %v1072 = vunpack.c.h.b16 %v1031
        %v1073 = vunpack.c.l.b16 %v1032
        %v1074 = vunpack.c.l.b16 %v1033
        %v1075 = vunpack.c.h.b16 %v1033
        %v1076 = vunpack.c.l.b16 %v1034
        %v1077 = vunpack.c.h.b16 %v1034
        %v1078 = vunpack.c.l.b16 %v1035
        %v1079 = vunpack.c.h.b16 %v1035
        %v1080 = vunpack.c.l.b16 %v1036
        %v1081 = vpack.c.b16 %v1060, %v1053
        %v1082 = vpack.c.b16 %v1061, %v1054
        %v1083 = vpack.c.b16 %v1062, %v1055
        %v1084 = vpack.c.b16 %v1063, %v1056
        %v1085 = vpack.c.b16 %v1064, %v1057
        %v1086 = vpack.c.b16 %v1065, %v1058
        %v1087 = vpack.c.b16 %v1066, %v1059
        %v1088 = vpack.c.b16 %v1074, %v1067
        %v1089 = vpack.c.b16 %v1075, %v1068
        %v1090 = vpack.c.b16 %v1076, %v1069
        %v1091 = vpack.c.b16 %v1077, %v1070
        %v1092 = vpack.c.b16 %v1078, %v1071
        %v1093 = vpack.c.b16 %v1079, %v1072
        %v1094 = vpack.c.b16 %v1080, %v1073
        %v1108 = vsel %vm817, %v1087, 0
        %v1111 = vsel %vm817, %v1094, 0
        %1113 = vmatprep.subr.bf16.mxu0 0
        %1114 = vmatpush1.bf16.msra.mxu0 %v724
        %1115 = vmatprep.subr.bf16.mxu0 0
        %1116 = vmatpush1.bf16.msra.mxu0 %v723
        %1117 = vmatprep.subr.bf16.mxu0 0
        %1118 = vmatpush1.bf16.msra.mxu0 %v722
        %1119 = vmatprep.subr.bf16.mxu0 0
        %1120 = vmatpush1.bf16.msra.mxu0 %v721
        %1121 = vmatprep.subr.bf16.mxu0 0
        %1122 = vmatpush1.bf16.msra.mxu0 %v720
        %1123 = vmatprep.subr.bf16.mxu0 0
        %1124 = vmatpush1.bf16.msra.mxu0 %v719
        %1125 = vmatprep.subr.bf16.mxu0 0
        %1126 = vmatpush1.bf16.msra.mxu0 %v718
        %1127 = vmatprep.subr.bf16.mxu0 0
        %1128 = vmatpush1.bf16.msra.mxu0 %v717
        %1129 = vmatprep.subr.bf16.mxu0 0
        %1130 = vmatpush2.bf16.msra.mxu0 %v732
        %1131 = vmatprep.subr.bf16.mxu0 0
        %1132 = vmatpush2.bf16.msra.mxu0 %v731
        %1133 = vmatprep.subr.bf16.mxu0 0
        %1134 = vmatpush2.bf16.msra.mxu0 %v730
        %1135 = vmatprep.subr.bf16.mxu0 0
        %1136 = vmatpush2.bf16.msra.mxu0 %v729
        %1137 = vmatprep.subr.bf16.mxu0 0
        %1138 = vmatpush2.bf16.msra.mxu0 %v728
        %1139 = vmatprep.subr.bf16.mxu0 0
        %1140 = vmatpush2.bf16.msra.mxu0 %v727
        %1141 = vmatprep.subr.bf16.mxu0 0
        %1142 = vmatpush2.bf16.msra.mxu0 %v726
        %1143 = vmatprep.subr.bf16.mxu0 0
        %1144 = vmatpush2.bf16.msra.mxu0 %v725
        %1145 = vmatprep.mubr.bf16.mxu0 %v1082
        %1146 = vmatmul.mubr.bf16.gmra.mxu0 %v1081
        %v1147 = vpop.f32.mrf.mxu0
        %v1148 = vadd.f32 0.0, %v1147
        %v1149 = vpop.f32.mrf.mxu0
        %v1150 = vpop.f32.mrf.mxu0
        %v1151 = vadd.f32 0.0, %v1150
        %v1152 = vpop.f32.mrf.mxu0
        %1153 = vmatprep.mubr.bf16.mxu0 %v1089
        %1154 = vmatmul.mubr.bf16.gmra.mxu0 %v1088
        %v1155 = vpop.f32.mrf.mxu0
        %v1156 = vadd.f32 0.0, %v1155
        %v1157 = vpop.f32.mrf.mxu0
        %v1158 = vpop.f32.mrf.mxu0
        %v1159 = vadd.f32 0.0, %v1158
        %v1160 = vpop.f32.mrf.mxu0
        %1161 = vdwg.mxu0
        %1162 = vmatprep.subr.bf16.mxu0 0
        %1163 = vmatpush1.bf16.msra.mxu0 %v740
        %1164 = vmatprep.subr.bf16.mxu0 0
        %1165 = vmatpush1.bf16.msra.mxu0 %v739
        %1166 = vmatprep.subr.bf16.mxu0 0
        %1167 = vmatpush1.bf16.msra.mxu0 %v738
        %1168 = vmatprep.subr.bf16.mxu0 0
        %1169 = vmatpush1.bf16.msra.mxu0 %v737
        %1170 = vmatprep.subr.bf16.mxu0 0
        %1171 = vmatpush1.bf16.msra.mxu0 %v736
        %1172 = vmatprep.subr.bf16.mxu0 0
        %1173 = vmatpush1.bf16.msra.mxu0 %v735
        %1174 = vmatprep.subr.bf16.mxu0 0
        %1175 = vmatpush1.bf16.msra.mxu0 %v734
        %1176 = vmatprep.subr.bf16.mxu0 0
        %1177 = vmatpush1.bf16.msra.mxu0 %v733
        %1178 = vmatprep.subr.bf16.mxu0 0
        %1179 = vmatpush2.bf16.msra.mxu0 %v748
        %1180 = vmatprep.subr.bf16.mxu0 0
        %1181 = vmatpush2.bf16.msra.mxu0 %v747
        %1182 = vmatprep.subr.bf16.mxu0 0
        %1183 = vmatpush2.bf16.msra.mxu0 %v746
        %1184 = vmatprep.subr.bf16.mxu0 0
        %1185 = vmatpush2.bf16.msra.mxu0 %v745
        %1186 = vmatprep.subr.bf16.mxu0 0
        %1187 = vmatpush2.bf16.msra.mxu0 %v744
        %1188 = vmatprep.subr.bf16.mxu0 0
        %1189 = vmatpush2.bf16.msra.mxu0 %v743
        %1190 = vmatprep.subr.bf16.mxu0 0
        %1191 = vmatpush2.bf16.msra.mxu0 %v742
        %1192 = vmatprep.subr.bf16.mxu0 0
        %1193 = vmatpush2.bf16.msra.mxu0 %v741
        %1194 = vmatprep.mubr.bf16.mxu0 %v1084
        %1195 = vmatmul.mubr.bf16.gmra.mxu0 %v1083
        %v1196 = vpop.f32.mrf.mxu0
        %v1197 = vadd.f32 %v1148, %v1196
        %v1198 = vpop.f32.mrf.mxu0
        %v1199 = vpop.f32.mrf.mxu0
        %v1200 = vadd.f32 %v1151, %v1199
        %v1201 = vpop.f32.mrf.mxu0
        %1202 = vmatprep.mubr.bf16.mxu0 %v1091
        %1203 = vmatmul.mubr.bf16.gmra.mxu0 %v1090
        %v1204 = vpop.f32.mrf.mxu0
        %v1205 = vadd.f32 %v1156, %v1204
        %v1206 = vpop.f32.mrf.mxu0
        %v1207 = vpop.f32.mrf.mxu0
        %v1208 = vadd.f32 %v1159, %v1207
        %v1209 = vpop.f32.mrf.mxu0
        %1210 = vdwg.mxu0
        %1211 = vmatprep.subr.bf16.mxu0 0
        %1212 = vmatpush1.bf16.msra.mxu0 %v756
        %1213 = vmatprep.subr.bf16.mxu0 0
        %1214 = vmatpush1.bf16.msra.mxu0 %v755
        %1215 = vmatprep.subr.bf16.mxu0 0
        %1216 = vmatpush1.bf16.msra.mxu0 %v754
        %1217 = vmatprep.subr.bf16.mxu0 0
        %1218 = vmatpush1.bf16.msra.mxu0 %v753
        %1219 = vmatprep.subr.bf16.mxu0 0
        %1220 = vmatpush1.bf16.msra.mxu0 %v752
        %1221 = vmatprep.subr.bf16.mxu0 0
        %1222 = vmatpush1.bf16.msra.mxu0 %v751
        %1223 = vmatprep.subr.bf16.mxu0 0
        %1224 = vmatpush1.bf16.msra.mxu0 %v750
        %1225 = vmatprep.subr.bf16.mxu0 0
        %1226 = vmatpush1.bf16.msra.mxu0 %v749
        %1227 = vmatprep.subr.bf16.mxu0 0
        %1228 = vmatpush2.bf16.msra.mxu0 %v764
        %1229 = vmatprep.subr.bf16.mxu0 0
        %1230 = vmatpush2.bf16.msra.mxu0 %v763
        %1231 = vmatprep.subr.bf16.mxu0 0
        %1232 = vmatpush2.bf16.msra.mxu0 %v762
        %1233 = vmatprep.subr.bf16.mxu0 0
        %1234 = vmatpush2.bf16.msra.mxu0 %v761
        %1235 = vmatprep.subr.bf16.mxu0 0
        %1236 = vmatpush2.bf16.msra.mxu0 %v760
        %1237 = vmatprep.subr.bf16.mxu0 0
        %1238 = vmatpush2.bf16.msra.mxu0 %v759
        %1239 = vmatprep.subr.bf16.mxu0 0
        %1240 = vmatpush2.bf16.msra.mxu0 %v758
        %1241 = vmatprep.subr.bf16.mxu0 0
        %1242 = vmatpush2.bf16.msra.mxu0 %v757
        %1243 = vmatprep.mubr.bf16.mxu0 %v1086
        %1244 = vmatmul.mubr.bf16.gmra.mxu0 %v1085
        %v1245 = vpop.f32.mrf.mxu0
        %v1246 = vadd.f32 %v1197, %v1245
        %v1247 = vpop.f32.mrf.mxu0
        %v1248 = vpop.f32.mrf.mxu0
        %v1249 = vadd.f32 %v1200, %v1248
        %v1250 = vpop.f32.mrf.mxu0
        %1251 = vmatprep.mubr.bf16.mxu0 %v1093
        %1252 = vmatmul.mubr.bf16.gmra.mxu0 %v1092
        %v1253 = vpop.f32.mrf.mxu0
        %v1254 = vadd.f32 %v1205, %v1253
        %v1255 = vpop.f32.mrf.mxu0
        %v1256 = vpop.f32.mrf.mxu0
        %v1257 = vadd.f32 %v1208, %v1256
        %v1258 = vpop.f32.mrf.mxu0
        %1259 = vdwg.mxu0
        %1260 = vmatprep.subr.bf16.mxu0 0
        %1261 = vmatpush1.bf16.msra.mxu0 0
        %1262 = vmatprep.subr.bf16.mxu0 0
        %1263 = vmatpush1.bf16.msra.mxu0 0
        %1264 = vmatprep.subr.bf16.mxu0 0
        %1265 = vmatpush1.bf16.msra.mxu0 0
        %1266 = vmatprep.subr.bf16.mxu0 0
        %1267 = vmatpush1.bf16.msra.mxu0 0
        %1268 = vmatprep.subr.bf16.mxu0 0
        %1269 = vmatpush1.bf16.msra.mxu0 0
        %1270 = vmatprep.subr.bf16.mxu0 0
        %1271 = vmatpush1.bf16.msra.mxu0 0
        %1272 = vmatprep.subr.bf16.mxu0 0
        %1273 = vmatpush1.bf16.msra.mxu0 %v766
        %1274 = vmatprep.subr.bf16.mxu0 0
        %1275 = vmatpush1.bf16.msra.mxu0 %v765
        %1276 = vmatprep.subr.bf16.mxu0 0
        %1277 = vmatpush2.bf16.msra.mxu0 0
        %1278 = vmatprep.subr.bf16.mxu0 0
        %1279 = vmatpush2.bf16.msra.mxu0 0
        %1280 = vmatprep.subr.bf16.mxu0 0
        %1281 = vmatpush2.bf16.msra.mxu0 0
        %1282 = vmatprep.subr.bf16.mxu0 0
        %1283 = vmatpush2.bf16.msra.mxu0 0
        %1284 = vmatprep.subr.bf16.mxu0 0
        %1285 = vmatpush2.bf16.msra.mxu0 0
        %1286 = vmatprep.subr.bf16.mxu0 0
        %1287 = vmatpush2.bf16.msra.mxu0 0
        %1288 = vmatprep.subr.bf16.mxu0 0
        %1289 = vmatpush2.bf16.msra.mxu0 0
        %1290 = vmatprep.subr.bf16.mxu0 0
        %1291 = vmatpush2.bf16.msra.mxu0 0
        %1292 = vmatprep.mubr.bf16.mxu0 0
        %1293 = vmatmul.mubr.bf16.gmra.mxu0 %v1108
        %v1294 = vpop.f32.mrf.mxu0
        %v1295 = vadd.f32 %v1246, %v1294
        %v1296 = vpop.f32.mrf.mxu0
        %v1297 = vpop.f32.mrf.mxu0
        %v1298 = vadd.f32 %v1249, %v1297
        %v1299 = vpop.f32.mrf.mxu0
        %1300 = vmatprep.mubr.bf16.mxu0 0
        %1301 = vmatmul.mubr.bf16.gmra.mxu0 %v1111
        %v1302 = vpop.f32.mrf.mxu0
        %v1303 = vadd.f32 %v1254, %v1302
        %v1304 = vpop.f32.mrf.mxu0
        %v1305 = vpop.f32.mrf.mxu0
        %v1306 = vadd.f32 %v1257, %v1305
        %v1307 = vpop.f32.mrf.mxu0
        %1308 = vdwg.mxu0
        %v1309 = vmax.f32 %v1006, %v1295
        %v1310 = vmax.f32 %v1009, %v1298
        %v1311 = vmax.f32 %v1014, %v1303
        %v1312 = vmax.f32 %v1017, %v1306
        %s1313 = scalar_lea.vmem %s302, 224 [#allocation2]
        %v1314 = vld [vmem:[%s1313] sm:$0xff]
        %v1315 = vld [vmem:[%s1313 + $0x8] sm:$0xff]
        %v1316 = vld [vmem:[%s1313 + $0x10] sm:$0xff]
        %v1317 = vld [vmem:[%s1313 + $0x18] sm:$0xf]
        %v1318 = vld [vmem:[%s1313 + $0x1c] sm:$0xff]
        %v1319 = vld [vmem:[%s1313 + $0x24] sm:$0xff]
        %v1320 = vld [vmem:[%s1313 + $0x2c] sm:$0xff]
        %v1321 = vld [vmem:[%s1313 + $0x34] sm:$0xf]
        %v1322 = vld [vmem:[%s1313 + $0x38] sm:$0xff]
        %v1323 = vld [vmem:[%s1313 + $0x40] sm:$0xff]
        %v1324 = vld [vmem:[%s1313 + $0x48] sm:$0xff]
        %v1325 = vld [vmem:[%s1313 + $0x50] sm:$0xf]
        %v1326 = vld [vmem:[%s1313 + $0x54] sm:$0xff]
        %v1327 = vld [vmem:[%s1313 + $0x5c] sm:$0xff]
        %v1328 = vld [vmem:[%s1313 + $0x64] sm:$0xff]
        %v1329 = vld [vmem:[%s1313 + $0x6c] sm:$0xf]
        %v1346 = vunpack.c.l.b16 %v1314
        %v1347 = vunpack.c.h.b16 %v1314
        %v1348 = vunpack.c.l.b16 %v1315
        %v1349 = vunpack.c.h.b16 %v1315
        %v1350 = vunpack.c.l.b16 %v1316
        %v1351 = vunpack.c.h.b16 %v1316
        %v1352 = vunpack.c.l.b16 %v1317
        %v1353 = vunpack.c.l.b16 %v1318
        %v1354 = vunpack.c.h.b16 %v1318
        %v1355 = vunpack.c.l.b16 %v1319
        %v1356 = vunpack.c.h.b16 %v1319
        %v1357 = vunpack.c.l.b16 %v1320
        %v1358 = vunpack.c.h.b16 %v1320
        %v1359 = vunpack.c.l.b16 %v1321
        %v1360 = vunpack.c.l.b16 %v1322
        %v1361 = vunpack.c.h.b16 %v1322
        %v1362 = vunpack.c.l.b16 %v1323
        %v1363 = vunpack.c.h.b16 %v1323
        %v1364 = vunpack.c.l.b16 %v1324
        %v1365 = vunpack.c.h.b16 %v1324
        %v1366 = vunpack.c.l.b16 %v1325
        %v1367 = vunpack.c.l.b16 %v1326
        %v1368 = vunpack.c.h.b16 %v1326
        %v1369 = vunpack.c.l.b16 %v1327
        %v1370 = vunpack.c.h.b16 %v1327
        %v1371 = vunpack.c.l.b16 %v1328
        %v1372 = vunpack.c.h.b16 %v1328
        %v1373 = vunpack.c.l.b16 %v1329
        %v1374 = vpack.c.b16 %v1353, %v1346
        %v1375 = vpack.c.b16 %v1354, %v1347
        %v1376 = vpack.c.b16 %v1355, %v1348
        %v1377 = vpack.c.b16 %v1356, %v1349
        %v1378 = vpack.c.b16 %v1357, %v1350
        %v1379 = vpack.c.b16 %v1358, %v1351
        %v1380 = vpack.c.b16 %v1359, %v1352
        %v1381 = vpack.c.b16 %v1367, %v1360
        %v1382 = vpack.c.b16 %v1368, %v1361
        %v1383 = vpack.c.b16 %v1369, %v1362
        %v1384 = vpack.c.b16 %v1370, %v1363
        %v1385 = vpack.c.b16 %v1371, %v1364
        %v1386 = vpack.c.b16 %v1372, %v1365
        %v1387 = vpack.c.b16 %v1373, %v1366
        %v1401 = vsel %vm817, %v1380, 0
        %v1404 = vsel %vm817, %v1387, 0
        %1406 = vmatprep.subr.bf16.mxu0 0
        %1407 = vmatpush1.bf16.msra.mxu0 %v724
        %1408 = vmatprep.subr.bf16.mxu0 0
        %1409 = vmatpush1.bf16.msra.mxu0 %v723
        %1410 = vmatprep.subr.bf16.mxu0 0
        %1411 = vmatpush1.bf16.msra.mxu0 %v722
        %1412 = vmatprep.subr.bf16.mxu0 0
        %1413 = vmatpush1.bf16.msra.mxu0 %v721
        %1414 = vmatprep.subr.bf16.mxu0 0
        %1415 = vmatpush1.bf16.msra.mxu0 %v720
        %1416 = vmatprep.subr.bf16.mxu0 0
        %1417 = vmatpush1.bf16.msra.mxu0 %v719
        %1418 = vmatprep.subr.bf16.mxu0 0
        %1419 = vmatpush1.bf16.msra.mxu0 %v718
        %1420 = vmatprep.subr.bf16.mxu0 0
        %1421 = vmatpush1.bf16.msra.mxu0 %v717
        %1422 = vmatprep.subr.bf16.mxu0 0
        %1423 = vmatpush2.bf16.msra.mxu0 %v732
        %1424 = vmatprep.subr.bf16.mxu0 0
        %1425 = vmatpush2.bf16.msra.mxu0 %v731
        %1426 = vmatprep.subr.bf16.mxu0 0
        %1427 = vmatpush2.bf16.msra.mxu0 %v730
        %1428 = vmatprep.subr.bf16.mxu0 0
        %1429 = vmatpush2.bf16.msra.mxu0 %v729
        %1430 = vmatprep.subr.bf16.mxu0 0
        %1431 = vmatpush2.bf16.msra.mxu0 %v728
        %1432 = vmatprep.subr.bf16.mxu0 0
        %1433 = vmatpush2.bf16.msra.mxu0 %v727
        %1434 = vmatprep.subr.bf16.mxu0 0
        %1435 = vmatpush2.bf16.msra.mxu0 %v726
        %1436 = vmatprep.subr.bf16.mxu0 0
        %1437 = vmatpush2.bf16.msra.mxu0 %v725
        %1438 = vmatprep.mubr.bf16.mxu0 %v1375
        %1439 = vmatmul.mubr.bf16.gmra.mxu0 %v1374
        %v1440 = vpop.f32.mrf.mxu0
        %v1441 = vadd.f32 0.0, %v1440
        %v1442 = vpop.f32.mrf.mxu0
        %v1443 = vpop.f32.mrf.mxu0
        %v1444 = vadd.f32 0.0, %v1443
        %v1445 = vpop.f32.mrf.mxu0
        %1446 = vmatprep.mubr.bf16.mxu0 %v1382
        %1447 = vmatmul.mubr.bf16.gmra.mxu0 %v1381
        %v1448 = vpop.f32.mrf.mxu0
        %v1449 = vadd.f32 0.0, %v1448
        %v1450 = vpop.f32.mrf.mxu0
        %v1451 = vpop.f32.mrf.mxu0
        %v1452 = vadd.f32 0.0, %v1451
        %v1453 = vpop.f32.mrf.mxu0
        %1454 = vdwg.mxu0
        %1455 = vmatprep.subr.bf16.mxu0 0
        %1456 = vmatpush1.bf16.msra.mxu0 %v740
        %1457 = vmatprep.subr.bf16.mxu0 0
        %1458 = vmatpush1.bf16.msra.mxu0 %v739
        %1459 = vmatprep.subr.bf16.mxu0 0
        %1460 = vmatpush1.bf16.msra.mxu0 %v738
        %1461 = vmatprep.subr.bf16.mxu0 0
        %1462 = vmatpush1.bf16.msra.mxu0 %v737
        %1463 = vmatprep.subr.bf16.mxu0 0
        %1464 = vmatpush1.bf16.msra.mxu0 %v736
        %1465 = vmatprep.subr.bf16.mxu0 0
        %1466 = vmatpush1.bf16.msra.mxu0 %v735
        %1467 = vmatprep.subr.bf16.mxu0 0
        %1468 = vmatpush1.bf16.msra.mxu0 %v734
        %1469 = vmatprep.subr.bf16.mxu0 0
        %1470 = vmatpush1.bf16.msra.mxu0 %v733
        %1471 = vmatprep.subr.bf16.mxu0 0
        %1472 = vmatpush2.bf16.msra.mxu0 %v748
        %1473 = vmatprep.subr.bf16.mxu0 0
        %1474 = vmatpush2.bf16.msra.mxu0 %v747
        %1475 = vmatprep.subr.bf16.mxu0 0
        %1476 = vmatpush2.bf16.msra.mxu0 %v746
        %1477 = vmatprep.subr.bf16.mxu0 0
        %1478 = vmatpush2.bf16.msra.mxu0 %v745
        %1479 = vmatprep.subr.bf16.mxu0 0
        %1480 = vmatpush2.bf16.msra.mxu0 %v744
        %1481 = vmatprep.subr.bf16.mxu0 0
        %1482 = vmatpush2.bf16.msra.mxu0 %v743
        %1483 = vmatprep.subr.bf16.mxu0 0
        %1484 = vmatpush2.bf16.msra.mxu0 %v742
        %1485 = vmatprep.subr.bf16.mxu0 0
        %1486 = vmatpush2.bf16.msra.mxu0 %v741
        %1487 = vmatprep.mubr.bf16.mxu0 %v1377
        %1488 = vmatmul.mubr.bf16.gmra.mxu0 %v1376
        %v1489 = vpop.f32.mrf.mxu0
        %v1490 = vadd.f32 %v1441, %v1489
        %v1491 = vpop.f32.mrf.mxu0
        %v1492 = vpop.f32.mrf.mxu0
        %v1493 = vadd.f32 %v1444, %v1492
        %v1494 = vpop.f32.mrf.mxu0
        %1495 = vmatprep.mubr.bf16.mxu0 %v1384
        %1496 = vmatmul.mubr.bf16.gmra.mxu0 %v1383
        %v1497 = vpop.f32.mrf.mxu0
        %v1498 = vadd.f32 %v1449, %v1497
        %v1499 = vpop.f32.mrf.mxu0
        %v1500 = vpop.f32.mrf.mxu0
        %v1501 = vadd.f32 %v1452, %v1500
        %v1502 = vpop.f32.mrf.mxu0
        %1503 = vdwg.mxu0
        %1504 = vmatprep.subr.bf16.mxu0 0
        %1505 = vmatpush1.bf16.msra.mxu0 %v756
        %1506 = vmatprep.subr.bf16.mxu0 0
        %1507 = vmatpush1.bf16.msra.mxu0 %v755
        %1508 = vmatprep.subr.bf16.mxu0 0
        %1509 = vmatpush1.bf16.msra.mxu0 %v754
        %1510 = vmatprep.subr.bf16.mxu0 0
        %1511 = vmatpush1.bf16.msra.mxu0 %v753
        %1512 = vmatprep.subr.bf16.mxu0 0
        %1513 = vmatpush1.bf16.msra.mxu0 %v752
        %1514 = vmatprep.subr.bf16.mxu0 0
        %1515 = vmatpush1.bf16.msra.mxu0 %v751
        %1516 = vmatprep.subr.bf16.mxu0 0
        %1517 = vmatpush1.bf16.msra.mxu0 %v750
        %1518 = vmatprep.subr.bf16.mxu0 0
        %1519 = vmatpush1.bf16.msra.mxu0 %v749
        %1520 = vmatprep.subr.bf16.mxu0 0
        %1521 = vmatpush2.bf16.msra.mxu0 %v764
        %1522 = vmatprep.subr.bf16.mxu0 0
        %1523 = vmatpush2.bf16.msra.mxu0 %v763
        %1524 = vmatprep.subr.bf16.mxu0 0
        %1525 = vmatpush2.bf16.msra.mxu0 %v762
        %1526 = vmatprep.subr.bf16.mxu0 0
        %1527 = vmatpush2.bf16.msra.mxu0 %v761
        %1528 = vmatprep.subr.bf16.mxu0 0
        %1529 = vmatpush2.bf16.msra.mxu0 %v760
        %1530 = vmatprep.subr.bf16.mxu0 0
        %1531 = vmatpush2.bf16.msra.mxu0 %v759
        %1532 = vmatprep.subr.bf16.mxu0 0
        %1533 = vmatpush2.bf16.msra.mxu0 %v758
        %1534 = vmatprep.subr.bf16.mxu0 0
        %1535 = vmatpush2.bf16.msra.mxu0 %v757
        %1536 = vmatprep.mubr.bf16.mxu0 %v1379
        %1537 = vmatmul.mubr.bf16.gmra.mxu0 %v1378
        %v1538 = vpop.f32.mrf.mxu0
        %v1539 = vadd.f32 %v1490, %v1538
        %v1540 = vpop.f32.mrf.mxu0
        %v1541 = vpop.f32.mrf.mxu0
        %v1542 = vadd.f32 %v1493, %v1541
        %v1543 = vpop.f32.mrf.mxu0
        %1544 = vmatprep.mubr.bf16.mxu0 %v1386
        %1545 = vmatmul.mubr.bf16.gmra.mxu0 %v1385
        %v1546 = vpop.f32.mrf.mxu0
        %v1547 = vadd.f32 %v1498, %v1546
        %v1548 = vpop.f32.mrf.mxu0
        %v1549 = vpop.f32.mrf.mxu0
        %v1550 = vadd.f32 %v1501, %v1549
        %v1551 = vpop.f32.mrf.mxu0
        %1552 = vdwg.mxu0
        %1553 = vmatprep.subr.bf16.mxu0 0
        %1554 = vmatpush1.bf16.msra.mxu0 0
        %1555 = vmatprep.subr.bf16.mxu0 0
        %1556 = vmatpush1.bf16.msra.mxu0 0
        %1557 = vmatprep.subr.bf16.mxu0 0
        %1558 = vmatpush1.bf16.msra.mxu0 0
        %1559 = vmatprep.subr.bf16.mxu0 0
        %1560 = vmatpush1.bf16.msra.mxu0 0
        %1561 = vmatprep.subr.bf16.mxu0 0
        %1562 = vmatpush1.bf16.msra.mxu0 0
        %1563 = vmatprep.subr.bf16.mxu0 0
        %1564 = vmatpush1.bf16.msra.mxu0 0
        %1565 = vmatprep.subr.bf16.mxu0 0
        %1566 = vmatpush1.bf16.msra.mxu0 %v766
        %1567 = vmatprep.subr.bf16.mxu0 0
        %1568 = vmatpush1.bf16.msra.mxu0 %v765
        %1569 = vmatprep.subr.bf16.mxu0 0
        %1570 = vmatpush2.bf16.msra.mxu0 0
        %1571 = vmatprep.subr.bf16.mxu0 0
        %1572 = vmatpush2.bf16.msra.mxu0 0
        %1573 = vmatprep.subr.bf16.mxu0 0
        %1574 = vmatpush2.bf16.msra.mxu0 0
        %1575 = vmatprep.subr.bf16.mxu0 0
        %1576 = vmatpush2.bf16.msra.mxu0 0
        %1577 = vmatprep.subr.bf16.mxu0 0
        %1578 = vmatpush2.bf16.msra.mxu0 0
        %1579 = vmatprep.subr.bf16.mxu0 0
        %1580 = vmatpush2.bf16.msra.mxu0 0
        %1581 = vmatprep.subr.bf16.mxu0 0
        %1582 = vmatpush2.bf16.msra.mxu0 0
        %1583 = vmatprep.subr.bf16.mxu0 0
        %1584 = vmatpush2.bf16.msra.mxu0 0
        %1585 = vmatprep.mubr.bf16.mxu0 0
        %1586 = vmatmul.mubr.bf16.gmra.mxu0 %v1401
        %v1587 = vpop.f32.mrf.mxu0
        %v1588 = vadd.f32 %v1539, %v1587
        %v1589 = vpop.f32.mrf.mxu0
        %v1590 = vpop.f32.mrf.mxu0
        %v1591 = vadd.f32 %v1542, %v1590
        %v1592 = vpop.f32.mrf.mxu0
        %1593 = vmatprep.mubr.bf16.mxu0 0
        %1594 = vmatmul.mubr.bf16.gmra.mxu0 %v1404
        %v1595 = vpop.f32.mrf.mxu0
        %v1596 = vadd.f32 %v1547, %v1595
        %v1597 = vpop.f32.mrf.mxu0
        %v1598 = vpop.f32.mrf.mxu0
        %v1599 = vadd.f32 %v1550, %v1598
        %v1600 = vpop.f32.mrf.mxu0
        %1601 = vdwg.mxu0
        %v1602 = vmax.f32 %v1309, %v1588
        %v1603 = vmax.f32 %v1310, %v1591
        %v1604 = vmax.f32 %v1311, %v1596
        %v1605 = vmax.f32 %v1312, %v1599
        %s1606 = scalar_lea.vmem %s302, 336 [#allocation2]
        %v1607 = vld [vmem:[%s1606] sm:$0xff]
        %v1608 = vld [vmem:[%s1606 + $0x8] sm:$0xff]
        %v1609 = vld [vmem:[%s1606 + $0x10] sm:$0xff]
        %v1610 = vld [vmem:[%s1606 + $0x18] sm:$0xf]
        %v1611 = vld [vmem:[%s1606 + $0x1c] sm:$0xff]
        %v1612 = vld [vmem:[%s1606 + $0x24] sm:$0xff]
        %v1613 = vld [vmem:[%s1606 + $0x2c] sm:$0xff]
        %v1614 = vld [vmem:[%s1606 + $0x34] sm:$0xf]
        %v1615 = vld [vmem:[%s1606 + $0x38] sm:$0xff]
        %v1616 = vld [vmem:[%s1606 + $0x40] sm:$0xff]
        %v1617 = vld [vmem:[%s1606 + $0x48] sm:$0xff]
        %v1618 = vld [vmem:[%s1606 + $0x50] sm:$0xf]
        %v1619 = vld [vmem:[%s1606 + $0x54] sm:$0xff]
        %v1620 = vld [vmem:[%s1606 + $0x5c] sm:$0xff]
        %v1621 = vld [vmem:[%s1606 + $0x64] sm:$0xff]
        %v1622 = vld [vmem:[%s1606 + $0x6c] sm:$0xf]
        %v1639 = vunpack.c.l.b16 %v1607
        %v1640 = vunpack.c.h.b16 %v1607
        %v1641 = vunpack.c.l.b16 %v1608
        %v1642 = vunpack.c.h.b16 %v1608
        %v1643 = vunpack.c.l.b16 %v1609
        %v1644 = vunpack.c.h.b16 %v1609
        %v1645 = vunpack.c.l.b16 %v1610
        %v1646 = vunpack.c.l.b16 %v1611
        %v1647 = vunpack.c.h.b16 %v1611
        %v1648 = vunpack.c.l.b16 %v1612
        %v1649 = vunpack.c.h.b16 %v1612
        %v1650 = vunpack.c.l.b16 %v1613
        %v1651 = vunpack.c.h.b16 %v1613
        %v1652 = vunpack.c.l.b16 %v1614
        %v1653 = vunpack.c.l.b16 %v1615
        %v1654 = vunpack.c.h.b16 %v1615
        %v1655 = vunpack.c.l.b16 %v1616
        %v1656 = vunpack.c.h.b16 %v1616
        %v1657 = vunpack.c.l.b16 %v1617
        %v1658 = vunpack.c.h.b16 %v1617
        %v1659 = vunpack.c.l.b16 %v1618
        %v1660 = vunpack.c.l.b16 %v1619
        %v1661 = vunpack.c.h.b16 %v1619
        %v1662 = vunpack.c.l.b16 %v1620
        %v1663 = vunpack.c.h.b16 %v1620
        %v1664 = vunpack.c.l.b16 %v1621
        %v1665 = vunpack.c.h.b16 %v1621
        %v1666 = vunpack.c.l.b16 %v1622
        %v1667 = vpack.c.b16 %v1646, %v1639
        %v1668 = vpack.c.b16 %v1647, %v1640
        %v1669 = vpack.c.b16 %v1648, %v1641
        %v1670 = vpack.c.b16 %v1649, %v1642
        %v1671 = vpack.c.b16 %v1650, %v1643
        %v1672 = vpack.c.b16 %v1651, %v1644
        %v1673 = vpack.c.b16 %v1652, %v1645
        %v1674 = vpack.c.b16 %v1660, %v1653
        %v1675 = vpack.c.b16 %v1661, %v1654
        %v1676 = vpack.c.b16 %v1662, %v1655
        %v1677 = vpack.c.b16 %v1663, %v1656
        %v1678 = vpack.c.b16 %v1664, %v1657
        %v1679 = vpack.c.b16 %v1665, %v1658
        %v1680 = vpack.c.b16 %v1666, %v1659
        %v1694 = vsel %vm817, %v1673, 0
        %v1697 = vsel %vm817, %v1680, 0
        %1699 = vmatprep.subr.bf16.mxu0 0
        %1700 = vmatpush1.bf16.msra.mxu0 %v724
        %1701 = vmatprep.subr.bf16.mxu0 0
        %1702 = vmatpush1.bf16.msra.mxu0 %v723
        %1703 = vmatprep.subr.bf16.mxu0 0
        %1704 = vmatpush1.bf16.msra.mxu0 %v722
        %1705 = vmatprep.subr.bf16.mxu0 0
        %1706 = vmatpush1.bf16.msra.mxu0 %v721
        %1707 = vmatprep.subr.bf16.mxu0 0
        %1708 = vmatpush1.bf16.msra.mxu0 %v720
        %1709 = vmatprep.subr.bf16.mxu0 0
        %1710 = vmatpush1.bf16.msra.mxu0 %v719
        %1711 = vmatprep.subr.bf16.mxu0 0
        %1712 = vmatpush1.bf16.msra.mxu0 %v718
        %1713 = vmatprep.subr.bf16.mxu0 0
        %1714 = vmatpush1.bf16.msra.mxu0 %v717
        %1715 = vmatprep.subr.bf16.mxu0 0
        %1716 = vmatpush2.bf16.msra.mxu0 %v732
        %1717 = vmatprep.subr.bf16.mxu0 0
        %1718 = vmatpush2.bf16.msra.mxu0 %v731
        %1719 = vmatprep.subr.bf16.mxu0 0
        %1720 = vmatpush2.bf16.msra.mxu0 %v730
        %1721 = vmatprep.subr.bf16.mxu0 0
        %1722 = vmatpush2.bf16.msra.mxu0 %v729
        %1723 = vmatprep.subr.bf16.mxu0 0
        %1724 = vmatpush2.bf16.msra.mxu0 %v728
        %1725 = vmatprep.subr.bf16.mxu0 0
        %1726 = vmatpush2.bf16.msra.mxu0 %v727
        %1727 = vmatprep.subr.bf16.mxu0 0
        %1728 = vmatpush2.bf16.msra.mxu0 %v726
        %1729 = vmatprep.subr.bf16.mxu0 0
        %1730 = vmatpush2.bf16.msra.mxu0 %v725
        %1731 = vmatprep.mubr.bf16.mxu0 %v1668
        %1732 = vmatmul.mubr.bf16.gmra.mxu0 %v1667
        %v1733 = vpop.f32.mrf.mxu0
        %v1734 = vadd.f32 0.0, %v1733
        %v1735 = vpop.f32.mrf.mxu0
        %v1736 = vpop.f32.mrf.mxu0
        %v1737 = vadd.f32 0.0, %v1736
        %v1738 = vpop.f32.mrf.mxu0
        %1739 = vmatprep.mubr.bf16.mxu0 %v1675
        %1740 = vmatmul.mubr.bf16.gmra.mxu0 %v1674
        %v1741 = vpop.f32.mrf.mxu0
        %v1742 = vadd.f32 0.0, %v1741
        %v1743 = vpop.f32.mrf.mxu0
        %v1744 = vpop.f32.mrf.mxu0
        %v1745 = vadd.f32 0.0, %v1744
        %v1746 = vpop.f32.mrf.mxu0
        %1747 = vdwg.mxu0
        %1748 = vmatprep.subr.bf16.mxu0 0
        %1749 = vmatpush1.bf16.msra.mxu0 %v740
        %1750 = vmatprep.subr.bf16.mxu0 0
        %1751 = vmatpush1.bf16.msra.mxu0 %v739
        %1752 = vmatprep.subr.bf16.mxu0 0
        %1753 = vmatpush1.bf16.msra.mxu0 %v738
        %1754 = vmatprep.subr.bf16.mxu0 0
        %1755 = vmatpush1.bf16.msra.mxu0 %v737
        %1756 = vmatprep.subr.bf16.mxu0 0
        %1757 = vmatpush1.bf16.msra.mxu0 %v736
        %1758 = vmatprep.subr.bf16.mxu0 0
        %1759 = vmatpush1.bf16.msra.mxu0 %v735
        %1760 = vmatprep.subr.bf16.mxu0 0
        %1761 = vmatpush1.bf16.msra.mxu0 %v734
        %1762 = vmatprep.subr.bf16.mxu0 0
        %1763 = vmatpush1.bf16.msra.mxu0 %v733
        %1764 = vmatprep.subr.bf16.mxu0 0
        %1765 = vmatpush2.bf16.msra.mxu0 %v748
        %1766 = vmatprep.subr.bf16.mxu0 0
        %1767 = vmatpush2.bf16.msra.mxu0 %v747
        %1768 = vmatprep.subr.bf16.mxu0 0
        %1769 = vmatpush2.bf16.msra.mxu0 %v746
        %1770 = vmatprep.subr.bf16.mxu0 0
        %1771 = vmatpush2.bf16.msra.mxu0 %v745
        %1772 = vmatprep.subr.bf16.mxu0 0
        %1773 = vmatpush2.bf16.msra.mxu0 %v744
        %1774 = vmatprep.subr.bf16.mxu0 0
        %1775 = vmatpush2.bf16.msra.mxu0 %v743
        %1776 = vmatprep.subr.bf16.mxu0 0
        %1777 = vmatpush2.bf16.msra.mxu0 %v742
        %1778 = vmatprep.subr.bf16.mxu0 0
        %1779 = vmatpush2.bf16.msra.mxu0 %v741
        %1780 = vmatprep.mubr.bf16.mxu0 %v1670
        %1781 = vmatmul.mubr.bf16.gmra.mxu0 %v1669
        %v1782 = vpop.f32.mrf.mxu0
        %v1783 = vadd.f32 %v1734, %v1782
        %v1784 = vpop.f32.mrf.mxu0
        %v1785 = vpop.f32.mrf.mxu0
        %v1786 = vadd.f32 %v1737, %v1785
        %v1787 = vpop.f32.mrf.mxu0
        %1788 = vmatprep.mubr.bf16.mxu0 %v1677
        %1789 = vmatmul.mubr.bf16.gmra.mxu0 %v1676
        %v1790 = vpop.f32.mrf.mxu0
        %v1791 = vadd.f32 %v1742, %v1790
        %v1792 = vpop.f32.mrf.mxu0
        %v1793 = vpop.f32.mrf.mxu0
        %v1794 = vadd.f32 %v1745, %v1793
        %v1795 = vpop.f32.mrf.mxu0
        %1796 = vdwg.mxu0
        %1797 = vmatprep.subr.bf16.mxu0 0
        %1798 = vmatpush1.bf16.msra.mxu0 %v756
        %1799 = vmatprep.subr.bf16.mxu0 0
        %1800 = vmatpush1.bf16.msra.mxu0 %v755
        %1801 = vmatprep.subr.bf16.mxu0 0
        %1802 = vmatpush1.bf16.msra.mxu0 %v754
        %1803 = vmatprep.subr.bf16.mxu0 0
        %1804 = vmatpush1.bf16.msra.mxu0 %v753
        %1805 = vmatprep.subr.bf16.mxu0 0
        %1806 = vmatpush1.bf16.msra.mxu0 %v752
        %1807 = vmatprep.subr.bf16.mxu0 0
        %1808 = vmatpush1.bf16.msra.mxu0 %v751
        %1809 = vmatprep.subr.bf16.mxu0 0
        %1810 = vmatpush1.bf16.msra.mxu0 %v750
        %1811 = vmatprep.subr.bf16.mxu0 0
        %1812 = vmatpush1.bf16.msra.mxu0 %v749
        %1813 = vmatprep.subr.bf16.mxu0 0
        %1814 = vmatpush2.bf16.msra.mxu0 %v764
        %1815 = vmatprep.subr.bf16.mxu0 0
        %1816 = vmatpush2.bf16.msra.mxu0 %v763
        %1817 = vmatprep.subr.bf16.mxu0 0
        %1818 = vmatpush2.bf16.msra.mxu0 %v762
        %1819 = vmatprep.subr.bf16.mxu0 0
        %1820 = vmatpush2.bf16.msra.mxu0 %v761
        %1821 = vmatprep.subr.bf16.mxu0 0
        %1822 = vmatpush2.bf16.msra.mxu0 %v760
        %1823 = vmatprep.subr.bf16.mxu0 0
        %1824 = vmatpush2.bf16.msra.mxu0 %v759
        %1825 = vmatprep.subr.bf16.mxu0 0
        %1826 = vmatpush2.bf16.msra.mxu0 %v758
        %1827 = vmatprep.subr.bf16.mxu0 0
        %1828 = vmatpush2.bf16.msra.mxu0 %v757
        %1829 = vmatprep.mubr.bf16.mxu0 %v1672
        %1830 = vmatmul.mubr.bf16.gmra.mxu0 %v1671
        %v1831 = vpop.f32.mrf.mxu0
        %v1832 = vadd.f32 %v1783, %v1831
        %v1833 = vpop.f32.mrf.mxu0
        %v1834 = vpop.f32.mrf.mxu0
        %v1835 = vadd.f32 %v1786, %v1834
        %v1836 = vpop.f32.mrf.mxu0
        %1837 = vmatprep.mubr.bf16.mxu0 %v1679
        %1838 = vmatmul.mubr.bf16.gmra.mxu0 %v1678
        %v1839 = vpop.f32.mrf.mxu0
        %v1840 = vadd.f32 %v1791, %v1839
        %v1841 = vpop.f32.mrf.mxu0
        %v1842 = vpop.f32.mrf.mxu0
        %v1843 = vadd.f32 %v1794, %v1842
        %v1844 = vpop.f32.mrf.mxu0
        %1845 = vdwg.mxu0
        %1846 = vmatprep.subr.bf16.mxu0 0
        %1847 = vmatpush1.bf16.msra.mxu0 0
        %1848 = vmatprep.subr.bf16.mxu0 0
        %1849 = vmatpush1.bf16.msra.mxu0 0
        %1850 = vmatprep.subr.bf16.mxu0 0
        %1851 = vmatpush1.bf16.msra.mxu0 0
        %1852 = vmatprep.subr.bf16.mxu0 0
        %1853 = vmatpush1.bf16.msra.mxu0 0
        %1854 = vmatprep.subr.bf16.mxu0 0
        %1855 = vmatpush1.bf16.msra.mxu0 0
        %1856 = vmatprep.subr.bf16.mxu0 0
        %1857 = vmatpush1.bf16.msra.mxu0 0
        %1858 = vmatprep.subr.bf16.mxu0 0
        %1859 = vmatpush1.bf16.msra.mxu0 %v766
        %1860 = vmatprep.subr.bf16.mxu0 0
        %1861 = vmatpush1.bf16.msra.mxu0 %v765
        %1862 = vmatprep.subr.bf16.mxu0 0
        %1863 = vmatpush2.bf16.msra.mxu0 0
        %1864 = vmatprep.subr.bf16.mxu0 0
        %1865 = vmatpush2.bf16.msra.mxu0 0
        %1866 = vmatprep.subr.bf16.mxu0 0
        %1867 = vmatpush2.bf16.msra.mxu0 0
        %1868 = vmatprep.subr.bf16.mxu0 0
        %1869 = vmatpush2.bf16.msra.mxu0 0
        %1870 = vmatprep.subr.bf16.mxu0 0
        %1871 = vmatpush2.bf16.msra.mxu0 0
        %1872 = vmatprep.subr.bf16.mxu0 0
        %1873 = vmatpush2.bf16.msra.mxu0 0
        %1874 = vmatprep.subr.bf16.mxu0 0
        %1875 = vmatpush2.bf16.msra.mxu0 0
        %1876 = vmatprep.subr.bf16.mxu0 0
        %1877 = vmatpush2.bf16.msra.mxu0 0
        %1878 = vmatprep.mubr.bf16.mxu0 0
        %1879 = vmatmul.mubr.bf16.gmra.mxu0 %v1694
        %v1880 = vpop.f32.mrf.mxu0
        %v1881 = vadd.f32 %v1832, %v1880
        %v1882 = vpop.f32.mrf.mxu0
        %v1883 = vpop.f32.mrf.mxu0
        %v1884 = vadd.f32 %v1835, %v1883
        %v1885 = vpop.f32.mrf.mxu0
        %1886 = vmatprep.mubr.bf16.mxu0 0
        %1887 = vmatmul.mubr.bf16.gmra.mxu0 %v1697
        %v1888 = vpop.f32.mrf.mxu0
        %v1889 = vadd.f32 %v1840, %v1888
        %v1890 = vpop.f32.mrf.mxu0
        %v1891 = vpop.f32.mrf.mxu0
        %v1892 = vadd.f32 %v1843, %v1891
        %v1893 = vpop.f32.mrf.mxu0
        %1894 = vdwg.mxu0
        %v1895 = vmax.f32 %v1602, %v1881
        %v1896 = vmax.f32 %v1603, %v1884
        %v1897 = vmax.f32 %v1604, %v1889
        %v1898 = vmax.f32 %v1605, %v1892
        %v1899 = vld [vmem:[%s2] sm:$0x1]
        %v1901 = vlaneseq
        %v1902 = vshrl.u32 %v1901, 7
        %v1903 = vsub.s32 0, %v1902
        %v1904 = vrot.slane %v1899, %v1903
        %v1906 = vadd.f32 %v1895, %v1904
        %v1907 = vadd.f32 %v1896, %v1904
        %v1908 = vadd.f32 %v1897, %v1904
        %v1909 = vadd.f32 %v1898, %v1904
        %v1910 = vmax.f32 %v1906, 0.0
        %v1911 = vmax.f32 %v1907, 0.0
        %v1912 = vmax.f32 %v1908, 0.0
        %v1913 = vmax.f32 %v1909, 0.0
        %v1914 = vpack.c.bf16 %v1911, %v1910
        %v1915 = vpack.c.bf16 %v1913, %v1912
        %v1918 = vunpack.c.l.b16 %v1914
        %v1919 = vunpack.c.h.b16 %v1914
        %v1920 = vunpack.c.l.b16 %v1915
        %v1921 = vunpack.c.h.b16 %v1915
        %v1922 = vpack.c.b16 %v1918, %v1918
        %v1923 = vpack.c.b16 %v1919, %v1919
        %v1924 = vpack.c.b16 %v1920, %v1920
        %v1925 = vpack.c.b16 %v1921, %v1921
        %1930 = vst [vmem:[%s328] sm:$0xf] %v1922
        %1931 = vst [vmem:[%s328 + $0x4] sm:$0xf] %v1923
        %1932 = vst [vmem:[%s328 + $0x8] sm:$0xf] %v1924
        %1933 = vst [vmem:[%s328 + $0xc] sm:$0xf] %v1925
        %s1934 = smul.u32 4, %s14
        %p1935 = scmp.lt.s32.totalorder %s1934, 7
        %s1936 = scalar_select %p1935, %s1934, 7
        %s1937 = smul.addr %s1936, 4
        %s1938 = scalar_lea.vmem %s3, %s1937
        // Predicated region
        $region59: #{convnet_forward.4} parent=53 // pred_check
          %p1939 = pneg %p100
        $region60: #{convnet_forward.4} parent=53 // pred_check_branch
          %1941 = sbr.rel (%p1939) target = $region62
        $region61: #{convnet_forward.4} parent=53 // pred_region
          %s1942 = smul.u32 4, %s14
        $region62: #{convnet_forward.4} parent=53 // pred_fallthru
          _
      $region54: #{convnet_forward.4} parent=5 // pred_fallthru
        _
      %p1943 = scmp.le.s32.totalorder 2, %s9
      // Predicated region
      $region63: #{convnet_forward.4} parent=5 // pred_check
        %p1944 = pneg %p1943
      $region64: #{convnet_forward.4} parent=5 // pred_check_branch
        %1946 = sbr.rel (%p1944) target = $region66
      $region65: #{convnet_forward.4} parent=5 // pred_region
        %s1947 = ssub.s32 %s9, 2
        // Predicated region
        $region67: #{convnet_forward.4} parent=65 // pred_check
          %p1948 = pneg %p106
        $region68: #{convnet_forward.4} parent=65 // pred_check_branch
          %1950 = sbr.rel (%p1948) target = $region70
        $region69: #{convnet_forward.4} parent=65 // pred_region
          %s1951 = smul.u32 4, %s15
          %p1952 = scmp.lt.s32.totalorder %s1951, 7
          %s1953 = scalar_select %p1952, %s1951, 7
          %s1954 = smul.addr %s1953, 4
          %s1955 = scalar_lea.vmem %s3, %s1954
        $region70: #{convnet_forward.4} parent=65 // pred_fallthru
          _
      $region66: #{convnet_forward.4} parent=5 // pred_fallthru
        _
    $region6: #{convnet_forward.4} parent=1 // loop_footer
      %s13 = sadd.s32 1, %s9
    $region7: #{convnet_forward.4} parent=1 // loop_footer_branch
      %8 = sbr.rel target = $region3
    $region8: #{convnet_forward.4} parent=1 // loop_exit
      _

// kernel: convnet_forward.5
$region0: #{convnet_forward.5}
  #allocation0 [shape = 'u32[]', space=smem, size = 0x4, offset = 0x4, fixed_abs, tag = 'smem constant byte address 0x4 - core index']
  #allocation1 [shape = 'u32[144,128]{1,0:T(1,128)}', space=vmem, size = 0x12000, scoped, tag = 'internal scratch']
  %s0 = inlined_call_operand.vmem [shape: bf16[8,1600], index: 0, kind: input, shape index: {}]
  %s1 = inlined_call_operand.vmem [shape: bf16[1600,128], index: 1, kind: input, shape index: {}]
  %s2 = inlined_call_operand.vmem [shape: f32[1,128], index: 2, kind: input, shape index: {}]
  %s3 = inlined_call_operand.vmem [shape: bf16[128,128], index: 3, kind: input, shape index: {}]
  %s4 = inlined_call_operand.vmem [shape: f32[1,128], index: 4, kind: input, shape index: {}]
  %s5 = inlined_call_operand.vmem [shape: f32[8,128], index: 5, kind: output, shape index: {}]
  %s6 = sld [smem:[#allocation0]]
  $region30: #{convnet_forward.5} parent=0
    _
  %s8 = ssub.s32 1, %s6
  %s9 = scalar_select 0, %s8, %s6
  // Predicated region
  $region2: #{convnet_forward.5} parent=0 // pred_check
    _
  $region3: #{convnet_forward.5} parent=0 // pred_check_branch
    %11 = sbr.rel (0) target = $region5
  $region4: #{convnet_forward.5} parent=0 // pred_region
    _
  $region5: #{convnet_forward.5} parent=0 // pred_fallthru
    _
  // Predicated region
  $region6: #{convnet_forward.5} parent=0 // pred_check
    _
  $region7: #{convnet_forward.5} parent=0 // pred_check_branch
    %13 = sbr.rel (0) target = $region9
  $region8: #{convnet_forward.5} parent=0 // pred_region
    _
  $region9: #{convnet_forward.5} parent=0 // pred_fallthru
    _
  // Predicated region
  $region10: #{convnet_forward.5} parent=0 // pred_check
    _
  $region11: #{convnet_forward.5} parent=0 // pred_check_branch
    %15 = sbr.rel (0) target = $region13
  $region12: #{convnet_forward.5} parent=0 // pred_region
    _
  $region13: #{convnet_forward.5} parent=0 // pred_fallthru
    _
  // Predicated region
  $region14: #{convnet_forward.5} parent=0 // pred_check
    _
  $region15: #{convnet_forward.5} parent=0 // pred_check_branch
    %17 = sbr.rel (0) target = $region17
  $region16: #{convnet_forward.5} parent=0 // pred_region
    _
  $region17: #{convnet_forward.5} parent=0 // pred_fallthru
    _
  // Predicated region
  $region18: #{convnet_forward.5} parent=0 // pred_check
    _
  $region19: #{convnet_forward.5} parent=0 // pred_check_branch
    %19 = sbr.rel (0) target = $region21
  $region20: #{convnet_forward.5} parent=0 // pred_region
    _
  $region21: #{convnet_forward.5} parent=0 // pred_fallthru
    _
  %v21 = vld [vmem:[%s0] sm:$0xff]
  %v22 = vld [vmem:[%s0 + $0x8] sm:$0xff]
  %v23 = vld [vmem:[%s0 + $0x10] sm:$0xff]
  %v24 = vld [vmem:[%s0 + $0x18] sm:$0xff]
  %v25 = vld [vmem:[%s0 + $0x20] sm:$0xff]
  %v26 = vld [vmem:[%s0 + $0x28] sm:$0xff]
  %v27 = vld [vmem:[%s0 + $0x30] sm:$0xf]
  %v28 = vld [vmem:[%s1] sm:$0xf]
  %v29 = vld [vmem:[%s1 + $0x4] sm:$0xf]
  %v30 = vld [vmem:[%s1 + $0x8] sm:$0xf]
  %v31 = vld [vmem:[%s1 + $0xc] sm:$0xf]
  %v32 = vld [vmem:[%s1 + $0x10] sm:$0xf]
  %v33 = vld [vmem:[%s1 + $0x14] sm:$0xf]
  %v34 = vld [vmem:[%s1 + $0x18] sm:$0xf]
  %v35 = vld [vmem:[%s1 + $0x1c] sm:$0xf]
  %v36 = vld [vmem:[%s1 + $0x20] sm:$0xf]
  %v37 = vld [vmem:[%s1 + $0x24] sm:$0xf]
  %v38 = vld [vmem:[%s1 + $0x28] sm:$0xf]
  %v39 = vld [vmem:[%s1 + $0x2c] sm:$0xf]
  %v40 = vld [vmem:[%s1 + $0x30] sm:$0xf]
  %v41 = vld [vmem:[%s1 + $0x34] sm:$0xf]
  %v42 = vld [vmem:[%s1 + $0x38] sm:$0xf]
  %v43 = vld [vmem:[%s1 + $0x3c] sm:$0xf]
  %v44 = vld [vmem:[%s1 + $0x40] sm:$0xf]
  %v45 = vld [vmem:[%s1 + $0x44] sm:$0xf]
  %v46 = vld [vmem:[%s1 + $0x48] sm:$0xf]
  %v47 = vld [vmem:[%s1 + $0x4c] sm:$0xf]
  %v48 = vld [vmem:[%s1 + $0x50] sm:$0xf]
  %v49 = vld [vmem:[%s1 + $0x54] sm:$0xf]
  %v50 = vld [vmem:[%s1 + $0x58] sm:$0xf]
  %v51 = vld [vmem:[%s1 + $0x5c] sm:$0xf]
  %v52 = vld [vmem:[%s1 + $0x60] sm:$0xf]
  %v53 = vld [vmem:[%s1 + $0x64] sm:$0xf]
  %v54 = vld [vmem:[%s1 + $0x68] sm:$0xf]
  %v55 = vld [vmem:[%s1 + $0x6c] sm:$0xf]
  %v56 = vld [vmem:[%s1 + $0x70] sm:$0xf]
  %v57 = vld [vmem:[%s1 + $0x74] sm:$0xf]
  %v58 = vld [vmem:[%s1 + $0x78] sm:$0xf]
  %v59 = vld [vmem:[%s1 + $0x7c] sm:$0xf]
  %v60 = vld [vmem:[%s1 + $0x80] sm:$0xf]
  %v61 = vld [vmem:[%s1 + $0x84] sm:$0xf]
  %v62 = vld [vmem:[%s1 + $0x88] sm:$0xf]
  %v63 = vld [vmem:[%s1 + $0x8c] sm:$0xf]
  %v64 = vld [vmem:[%s1 + $0x90] sm:$0xf]
  %v65 = vld [vmem:[%s1 + $0x94] sm:$0xf]
  %v66 = vld [vmem:[%s1 + $0x98] sm:$0xf]
  %v67 = vld [vmem:[%s1 + $0x9c] sm:$0xf]
  %v68 = vld [vmem:[%s1 + $0xa0] sm:$0xf]
  %v69 = vld [vmem:[%s1 + $0xa4] sm:$0xf]
  %v70 = vld [vmem:[%s1 + $0xa8] sm:$0xf]
  %v71 = vld [vmem:[%s1 + $0xac] sm:$0xf]
  %v72 = vld [vmem:[%s1 + $0xb0] sm:$0xf]
  %v73 = vld [vmem:[%s1 + $0xb4] sm:$0xf]
  %v74 = vld [vmem:[%s1 + $0xb8] sm:$0xf]
  %v75 = vld [vmem:[%s1 + $0xbc] sm:$0xf]
  %v76 = vld [vmem:[%s1 + $0xc0] sm:$0xf]
  %v77 = vld [vmem:[%s1 + $0xc4] sm:$0xf]
  %v78 = vld [vmem:[%s1 + $0xc8] sm:$0xf]
  %v79 = vld [vmem:[%s1 + $0xcc] sm:$0xf]
  %v80 = vld [vmem:[%s1 + $0xd0] sm:$0xf]
  %v81 = vld [vmem:[%s1 + $0xd4] sm:$0xf]
  %v82 = vld [vmem:[%s1 + $0xd8] sm:$0xf]
  %v83 = vld [vmem:[%s1 + $0xdc] sm:$0xf]
  %v84 = vld [vmem:[%s1 + $0xe0] sm:$0xf]
  %v85 = vld [vmem:[%s1 + $0xe4] sm:$0xf]
  %v86 = vld [vmem:[%s1 + $0xe8] sm:$0xf]
  %v87 = vld [vmem:[%s1 + $0xec] sm:$0xf]
  %v88 = vld [vmem:[%s1 + $0xf0] sm:$0xf]
  %v89 = vld [vmem:[%s1 + $0xf4] sm:$0xf]
  %v90 = vld [vmem:[%s1 + $0xf8] sm:$0xf]
  %v91 = vld [vmem:[%s1 + $0xfc] sm:$0xf]
  %v92 = vld [vmem:[%s1 + $0x100] sm:$0xf]
  %v93 = vld [vmem:[%s1 + $0x104] sm:$0xf]
  %v94 = vld [vmem:[%s1 + $0x108] sm:$0xf]
  %v95 = vld [vmem:[%s1 + $0x10c] sm:$0xf]
  %v96 = vld [vmem:[%s1 + $0x110] sm:$0xf]
  %v97 = vld [vmem:[%s1 + $0x114] sm:$0xf]
  %v98 = vld [vmem:[%s1 + $0x118] sm:$0xf]
  %v99 = vld [vmem:[%s1 + $0x11c] sm:$0xf]
  %v100 = vld [vmem:[%s1 + $0x120] sm:$0xf]
  %v101 = vld [vmem:[%s1 + $0x124] sm:$0xf]
  %v102 = vld [vmem:[%s1 + $0x128] sm:$0xf]
  %v103 = vld [vmem:[%s1 + $0x12c] sm:$0xf]
  %v104 = vld [vmem:[%s1 + $0x130] sm:$0xf]
  %v105 = vld [vmem:[%s1 + $0x134] sm:$0xf]
  %v106 = vld [vmem:[%s1 + $0x138] sm:$0xf]
  %v107 = vld [vmem:[%s1 + $0x13c] sm:$0xf]
  %v108 = vld [vmem:[%s1 + $0x140] sm:$0xf]
  %v109 = vld [vmem:[%s1 + $0x144] sm:$0xf]
  %v110 = vld [vmem:[%s1 + $0x148] sm:$0xf]
  %v111 = vld [vmem:[%s1 + $0x14c] sm:$0xf]
  %v112 = vld [vmem:[%s1 + $0x150] sm:$0xf]
  %v113 = vld [vmem:[%s1 + $0x154] sm:$0xf]
  %v114 = vld [vmem:[%s1 + $0x158] sm:$0xf]
  %v115 = vld [vmem:[%s1 + $0x15c] sm:$0xf]
  %v116 = vld [vmem:[%s1 + $0x160] sm:$0xf]
  %v117 = vld [vmem:[%s1 + $0x164] sm:$0xf]
  %v118 = vld [vmem:[%s1 + $0x168] sm:$0xf]
  %v119 = vld [vmem:[%s1 + $0x16c] sm:$0xf]
  %v120 = vld [vmem:[%s1 + $0x170] sm:$0xf]
  %v121 = vld [vmem:[%s1 + $0x174] sm:$0xf]
  %v122 = vld [vmem:[%s1 + $0x178] sm:$0xf]
  %v123 = vld [vmem:[%s1 + $0x17c] sm:$0xf]
  %v124 = vld [vmem:[%s1 + $0x180] sm:$0xf]
  %v125 = vld [vmem:[%s1 + $0x184] sm:$0xf]
  %v126 = vld [vmem:[%s1 + $0x188] sm:$0xf]
  %v127 = vld [vmem:[%s1 + $0x18c] sm:$0xf]
  %v128 = vld [vmem:[%s1 + $0x190] sm:$0xf]
  %v129 = vld [vmem:[%s1 + $0x194] sm:$0xf]
  %v130 = vld [vmem:[%s1 + $0x198] sm:$0xf]
  %v131 = vld [vmem:[%s1 + $0x19c] sm:$0xf]
  %v132 = vld [vmem:[%s1 + $0x1a0] sm:$0xf]
  %v133 = vld [vmem:[%s1 + $0x1a4] sm:$0xf]
  %v134 = vld [vmem:[%s1 + $0x1a8] sm:$0xf]
  %v135 = vld [vmem:[%s1 + $0x1ac] sm:$0xf]
  %v136 = vld [vmem:[%s1 + $0x1b0] sm:$0xf]
  %v137 = vld [vmem:[%s1 + $0x1b4] sm:$0xf]
  %v138 = vld [vmem:[%s1 + $0x1b8] sm:$0xf]
  %v139 = vld [vmem:[%s1 + $0x1bc] sm:$0xf]
  %v140 = vld [vmem:[%s1 + $0x1c0] sm:$0xf]
  %v141 = vld [vmem:[%s1 + $0x1c4] sm:$0xf]
  %v142 = vld [vmem:[%s1 + $0x1c8] sm:$0xf]
  %v143 = vld [vmem:[%s1 + $0x1cc] sm:$0xf]
  %v144 = vld [vmem:[%s1 + $0x1d0] sm:$0xf]
  %v145 = vld [vmem:[%s1 + $0x1d4] sm:$0xf]
  %v146 = vld [vmem:[%s1 + $0x1d8] sm:$0xf]
  %v147 = vld [vmem:[%s1 + $0x1dc] sm:$0xf]
  %v148 = vld [vmem:[%s1 + $0x1e0] sm:$0xf]
  %v149 = vld [vmem:[%s1 + $0x1e4] sm:$0xf]
  %v150 = vld [vmem:[%s1 + $0x1e8] sm:$0xf]
  %v151 = vld [vmem:[%s1 + $0x1ec] sm:$0xf]
  %v152 = vld [vmem:[%s1 + $0x1f0] sm:$0xf]
  %v153 = vld [vmem:[%s1 + $0x1f4] sm:$0xf]
  %v154 = vld [vmem:[%s1 + $0x1f8] sm:$0xf]
  %v155 = vld [vmem:[%s1 + $0x1fc] sm:$0xf]
  %v156 = vld [vmem:[%s1 + $0x200] sm:$0xf]
  %v157 = vld [vmem:[%s1 + $0x204] sm:$0xf]
  %v158 = vld [vmem:[%s1 + $0x208] sm:$0xf]
  %v159 = vld [vmem:[%s1 + $0x20c] sm:$0xf]
  %v160 = vld [vmem:[%s1 + $0x210] sm:$0xf]
  %v161 = vld [vmem:[%s1 + $0x214] sm:$0xf]
  %v162 = vld [vmem:[%s1 + $0x218] sm:$0xf]
  %v163 = vld [vmem:[%s1 + $0x21c] sm:$0xf]
  %v164 = vld [vmem:[%s1 + $0x220] sm:$0xf]
  %v165 = vld [vmem:[%s1 + $0x224] sm:$0xf]
  %v166 = vld [vmem:[%s1 + $0x228] sm:$0xf]
  %v167 = vld [vmem:[%s1 + $0x22c] sm:$0xf]
  %v168 = vld [vmem:[%s1 + $0x230] sm:$0xf]
  %v169 = vld [vmem:[%s1 + $0x234] sm:$0xf]
  %v170 = vld [vmem:[%s1 + $0x238] sm:$0xf]
  %v171 = vld [vmem:[%s1 + $0x23c] sm:$0xf]
  %v172 = vld [vmem:[%s1 + $0x240] sm:$0xf]
  %v173 = vld [vmem:[%s1 + $0x244] sm:$0xf]
  %v174 = vld [vmem:[%s1 + $0x248] sm:$0xf]
  %v175 = vld [vmem:[%s1 + $0x24c] sm:$0xf]
  %v176 = vld [vmem:[%s1 + $0x250] sm:$0xf]
  %v177 = vld [vmem:[%s1 + $0x254] sm:$0xf]
  %v178 = vld [vmem:[%s1 + $0x258] sm:$0xf]
  %v179 = vld [vmem:[%s1 + $0x25c] sm:$0xf]
  %v180 = vld [vmem:[%s1 + $0x260] sm:$0xf]
  %v181 = vld [vmem:[%s1 + $0x264] sm:$0xf]
  %v182 = vld [vmem:[%s1 + $0x268] sm:$0xf]
  %v183 = vld [vmem:[%s1 + $0x26c] sm:$0xf]
  %v184 = vld [vmem:[%s1 + $0x270] sm:$0xf]
  %v185 = vld [vmem:[%s1 + $0x274] sm:$0xf]
  %v186 = vld [vmem:[%s1 + $0x278] sm:$0xf]
  %v187 = vld [vmem:[%s1 + $0x27c] sm:$0xf]
  %v188 = vld [vmem:[%s1 + $0x280] sm:$0xf]
  %v189 = vld [vmem:[%s1 + $0x284] sm:$0xf]
  %v190 = vld [vmem:[%s1 + $0x288] sm:$0xf]
  %v191 = vld [vmem:[%s1 + $0x28c] sm:$0xf]
  %v192 = vld [vmem:[%s1 + $0x290] sm:$0xf]
  %v193 = vld [vmem:[%s1 + $0x294] sm:$0xf]
  %v194 = vld [vmem:[%s1 + $0x298] sm:$0xf]
  %v195 = vld [vmem:[%s1 + $0x29c] sm:$0xf]
  %v196 = vld [vmem:[%s1 + $0x2a0] sm:$0xf]
  %v197 = vld [vmem:[%s1 + $0x2a4] sm:$0xf]
  %v198 = vld [vmem:[%s1 + $0x2a8] sm:$0xf]
  %v199 = vld [vmem:[%s1 + $0x2ac] sm:$0xf]
  %v200 = vld [vmem:[%s1 + $0x2b0] sm:$0xf]
  %v201 = vld [vmem:[%s1 + $0x2b4] sm:$0xf]
  %v202 = vld [vmem:[%s1 + $0x2b8] sm:$0xf]
  %v203 = vld [vmem:[%s1 + $0x2bc] sm:$0xf]
  %v204 = vld [vmem:[%s1 + $0x2c0] sm:$0xf]
  %v205 = vld [vmem:[%s1 + $0x2c4] sm:$0xf]
  %v206 = vld [vmem:[%s1 + $0x2c8] sm:$0xf]
  %v207 = vld [vmem:[%s1 + $0x2cc] sm:$0xf]
  %v208 = vld [vmem:[%s1 + $0x2d0] sm:$0xf]
  %v209 = vld [vmem:[%s1 + $0x2d4] sm:$0xf]
  %v210 = vld [vmem:[%s1 + $0x2d8] sm:$0xf]
  %v211 = vld [vmem:[%s1 + $0x2dc] sm:$0xf]
  %v212 = vld [vmem:[%s1 + $0x2e0] sm:$0xf]
  %v213 = vld [vmem:[%s1 + $0x2e4] sm:$0xf]
  %v214 = vld [vmem:[%s1 + $0x2e8] sm:$0xf]
  %v215 = vld [vmem:[%s1 + $0x2ec] sm:$0xf]
  %v216 = vld [vmem:[%s1 + $0x2f0] sm:$0xf]
  %v217 = vld [vmem:[%s1 + $0x2f4] sm:$0xf]
  %v218 = vld [vmem:[%s1 + $0x2f8] sm:$0xf]
  %v219 = vld [vmem:[%s1 + $0x2fc] sm:$0xf]
  %v220 = vld [vmem:[%s1 + $0x300] sm:$0xf]
  %v221 = vld [vmem:[%s1 + $0x304] sm:$0xf]
  %v222 = vld [vmem:[%s1 + $0x308] sm:$0xf]
  %v223 = vld [vmem:[%s1 + $0x30c] sm:$0xf]
  %v224 = vld [vmem:[%s1 + $0x310] sm:$0xf]
  %v225 = vld [vmem:[%s1 + $0x314] sm:$0xf]
  %v226 = vld [vmem:[%s1 + $0x318] sm:$0xf]
  %v227 = vld [vmem:[%s1 + $0x31c] sm:$0xf]
  %v228 = vld [vmem:[%s2] sm:$0x1]
  %v230 = vlaneseq
  %v231 = vshrl.u32 %v230, 7
  %v232 = vsub.s32 0, %v231
  %v233 = vrot.slane %v228, %v232
  %v242 = vunpack.c.l.b16 %v21
  %v243 = vunpack.c.h.b16 %v21
  %v244 = vunpack.c.l.b16 %v22
  %v245 = vunpack.c.h.b16 %v22
  %v246 = vunpack.c.l.b16 %v23
  %v247 = vunpack.c.h.b16 %v23
  %v248 = vunpack.c.l.b16 %v24
  %v249 = vunpack.c.h.b16 %v24
  %v250 = vunpack.c.l.b16 %v25
  %v251 = vunpack.c.h.b16 %v25
  %v252 = vunpack.c.l.b16 %v26
  %v253 = vunpack.c.h.b16 %v26
  %v254 = vunpack.c.l.b16 %v27
  %v255 = vpack.c.b16 %v242, %v242
  %v256 = vpack.c.b16 %v243, %v243
  %v257 = vpack.c.b16 %v244, %v244
  %v258 = vpack.c.b16 %v245, %v245
  %v259 = vpack.c.b16 %v246, %v246
  %v260 = vpack.c.b16 %v247, %v247
  %v261 = vpack.c.b16 %v248, %v248
  %v262 = vpack.c.b16 %v249, %v249
  %v263 = vpack.c.b16 %v250, %v250
  %v264 = vpack.c.b16 %v251, %v251
  %v265 = vpack.c.b16 %v252, %v252
  %v266 = vpack.c.b16 %v253, %v253
  %v267 = vpack.c.b16 %v254, %v254
  %v480 = vunpack.c.l.b16 %v28
  %v481 = vunpack.c.l.b16 %v29
  %v482 = vunpack.c.l.b16 %v30
  %v483 = vunpack.c.l.b16 %v31
  %v484 = vunpack.c.l.b16 %v32
  %v485 = vunpack.c.l.b16 %v33
  %v486 = vunpack.c.l.b16 %v34
  %v487 = vunpack.c.l.b16 %v35
  %v488 = vunpack.c.l.b16 %v36
  %v489 = vunpack.c.l.b16 %v37
  %v490 = vunpack.c.l.b16 %v38
  %v491 = vunpack.c.l.b16 %v39
  %v492 = vunpack.c.l.b16 %v40
  %v493 = vunpack.c.l.b16 %v41
  %v494 = vunpack.c.l.b16 %v42
  %v495 = vunpack.c.l.b16 %v43
  %v496 = vunpack.c.l.b16 %v44
  %v497 = vunpack.c.l.b16 %v45
  %v498 = vunpack.c.l.b16 %v46
  %v499 = vunpack.c.l.b16 %v47
  %v500 = vunpack.c.l.b16 %v48
  %v501 = vunpack.c.l.b16 %v49
  %v502 = vunpack.c.l.b16 %v50
  %v503 = vunpack.c.l.b16 %v51
  %v504 = vunpack.c.l.b16 %v52
  %v505 = vunpack.c.l.b16 %v53
  %v506 = vunpack.c.l.b16 %v54
  %v507 = vunpack.c.l.b16 %v55
  %v508 = vunpack.c.l.b16 %v56
  %v509 = vunpack.c.l.b16 %v57
  %v510 = vunpack.c.l.b16 %v58
  %v511 = vunpack.c.l.b16 %v59
  %v512 = vunpack.c.l.b16 %v60
  %v513 = vunpack.c.l.b16 %v61
  %v514 = vunpack.c.l.b16 %v62
  %v515 = vunpack.c.l.b16 %v63
  %v516 = vunpack.c.l.b16 %v64
  %v517 = vunpack.c.l.b16 %v65
  %v518 = vunpack.c.l.b16 %v66
  %v519 = vunpack.c.l.b16 %v67
  %v520 = vunpack.c.l.b16 %v68
  %v521 = vunpack.c.l.b16 %v69
  %v522 = vunpack.c.l.b16 %v70
  %v523 = vunpack.c.l.b16 %v71
  %v524 = vunpack.c.l.b16 %v72
  %v525 = vunpack.c.l.b16 %v73
  %v526 = vunpack.c.l.b16 %v74
  %v527 = vunpack.c.l.b16 %v75
  %v528 = vunpack.c.l.b16 %v76
  %v529 = vunpack.c.l.b16 %v77
  %v530 = vunpack.c.l.b16 %v78
  %v531 = vunpack.c.l.b16 %v79
  %v532 = vunpack.c.l.b16 %v80
  %v533 = vunpack.c.l.b16 %v81
  %v534 = vunpack.c.l.b16 %v82
  %v535 = vunpack.c.l.b16 %v83
  %v536 = vunpack.c.l.b16 %v84
  %v537 = vunpack.c.l.b16 %v85
  %v538 = vunpack.c.l.b16 %v86
  %v539 = vunpack.c.l.b16 %v87
  %v540 = vunpack.c.l.b16 %v88
  %v541 = vunpack.c.l.b16 %v89
  %v542 = vunpack.c.l.b16 %v90
  %v543 = vunpack.c.l.b16 %v91
  %v544 = vunpack.c.l.b16 %v92
  %v545 = vunpack.c.l.b16 %v93
  %v546 = vunpack.c.l.b16 %v94
  %v547 = vunpack.c.l.b16 %v95
  %v548 = vunpack.c.l.b16 %v96
  %v549 = vunpack.c.l.b16 %v97
  %v550 = vunpack.c.l.b16 %v98
  %v551 = vunpack.c.l.b16 %v99
  %v552 = vunpack.c.l.b16 %v100
  %v553 = vunpack.c.l.b16 %v101
  %v554 = vunpack.c.l.b16 %v102
  %v555 = vunpack.c.l.b16 %v103
  %v556 = vunpack.c.l.b16 %v104
  %v557 = vunpack.c.l.b16 %v105
  %v558 = vunpack.c.l.b16 %v106
  %v559 = vunpack.c.l.b16 %v107
  %v560 = vunpack.c.l.b16 %v108
  %v561 = vunpack.c.l.b16 %v109
  %v562 = vunpack.c.l.b16 %v110
  %v563 = vunpack.c.l.b16 %v111
  %v564 = vunpack.c.l.b16 %v112
  %v565 = vunpack.c.l.b16 %v113
  %v566 = vunpack.c.l.b16 %v114
  %v567 = vunpack.c.l.b16 %v115
  %v568 = vunpack.c.l.b16 %v116
  %v569 = vunpack.c.l.b16 %v117
  %v570 = vunpack.c.l.b16 %v118
  %v571 = vunpack.c.l.b16 %v119
  %v572 = vunpack.c.l.b16 %v120
  %v573 = vunpack.c.l.b16 %v121
  %v574 = vunpack.c.l.b16 %v122
  %v575 = vunpack.c.l.b16 %v123
  %v576 = vunpack.c.l.b16 %v124
  %v577 = vunpack.c.l.b16 %v125
  %v578 = vunpack.c.l.b16 %v126
  %v579 = vunpack.c.l.b16 %v127
  %v580 = vunpack.c.l.b16 %v128
  %v581 = vunpack.c.l.b16 %v129
  %v582 = vunpack.c.l.b16 %v130
  %v583 = vunpack.c.l.b16 %v131
  %v584 = vunpack.c.l.b16 %v132
  %v585 = vunpack.c.l.b16 %v133
  %v586 = vunpack.c.l.b16 %v134
  %v587 = vunpack.c.l.b16 %v135
  %v588 = vunpack.c.l.b16 %v136
  %v589 = vunpack.c.l.b16 %v137
  %v590 = vunpack.c.l.b16 %v138
  %v591 = vunpack.c.l.b16 %v139
  %v592 = vunpack.c.l.b16 %v140
  %v593 = vunpack.c.l.b16 %v141
  %v594 = vunpack.c.l.b16 %v142
  %v595 = vunpack.c.l.b16 %v143
  %v596 = vunpack.c.l.b16 %v144
  %v597 = vunpack.c.l.b16 %v145
  %v598 = vunpack.c.l.b16 %v146
  %v599 = vunpack.c.l.b16 %v147
  %v600 = vunpack.c.l.b16 %v148
  %v601 = vunpack.c.l.b16 %v149
  %v602 = vunpack.c.l.b16 %v150
  %v603 = vunpack.c.l.b16 %v151
  %v604 = vunpack.c.l.b16 %v152
  %v605 = vunpack.c.l.b16 %v153
  %v606 = vunpack.c.l.b16 %v154
  %v607 = vunpack.c.l.b16 %v155
  %v608 = vunpack.c.l.b16 %v156
  %v609 = vunpack.c.l.b16 %v157
  %v610 = vunpack.c.l.b16 %v158
  %v611 = vunpack.c.l.b16 %v159
  %v612 = vunpack.c.l.b16 %v160
  %v613 = vunpack.c.l.b16 %v161
  %v614 = vunpack.c.l.b16 %v162
  %v615 = vunpack.c.l.b16 %v163
  %v616 = vunpack.c.l.b16 %v164
  %v617 = vunpack.c.l.b16 %v165
  %v618 = vunpack.c.l.b16 %v166
  %v619 = vunpack.c.l.b16 %v167
  %v620 = vunpack.c.l.b16 %v168
  %v621 = vunpack.c.l.b16 %v169
  %v622 = vunpack.c.l.b16 %v170
  %v623 = vunpack.c.l.b16 %v171
  %v624 = vunpack.c.l.b16 %v172
  %v625 = vunpack.c.l.b16 %v173
  %v626 = vunpack.c.l.b16 %v174
  %v627 = vunpack.c.l.b16 %v175
  %v628 = vunpack.c.l.b16 %v176
  %v629 = vunpack.c.l.b16 %v177
  %v630 = vunpack.c.l.b16 %v178
  %v631 = vunpack.c.l.b16 %v179
  %v632 = vunpack.c.l.b16 %v180
  %v633 = vunpack.c.l.b16 %v181
  %v634 = vunpack.c.l.b16 %v182
  %v635 = vunpack.c.l.b16 %v183
  %v636 = vunpack.c.l.b16 %v184
  %v637 = vunpack.c.l.b16 %v185
  %v638 = vunpack.c.l.b16 %v186
  %v639 = vunpack.c.l.b16 %v187
  %v640 = vunpack.c.l.b16 %v188
  %v641 = vunpack.c.l.b16 %v189
  %v642 = vunpack.c.l.b16 %v190
  %v643 = vunpack.c.l.b16 %v191
  %v644 = vunpack.c.l.b16 %v192
  %v645 = vunpack.c.l.b16 %v193
  %v646 = vunpack.c.l.b16 %v194
  %v647 = vunpack.c.l.b16 %v195
  %v648 = vunpack.c.l.b16 %v196
  %v649 = vunpack.c.l.b16 %v197
  %v650 = vunpack.c.l.b16 %v198
  %v651 = vunpack.c.l.b16 %v199
  %v652 = vunpack.c.l.b16 %v200
  %v653 = vunpack.c.l.b16 %v201
  %v654 = vunpack.c.l.b16 %v202
  %v655 = vunpack.c.l.b16 %v203
  %v656 = vunpack.c.l.b16 %v204
  %v657 = vunpack.c.l.b16 %v205
  %v658 = vunpack.c.l.b16 %v206
  %v659 = vunpack.c.l.b16 %v207
  %v660 = vunpack.c.l.b16 %v208
  %v661 = vunpack.c.l.b16 %v209
  %v662 = vunpack.c.l.b16 %v210
  %v663 = vunpack.c.l.b16 %v211
  %v664 = vunpack.c.l.b16 %v212
  %v665 = vunpack.c.l.b16 %v213
  %v666 = vunpack.c.l.b16 %v214
  %v667 = vunpack.c.l.b16 %v215
  %v668 = vunpack.c.l.b16 %v216
  %v669 = vunpack.c.l.b16 %v217
  %v670 = vunpack.c.l.b16 %v218
  %v671 = vunpack.c.l.b16 %v219
  %v672 = vunpack.c.l.b16 %v220
  %v673 = vunpack.c.l.b16 %v221
  %v674 = vunpack.c.l.b16 %v222
  %v675 = vunpack.c.l.b16 %v223
  %v676 = vunpack.c.l.b16 %v224
  %v677 = vunpack.c.l.b16 %v225
  %v678 = vunpack.c.l.b16 %v226
  %v679 = vunpack.c.l.b16 %v227
  %v680 = vpack.c.b16 %v481, %v480
  %v681 = vpack.c.b16 %v483, %v482
  %v682 = vpack.c.b16 %v485, %v484
  %v683 = vpack.c.b16 %v487, %v486
  %v684 = vpack.c.b16 %v489, %v488
  %v685 = vpack.c.b16 %v491, %v490
  %v686 = vpack.c.b16 %v493, %v492
  %v687 = vpack.c.b16 %v495, %v494
  %v688 = vpack.c.b16 %v497, %v496
  %v689 = vpack.c.b16 %v499, %v498
  %v690 = vpack.c.b16 %v501, %v500
  %v691 = vpack.c.b16 %v503, %v502
  %v692 = vpack.c.b16 %v505, %v504
  %v693 = vpack.c.b16 %v507, %v506
  %v694 = vpack.c.b16 %v509, %v508
  %v695 = vpack.c.b16 %v511, %v510
  %v696 = vpack.c.b16 %v513, %v512
  %v697 = vpack.c.b16 %v515, %v514
  %v698 = vpack.c.b16 %v517, %v516
  %v699 = vpack.c.b16 %v519, %v518
  %v700 = vpack.c.b16 %v521, %v520
  %v701 = vpack.c.b16 %v523, %v522
  %v702 = vpack.c.b16 %v525, %v524
  %v703 = vpack.c.b16 %v527, %v526
  %v704 = vpack.c.b16 %v529, %v528
  %v705 = vpack.c.b16 %v531, %v530
  %v706 = vpack.c.b16 %v533, %v532
  %v707 = vpack.c.b16 %v535, %v534
  %v708 = vpack.c.b16 %v537, %v536
  %v709 = vpack.c.b16 %v539, %v538
  %v710 = vpack.c.b16 %v541, %v540
  %v711 = vpack.c.b16 %v543, %v542
  %v712 = vpack.c.b16 %v545, %v544
  %v713 = vpack.c.b16 %v547, %v546
  %v714 = vpack.c.b16 %v549, %v548
  %v715 = vpack.c.b16 %v551, %v550
  %v716 = vpack.c.b16 %v553, %v552
  %v717 = vpack.c.b16 %v555, %v554
  %v718 = vpack.c.b16 %v557, %v556
  %v719 = vpack.c.b16 %v559, %v558
  %v720 = vpack.c.b16 %v561, %v560
  %v721 = vpack.c.b16 %v563, %v562
  %v722 = vpack.c.b16 %v565, %v564
  %v723 = vpack.c.b16 %v567, %v566
  %v724 = vpack.c.b16 %v569, %v568
  %v725 = vpack.c.b16 %v571, %v570
  %v726 = vpack.c.b16 %v573, %v572
  %v727 = vpack.c.b16 %v575, %v574
  %v728 = vpack.c.b16 %v577, %v576
  %v729 = vpack.c.b16 %v579, %v578
  %v730 = vpack.c.b16 %v581, %v580
  %v731 = vpack.c.b16 %v583, %v582
  %v732 = vpack.c.b16 %v585, %v584
  %v733 = vpack.c.b16 %v587, %v586
  %v734 = vpack.c.b16 %v589, %v588
  %v735 = vpack.c.b16 %v591, %v590
  %v736 = vpack.c.b16 %v593, %v592
  %v737 = vpack.c.b16 %v595, %v594
  %v738 = vpack.c.b16 %v597, %v596
  %v739 = vpack.c.b16 %v599, %v598
  %v740 = vpack.c.b16 %v601, %v600
  %v741 = vpack.c.b16 %v603, %v602
  %v742 = vpack.c.b16 %v605, %v604
  %v743 = vpack.c.b16 %v607, %v606
  %v744 = vpack.c.b16 %v609, %v608
  %v745 = vpack.c.b16 %v611, %v610
  %v746 = vpack.c.b16 %v613, %v612
  %v747 = vpack.c.b16 %v615, %v614
  %v748 = vpack.c.b16 %v617, %v616
  %v749 = vpack.c.b16 %v619, %v618
  %v750 = vpack.c.b16 %v621, %v620
  %v751 = vpack.c.b16 %v623, %v622
  %v752 = vpack.c.b16 %v625, %v624
  %v753 = vpack.c.b16 %v627, %v626
  %v754 = vpack.c.b16 %v629, %v628
  %v755 = vpack.c.b16 %v631, %v630
  %v756 = vpack.c.b16 %v633, %v632
  %v757 = vpack.c.b16 %v635, %v634
  %v758 = vpack.c.b16 %v637, %v636
  %v759 = vpack.c.b16 %v639, %v638
  %v760 = vpack.c.b16 %v641, %v640
  %v761 = vpack.c.b16 %v643, %v642
  %v762 = vpack.c.b16 %v645, %v644
  %v763 = vpack.c.b16 %v647, %v646
  %v764 = vpack.c.b16 %v649, %v648
  %v765 = vpack.c.b16 %v651, %v650
  %v766 = vpack.c.b16 %v653, %v652
  %v767 = vpack.c.b16 %v655, %v654
  %v768 = vpack.c.b16 %v657, %v656
  %v769 = vpack.c.b16 %v659, %v658
  %v770 = vpack.c.b16 %v661, %v660
  %v771 = vpack.c.b16 %v663, %v662
  %v772 = vpack.c.b16 %v665, %v664
  %v773 = vpack.c.b16 %v667, %v666
  %v774 = vpack.c.b16 %v669, %v668
  %v775 = vpack.c.b16 %v671, %v670
  %v776 = vpack.c.b16 %v673, %v672
  %v777 = vpack.c.b16 %v675, %v674
  %v778 = vpack.c.b16 %v677, %v676
  %v779 = vpack.c.b16 %v679, %v678
  %vm880 = vcmask 523264
  %v882 = vsel %vm880, %v267, 0
  %884 = vmatprep.subr.bf16.mxu0 0
  %885 = vmatpush1.bf16.msra.mxu0 %v687
  %886 = vmatprep.subr.bf16.mxu0 0
  %887 = vmatpush1.bf16.msra.mxu0 %v686
  %888 = vmatprep.subr.bf16.mxu0 0
  %889 = vmatpush1.bf16.msra.mxu0 %v685
  %890 = vmatprep.subr.bf16.mxu0 0
  %891 = vmatpush1.bf16.msra.mxu0 %v684
  %892 = vmatprep.subr.bf16.mxu0 0
  %893 = vmatpush1.bf16.msra.mxu0 %v683
  %894 = vmatprep.subr.bf16.mxu0 0
  %895 = vmatpush1.bf16.msra.mxu0 %v682
  %896 = vmatprep.subr.bf16.mxu0 0
  %897 = vmatpush1.bf16.msra.mxu0 %v681
  %898 = vmatprep.subr.bf16.mxu0 0
  %899 = vmatpush1.bf16.msra.mxu0 %v680
  %900 = vmatprep.subr.bf16.mxu0 0
  %901 = vmatpush2.bf16.msra.mxu0 %v695
  %902 = vmatprep.subr.bf16.mxu0 0
  %903 = vmatpush2.bf16.msra.mxu0 %v694
  %904 = vmatprep.subr.bf16.mxu0 0
  %905 = vmatpush2.bf16.msra.mxu0 %v693
  %906 = vmatprep.subr.bf16.mxu0 0
  %907 = vmatpush2.bf16.msra.mxu0 %v692
  %908 = vmatprep.subr.bf16.mxu0 0
  %909 = vmatpush2.bf16.msra.mxu0 %v691
  %910 = vmatprep.subr.bf16.mxu0 0
  %911 = vmatpush2.bf16.msra.mxu0 %v690
  %912 = vmatprep.subr.bf16.mxu0 0
  %913 = vmatpush2.bf16.msra.mxu0 %v689
  %914 = vmatprep.subr.bf16.mxu0 0
  %915 = vmatpush2.bf16.msra.mxu0 %v688
  %916 = vmatprep.mubr.bf16.mxu0 %v256
  %917 = vmatmul.mubr.bf16.gmra.mxu0 %v255
  %v918 = vpop.f32.mrf.mxu0
  %v919 = vadd.f32 %v233, %v918
  %v920 = vpop.f32.mrf.mxu0
  %v921 = vpop.f32.mrf.mxu0
  %v922 = vpop.f32.mrf.mxu0
  %923 = vdwg.mxu0
  %924 = vmatprep.subr.bf16.mxu0 0
  %925 = vmatpush1.bf16.msra.mxu0 %v703
  %926 = vmatprep.subr.bf16.mxu0 0
  %927 = vmatpush1.bf16.msra.mxu0 %v702
  %928 = vmatprep.subr.bf16.mxu0 0
  %929 = vmatpush1.bf16.msra.mxu0 %v701
  %930 = vmatprep.subr.bf16.mxu0 0
  %931 = vmatpush1.bf16.msra.mxu0 %v700
  %932 = vmatprep.subr.bf16.mxu0 0
  %933 = vmatpush1.bf16.msra.mxu0 %v699
  %934 = vmatprep.subr.bf16.mxu0 0
  %935 = vmatpush1.bf16.msra.mxu0 %v698
  %936 = vmatprep.subr.bf16.mxu0 0
  %937 = vmatpush1.bf16.msra.mxu0 %v697
  %938 = vmatprep.subr.bf16.mxu0 0
  %939 = vmatpush1.bf16.msra.mxu0 %v696
  %940 = vmatprep.subr.bf16.mxu0 0
  %941 = vmatpush2.bf16.msra.mxu0 %v711
  %942 = vmatprep.subr.bf16.mxu0 0
  %943 = vmatpush2.bf16.msra.mxu0 %v710
  %944 = vmatprep.subr.bf16.mxu0 0
  %945 = vmatpush2.bf16.msra.mxu0 %v709
  %946 = vmatprep.subr.bf16.mxu0 0
  %947 = vmatpush2.bf16.msra.mxu0 %v708
  %948 = vmatprep.subr.bf16.mxu0 0
  %949 = vmatpush2.bf16.msra.mxu0 %v707
  %950 = vmatprep.subr.bf16.mxu0 0
  %951 = vmatpush2.bf16.msra.mxu0 %v706
  %952 = vmatprep.subr.bf16.mxu0 0
  %953 = vmatpush2.bf16.msra.mxu0 %v705
  %954 = vmatprep.subr.bf16.mxu0 0
  %955 = vmatpush2.bf16.msra.mxu0 %v704
  %956 = vmatprep.mubr.bf16.mxu0 %v258
  %957 = vmatmul.mubr.bf16.gmra.mxu0 %v257
  %v958 = vpop.f32.mrf.mxu0
  %v959 = vadd.f32 %v919, %v958
  %v960 = vpop.f32.mrf.mxu0
  %v961 = vpop.f32.mrf.mxu0
  %v962 = vpop.f32.mrf.mxu0
  %963 = vdwg.mxu0
  %964 = vmatprep.subr.bf16.mxu0 0
  %965 = vmatpush1.bf16.msra.mxu0 %v719
  %966 = vmatprep.subr.bf16.mxu0 0
  %967 = vmatpush1.bf16.msra.mxu0 %v718
  %968 = vmatprep.subr.bf16.mxu0 0
  %969 = vmatpush1.bf16.msra.mxu0 %v717
  %970 = vmatprep.subr.bf16.mxu0 0
  %971 = vmatpush1.bf16.msra.mxu0 %v716
  %972 = vmatprep.subr.bf16.mxu0 0
  %973 = vmatpush1.bf16.msra.mxu0 %v715
  %974 = vmatprep.subr.bf16.mxu0 0
  %975 = vmatpush1.bf16.msra.mxu0 %v714
  %976 = vmatprep.subr.bf16.mxu0 0
  %977 = vmatpush1.bf16.msra.mxu0 %v713
  %978 = vmatprep.subr.bf16.mxu0 0
  %979 = vmatpush1.bf16.msra.mxu0 %v712
  %980 = vmatprep.subr.bf16.mxu0 0
  %981 = vmatpush2.bf16.msra.mxu0 %v727
  %982 = vmatprep.subr.bf16.mxu0 0
  %983 = vmatpush2.bf16.msra.mxu0 %v726
  %984 = vmatprep.subr.bf16.mxu0 0
  %985 = vmatpush2.bf16.msra.mxu0 %v725
  %986 = vmatprep.subr.bf16.mxu0 0
  %987 = vmatpush2.bf16.msra.mxu0 %v724
  %988 = vmatprep.subr.bf16.mxu0 0
  %989 = vmatpush2.bf16.msra.mxu0 %v723
  %990 = vmatprep.subr.bf16.mxu0 0
  %991 = vmatpush2.bf16.msra.mxu0 %v722
  %992 = vmatprep.subr.bf16.mxu0 0
  %993 = vmatpush2.bf16.msra.mxu0 %v721
  %994 = vmatprep.subr.bf16.mxu0 0
  %995 = vmatpush2.bf16.msra.mxu0 %v720
  %996 = vmatprep.mubr.bf16.mxu0 %v260
  %997 = vmatmul.mubr.bf16.gmra.mxu0 %v259
  %v998 = vpop.f32.mrf.mxu0
  %v999 = vadd.f32 %v959, %v998
  %v1000 = vpop.f32.mrf.mxu0
  %v1001 = vpop.f32.mrf.mxu0
  %v1002 = vpop.f32.mrf.mxu0
  %1003 = vdwg.mxu0
  %1004 = vmatprep.subr.bf16.mxu0 0
  %1005 = vmatpush1.bf16.msra.mxu0 %v735
  %1006 = vmatprep.subr.bf16.mxu0 0
  %1007 = vmatpush1.bf16.msra.mxu0 %v734
  %1008 = vmatprep.subr.bf16.mxu0 0
  %1009 = vmatpush1.bf16.msra.mxu0 %v733
  %1010 = vmatprep.subr.bf16.mxu0 0
  %1011 = vmatpush1.bf16.msra.mxu0 %v732
  %1012 = vmatprep.subr.bf16.mxu0 0
  %1013 = vmatpush1.bf16.msra.mxu0 %v731
  %1014 = vmatprep.subr.bf16.mxu0 0
  %1015 = vmatpush1.bf16.msra.mxu0 %v730
  %1016 = vmatprep.subr.bf16.mxu0 0
  %1017 = vmatpush1.bf16.msra.mxu0 %v729
  %1018 = vmatprep.subr.bf16.mxu0 0
  %1019 = vmatpush1.bf16.msra.mxu0 %v728
  %1020 = vmatprep.subr.bf16.mxu0 0
  %1021 = vmatpush2.bf16.msra.mxu0 %v743
  %1022 = vmatprep.subr.bf16.mxu0 0
  %1023 = vmatpush2.bf16.msra.mxu0 %v742
  %1024 = vmatprep.subr.bf16.mxu0 0
  %1025 = vmatpush2.bf16.msra.mxu0 %v741
  %1026 = vmatprep.subr.bf16.mxu0 0
  %1027 = vmatpush2.bf16.msra.mxu0 %v740
  %1028 = vmatprep.subr.bf16.mxu0 0
  %1029 = vmatpush2.bf16.msra.mxu0 %v739
  %1030 = vmatprep.subr.bf16.mxu0 0
  %1031 = vmatpush2.bf16.msra.mxu0 %v738
  %1032 = vmatprep.subr.bf16.mxu0 0
  %1033 = vmatpush2.bf16.msra.mxu0 %v737
  %1034 = vmatprep.subr.bf16.mxu0 0
  %1035 = vmatpush2.bf16.msra.mxu0 %v736
  %1036 = vmatprep.mubr.bf16.mxu0 %v262
  %1037 = vmatmul.mubr.bf16.gmra.mxu0 %v261
  %v1038 = vpop.f32.mrf.mxu0
  %v1039 = vadd.f32 %v999, %v1038
  %v1040 = vpop.f32.mrf.mxu0
  %v1041 = vpop.f32.mrf.mxu0
  %v1042 = vpop.f32.mrf.mxu0
  %1043 = vdwg.mxu0
  %1044 = vmatprep.subr.bf16.mxu0 0
  %1045 = vmatpush1.bf16.msra.mxu0 %v751
  %1046 = vmatprep.subr.bf16.mxu0 0
  %1047 = vmatpush1.bf16.msra.mxu0 %v750
  %1048 = vmatprep.subr.bf16.mxu0 0
  %1049 = vmatpush1.bf16.msra.mxu0 %v749
  %1050 = vmatprep.subr.bf16.mxu0 0
  %1051 = vmatpush1.bf16.msra.mxu0 %v748
  %1052 = vmatprep.subr.bf16.mxu0 0
  %1053 = vmatpush1.bf16.msra.mxu0 %v747
  %1054 = vmatprep.subr.bf16.mxu0 0
  %1055 = vmatpush1.bf16.msra.mxu0 %v746
  %1056 = vmatprep.subr.bf16.mxu0 0
  %1057 = vmatpush1.bf16.msra.mxu0 %v745
  %1058 = vmatprep.subr.bf16.mxu0 0
  %1059 = vmatpush1.bf16.msra.mxu0 %v744
  %1060 = vmatprep.subr.bf16.mxu0 0
  %1061 = vmatpush2.bf16.msra.mxu0 %v759
  %1062 = vmatprep.subr.bf16.mxu0 0
  %1063 = vmatpush2.bf16.msra.mxu0 %v758
  %1064 = vmatprep.subr.bf16.mxu0 0
  %1065 = vmatpush2.bf16.msra.mxu0 %v757
  %1066 = vmatprep.subr.bf16.mxu0 0
  %1067 = vmatpush2.bf16.msra.mxu0 %v756
  %1068 = vmatprep.subr.bf16.mxu0 0
  %1069 = vmatpush2.bf16.msra.mxu0 %v755
  %1070 = vmatprep.subr.bf16.mxu0 0
  %1071 = vmatpush2.bf16.msra.mxu0 %v754
  %1072 = vmatprep.subr.bf16.mxu0 0
  %1073 = vmatpush2.bf16.msra.mxu0 %v753
  %1074 = vmatprep.subr.bf16.mxu0 0
  %1075 = vmatpush2.bf16.msra.mxu0 %v752
  %1076 = vmatprep.mubr.bf16.mxu0 %v264
  %1077 = vmatmul.mubr.bf16.gmra.mxu0 %v263
  %v1078 = vpop.f32.mrf.mxu0
  %v1079 = vadd.f32 %v1039, %v1078
  %v1080 = vpop.f32.mrf.mxu0
  %v1081 = vpop.f32.mrf.mxu0
  %v1082 = vpop.f32.mrf.mxu0
  %1083 = vdwg.mxu0
  %1084 = vmatprep.subr.bf16.mxu0 0
  %1085 = vmatpush1.bf16.msra.mxu0 %v767
  %1086 = vmatprep.subr.bf16.mxu0 0
  %1087 = vmatpush1.bf16.msra.mxu0 %v766
  %1088 = vmatprep.subr.bf16.mxu0 0
  %1089 = vmatpush1.bf16.msra.mxu0 %v765
  %1090 = vmatprep.subr.bf16.mxu0 0
  %1091 = vmatpush1.bf16.msra.mxu0 %v764
  %1092 = vmatprep.subr.bf16.mxu0 0
  %1093 = vmatpush1.bf16.msra.mxu0 %v763
  %1094 = vmatprep.subr.bf16.mxu0 0
  %1095 = vmatpush1.bf16.msra.mxu0 %v762
  %1096 = vmatprep.subr.bf16.mxu0 0
  %1097 = vmatpush1.bf16.msra.mxu0 %v761
  %1098 = vmatprep.subr.bf16.mxu0 0
  %1099 = vmatpush1.bf16.msra.mxu0 %v760
  %1100 = vmatprep.subr.bf16.mxu0 0
  %1101 = vmatpush2.bf16.msra.mxu0 %v775
  %1102 = vmatprep.subr.bf16.mxu0 0
  %1103 = vmatpush2.bf16.msra.mxu0 %v774
  %1104 = vmatprep.subr.bf16.mxu0 0
  %1105 = vmatpush2.bf16.msra.mxu0 %v773
  %1106 = vmatprep.subr.bf16.mxu0 0
  %1107 = vmatpush2.bf16.msra.mxu0 %v772
  %1108 = vmatprep.subr.bf16.mxu0 0
  %1109 = vmatpush2.bf16.msra.mxu0 %v771
  %1110 = vmatprep.subr.bf16.mxu0 0
  %1111 = vmatpush2.bf16.msra.mxu0 %v770
  %1112 = vmatprep.subr.bf16.mxu0 0
  %1113 = vmatpush2.bf16.msra.mxu0 %v769
  %1114 = vmatprep.subr.bf16.mxu0 0
  %1115 = vmatpush2.bf16.msra.mxu0 %v768
  %1116 = vmatprep.mubr.bf16.mxu0 %v266
  %1117 = vmatmul.mubr.bf16.gmra.mxu0 %v265
  %v1118 = vpop.f32.mrf.mxu0
  %v1119 = vadd.f32 %v1079, %v1118
  %v1120 = vpop.f32.mrf.mxu0
  %v1121 = vpop.f32.mrf.mxu0
  %v1122 = vpop.f32.mrf.mxu0
  %1123 = vdwg.mxu0
  %1124 = vmatprep.subr.bf16.mxu0 0
  %1125 = vmatpush1.bf16.msra.mxu0 0
  %1126 = vmatprep.subr.bf16.mxu0 0
  %1127 = vmatpush1.bf16.msra.mxu0 0
  %1128 = vmatprep.subr.bf16.mxu0 0
  %1129 = vmatpush1.bf16.msra.mxu0 0
  %1130 = vmatprep.subr.bf16.mxu0 0
  %1131 = vmatpush1.bf16.msra.mxu0 0
  %1132 = vmatprep.subr.bf16.mxu0 0
  %1133 = vmatpush1.bf16.msra.mxu0 %v779
  %1134 = vmatprep.subr.bf16.mxu0 0
  %1135 = vmatpush1.bf16.msra.mxu0 %v778
  %1136 = vmatprep.subr.bf16.mxu0 0
  %1137 = vmatpush1.bf16.msra.mxu0 %v777
  %1138 = vmatprep.subr.bf16.mxu0 0
  %1139 = vmatpush1.bf16.msra.mxu0 %v776
  %1140 = vmatprep.subr.bf16.mxu0 0
  %1141 = vmatpush2.bf16.msra.mxu0 0
  %1142 = vmatprep.subr.bf16.mxu0 0
  %1143 = vmatpush2.bf16.msra.mxu0 0
  %1144 = vmatprep.subr.bf16.mxu0 0
  %1145 = vmatpush2.bf16.msra.mxu0 0
  %1146 = vmatprep.subr.bf16.mxu0 0
  %1147 = vmatpush2.bf16.msra.mxu0 0
  %1148 = vmatprep.subr.bf16.mxu0 0
  %1149 = vmatpush2.bf16.msra.mxu0 0
  %1150 = vmatprep.subr.bf16.mxu0 0
  %1151 = vmatpush2.bf16.msra.mxu0 0
  %1152 = vmatprep.subr.bf16.mxu0 0
  %1153 = vmatpush2.bf16.msra.mxu0 0
  %1154 = vmatprep.subr.bf16.mxu0 0
  %1155 = vmatpush2.bf16.msra.mxu0 0
  %1156 = vmatprep.mubr.bf16.mxu0 0
  %1157 = vmatmul.mubr.bf16.gmra.mxu0 %v882
  %v1158 = vpop.f32.mrf.mxu0
  %v1159 = vadd.f32 %v1119, %v1158
  %v1160 = vpop.f32.mrf.mxu0
  %v1161 = vpop.f32.mrf.mxu0
  %v1162 = vpop.f32.mrf.mxu0
  %1163 = vdwg.mxu0
  %v1164 = vmax.f32 %v1159, 0.0
  %v1165 = vpack.c.bf16 %v1164, %v1164
  %v1166 = vld [vmem:[%s3] sm:$0xf]
  %v1167 = vld [vmem:[%s3 + $0x4] sm:$0xf]
  %v1168 = vld [vmem:[%s3 + $0x8] sm:$0xf]
  %v1169 = vld [vmem:[%s3 + $0xc] sm:$0xf]
  %v1170 = vld [vmem:[%s3 + $0x10] sm:$0xf]
  %v1171 = vld [vmem:[%s3 + $0x14] sm:$0xf]
  %v1172 = vld [vmem:[%s3 + $0x18] sm:$0xf]
  %v1173 = vld [vmem:[%s3 + $0x1c] sm:$0xf]
  %v1174 = vld [vmem:[%s3 + $0x20] sm:$0xf]
  %v1175 = vld [vmem:[%s3 + $0x24] sm:$0xf]
  %v1176 = vld [vmem:[%s3 + $0x28] sm:$0xf]
  %v1177 = vld [vmem:[%s3 + $0x2c] sm:$0xf]
  %v1178 = vld [vmem:[%s3 + $0x30] sm:$0xf]
  %v1179 = vld [vmem:[%s3 + $0x34] sm:$0xf]
  %v1180 = vld [vmem:[%s3 + $0x38] sm:$0xf]
  %v1181 = vld [vmem:[%s3 + $0x3c] sm:$0xf]
  %v1182 = vld [vmem:[%s4] sm:$0x1]
  %v1184 = vlaneseq
  %v1185 = vshrl.u32 %v1184, 7
  %v1186 = vsub.s32 0, %v1185
  %v1187 = vrot.slane %v1182, %v1186
  %v1205 = vunpack.c.l.b16 %v1166
  %v1206 = vunpack.c.l.b16 %v1167
  %v1207 = vunpack.c.l.b16 %v1168
  %v1208 = vunpack.c.l.b16 %v1169
  %v1209 = vunpack.c.l.b16 %v1170
  %v1210 = vunpack.c.l.b16 %v1171
  %v1211 = vunpack.c.l.b16 %v1172
  %v1212 = vunpack.c.l.b16 %v1173
  %v1213 = vunpack.c.l.b16 %v1174
  %v1214 = vunpack.c.l.b16 %v1175
  %v1215 = vunpack.c.l.b16 %v1176
  %v1216 = vunpack.c.l.b16 %v1177
  %v1217 = vunpack.c.l.b16 %v1178
  %v1218 = vunpack.c.l.b16 %v1179
  %v1219 = vunpack.c.l.b16 %v1180
  %v1220 = vunpack.c.l.b16 %v1181
  %v1221 = vpack.c.b16 %v1206, %v1205
  %v1222 = vpack.c.b16 %v1208, %v1207
  %v1223 = vpack.c.b16 %v1210, %v1209
  %v1224 = vpack.c.b16 %v1212, %v1211
  %v1225 = vpack.c.b16 %v1214, %v1213
  %v1226 = vpack.c.b16 %v1216, %v1215
  %v1227 = vpack.c.b16 %v1218, %v1217
  %v1228 = vpack.c.b16 %v1220, %v1219
  %1237 = vmatprep.subr.bf16.mxu0 0
  %1238 = vmatpush1.bf16.msra.mxu0 %v1228
  %1239 = vmatprep.subr.bf16.mxu0 0
  %1240 = vmatpush1.bf16.msra.mxu0 %v1227
  %1241 = vmatprep.subr.bf16.mxu0 0
  %1242 = vmatpush1.bf16.msra.mxu0 %v1226
  %1243 = vmatprep.subr.bf16.mxu0 0
  %1244 = vmatpush1.bf16.msra.mxu0 %v1225
  %1245 = vmatprep.subr.bf16.mxu0 0
  %1246 = vmatpush1.bf16.msra.mxu0 %v1224
  %1247 = vmatprep.subr.bf16.mxu0 0
  %1248 = vmatpush1.bf16.msra.mxu0 %v1223
  %1249 = vmatprep.subr.bf16.mxu0 0
  %1250 = vmatpush1.bf16.msra.mxu0 %v1222
  %1251 = vmatprep.subr.bf16.mxu0 0
  %1252 = vmatpush1.bf16.msra.mxu0 %v1221
  %1253 = vmatprep.subr.bf16.mxu0 0
  %1254 = vmatpush2.bf16.msra.mxu0 0
  %1255 = vmatprep.subr.bf16.mxu0 0
  %1256 = vmatpush2.bf16.msra.mxu0 0
  %1257 = vmatprep.subr.bf16.mxu0 0
  %1258 = vmatpush2.bf16.msra.mxu0 0
  %1259 = vmatprep.subr.bf16.mxu0 0
  %1260 = vmatpush2.bf16.msra.mxu0 0
  %1261 = vmatprep.subr.bf16.mxu0 0
  %1262 = vmatpush2.bf16.msra.mxu0 0
  %1263 = vmatprep.subr.bf16.mxu0 0
  %1264 = vmatpush2.bf16.msra.mxu0 0
  %1265 = vmatprep.subr.bf16.mxu0 0
  %1266 = vmatpush2.bf16.msra.mxu0 0
  %1267 = vmatprep.subr.bf16.mxu0 0
  %1268 = vmatpush2.bf16.msra.mxu0 0
  %1269 = vmatprep.mubr.bf16.mxu0 0
  %1270 = vmatmul.mubr.bf16.gmra.mxu0 %v1165
  %v1271 = vpop.f32.mrf.mxu0
  %v1272 = vadd.f32 %v1187, %v1271
  %v1273 = vpop.f32.mrf.mxu0
  %v1274 = vpop.f32.mrf.mxu0
  %v1275 = vpop.f32.mrf.mxu0
  %1276 = vdwg.mxu0
  %1277 = vst [vmem:[%s5] sm:$0xff] %v1272
  // Predicated region
  $region22: #{convnet_forward.5} parent=0 // pred_check
    _
  $region23: #{convnet_forward.5} parent=0 // pred_check_branch
    %1279 = sbr.rel (0) target = $region25
  $region24: #{convnet_forward.5} parent=0 // pred_region
    _
  $region25: #{convnet_forward.5} parent=0 // pred_fallthru
    _
  // Predicated region
  $region26: #{convnet_forward.5} parent=0 // pred_check
    _
  $region27: #{convnet_forward.5} parent=0 // pred_check_branch
    %1281 = sbr.rel (0) target = $region29
  $region28: #{convnet_forward.5} parent=0 // pred_region
    _
  $region29: #{convnet_forward.5} parent=0 // pred_fallthru
    _

</llo_original>
